<compile_context>
chip_gen: v6e
topology: v6e:2x2x1
jax: 0.10.0
libtpu: 0.0.40
codegen_flags: <defaults>
</compile_context>

<pallas_src>
import functools

import jax
import jax.numpy as jnp
from jax import lax
from jax.experimental import pallas as pl
from jax.experimental.pallas import tpu as pltpu


def _fused_conv_bn_conv_kernel(x_ref, w1_ref, shift_ref, w2_ref, o_ref, y1p_ref,
                               *, H, W, Cin, C):
    """One batch element: conv3x3 -> BN affine -> conv3x3, both convs on the MXU.

    x_ref:     (1, H+2, W+2, Cin)  zero-padded NHWC image (conv1 SAME halo), f32
    w1_ref:    (9*Cin, C)          conv1 weights, tap-major/cin-minor, BN scale folded, f32
    shift_ref: (1, C)              folded BatchNorm shift, f32
    w2_ref:    (9*C, C)            conv2 weights, tap-major, bf16 (or f32)
    o_ref:     (1, H, W, C)        output
    y1p_ref:   (H+2, W+2, C)       VMEM scratch: zero-padded conv1+BN intermediate
    """
    x = x_ref[0].astype(jnp.float32)                                # (H+2, W+2, Cin)

    # ---- conv1: in-kernel im2col + ONE MXU matmul (M=H*W, K=9*Cin) ----------
    taps1 = [x[ky:ky + H, kx:kx + W, :] for ky in range(3) for kx in range(3)]
    lhs1 = jnp.concatenate(taps1, axis=-1).reshape(H * W, 9 * Cin)   # (H*W, 9*Cin)
    y1 = jnp.dot(lhs1, w1_ref[...], preferred_element_type=jnp.float32)
    y1 = y1 + shift_ref[...]                # BatchNorm: scale already folded into w1

    # ---- conv2 SAME padding via a zeroed scratch (no iota/compare/select) ---
    y1p_ref[...] = jnp.zeros_like(y1p_ref)  # re-zero every step (per-core scratch)
    y1p_ref[pl.ds(1, H), pl.ds(1, W), :] = y1.reshape(H, W, C).astype(y1p_ref.dtype)
    y1p = y1p_ref[...]                                               # (H+2, W+2, C)

    # ---- conv2: fused taps, ONE MXU matmul (M=H*W, K=9*C, N=C) --------------
    taps2 = [y1p[ky:ky + H, kx:kx + W, :] for ky in range(3) for kx in range(3)]
    lhs2 = jnp.concatenate(taps2, axis=-1).reshape(H * W, 9 * C)     # (H*W, 9*C)
    out = jnp.dot(lhs2, w2_ref[...], preferred_element_type=jnp.float32)
    o_ref[0] = out.reshape(H, W, C).astype(o_ref.dtype)


def conv_unit_forward(x_nchw, w1, w2, gamma, beta, run_mean, run_var,
                      eps=1e-5, *, mxu_dtype=jnp.bfloat16):
    """ConvUnit forward: conv3x3(no bias) -> BatchNorm2d(eval) -> conv3x3(no bias).

    `mxu_dtype` is the conv2 operand dtype (bf16 recommended; accumulation is
    always f32).  conv1 stays f32 (tiny K, and keeps the folded BN exact).
    """
    N, Cin, H, W = x_nchw.shape
    Cout = w1.shape[0]
    assert w1.shape == (Cout, Cin, 3, 3), w1.shape
    assert w2.shape == (Cout, Cout, 3, 3), w2.shape

    # NCHW -> NHWC, zero-pad spatial by 1 (conv1 SAME halo).  conv2's halo is
    # supplied in-kernel by the zero-padded intermediate scratch.
    x = jnp.transpose(x_nchw, (0, 2, 3, 1)).astype(jnp.float32)
    xp = jnp.pad(x, ((0, 0), (1, 1), (1, 1), (0, 0)))

    # Fold BatchNorm (eval mode): y = conv1(x)*scale + shift.  scale folds
    # exactly into the conv1 weight columns (conv1 has no bias); shift is
    # applied in-kernel after the matmul.
    bn_scale = gamma / jnp.sqrt(run_var + eps)
    bn_shift = beta - run_mean * bn_scale

    # conv1 weights -> (9*Cin, Cout), tap-major / cin-minor, BN scale folded, f32.
    w1_mat = jnp.transpose(w1, (2, 3, 1, 0)).reshape(9 * Cin, Cout)
    w1_mat = (w1_mat * bn_scale[None, :]).astype(jnp.float32)
    shift = bn_shift.reshape(1, Cout).astype(jnp.float32)

    # conv2 weights -> (9*Cout, Cout), tap-major; bf16 operands for the MXU.
    w2_mat = jnp.transpose(w2, (2, 3, 1, 0)).reshape(9 * Cout, Cout).astype(mxu_dtype)

    kernel = functools.partial(_fused_conv_bn_conv_kernel,
                               H=H, W=W, Cin=Cin, C=Cout)

    out = pl.pallas_call(
        kernel,
        out_shape=jax.ShapeDtypeStruct((N, H, W, Cout), jnp.float32),
        grid_spec=pltpu.PrefetchScalarGridSpec(
            num_scalar_prefetch=0,
            grid=(N,),                       # one step per image: minimal step overhead
            in_specs=[
                pl.BlockSpec((1, H + 2, W + 2, Cin), lambda b: (b, 0, 0, 0)),
                # Weights / shift are constant across the grid (tiny; the extra
                # pipeline buffer is a few KB and not worth a Buffered(1) override).
                pl.BlockSpec((9 * Cin, Cout), lambda b: (0, 0)),
                pl.BlockSpec((1, Cout), lambda b: (0, 0)),
                pl.BlockSpec((9 * Cout, Cout), lambda b: (0, 0)),
            ],
            out_specs=pl.BlockSpec((1, H, W, Cout), lambda b: (b, 0, 0, 0)),
            scratch_shapes=[pltpu.VMEM((H + 2, W + 2, Cout), mxu_dtype)],
        ),
        compiler_params=pltpu.CompilerParams(
            dimension_semantics=("parallel",)),   # batch shards across v7x's 2 TCs
    )(xp, w1_mat, shift, w2_mat)

    return jnp.transpose(out, (0, 3, 1, 2))      # NHWC -> NCHW


def _reference_forward(x_nchw, w1, w2, gamma, beta, run_mean, run_var, eps=1e-5):
    """Plain-JAX reference (lax.conv) for correctness checking."""
    x = jnp.transpose(x_nchw, (0, 2, 3, 1))
    dn = ('NHWC', 'HWIO', 'NHWC')
    w1_hwio = jnp.transpose(w1, (2, 3, 1, 0))
    w2_hwio = jnp.transpose(w2, (2, 3, 1, 0))
    y = lax.conv_general_dilated(x, w1_hwio, (1, 1), 'SAME', dimension_numbers=dn)
    scale = gamma / jnp.sqrt(run_var + eps)
    shift = beta - run_mean * scale
    y = y * scale + shift
    y = lax.conv_general_dilated(y, w2_hwio, (1, 1), 'SAME', dimension_numbers=dn)
    return jnp.transpose(y, (0, 3, 1, 2))


if __name__ == "__main__":
    key = jax.random.PRNGKey(0)
    ks = jax.random.split(key, 8)

    # ConvUnit(in_channels=4, out_channels=8), input (N, C, H, W) = (2, 4, 16, 16)
    N, CIN, H, W = 2, 4, 16, 16
    COUT = 8

    x = jax.random.normal(ks[0], (N, CIN, H, W), jnp.float32)
    w1 = 0.1 * jax.random.normal(ks[1], (COUT, CIN, 3, 3), jnp.float32)
    w2 = 0.1 * jax.random.normal(ks[2], (COUT, COUT, 3, 3), jnp.float32)
    gamma = 1.0 + 0.1 * jax.random.normal(ks[3], (COUT,), jnp.float32)
    beta = 0.1 * jax.random.normal(ks[4], (COUT,), jnp.float32)
    run_mean = 0.1 * jax.random.normal(ks[5], (COUT,), jnp.float32)
    run_var = 0.5 + jnp.abs(jax.random.normal(ks[6], (COUT,), jnp.float32))

    ref = jax.block_until_ready(
        _reference_forward(x, w1, w2, gamma, beta, run_mean, run_var))

    # f32 conv2 operands: tight check against the plain-JAX reference.
    out_f32 = jax.block_until_ready(
        conv_unit_forward(x, w1, w2, gamma, beta, run_mean, run_var,
                          mxu_dtype=jnp.float32))
    assert out_f32.shape == (N, COUT, H, W), out_f32.shape
    assert jnp.allclose(out_f32, ref, rtol=1e-4, atol=2e-4), \
        float(jnp.max(jnp.abs(out_f32 - ref)))

    # bf16 conv2 operands (MXU-native), f32 accumulation: looser tolerance.
    out_bf16 = jax.block_until_ready(
        conv_unit_forward(x, w1, w2, gamma, beta, run_mean, run_var,
                          mxu_dtype=jnp.bfloat16))
    assert out_bf16.shape == (N, COUT, H, W), out_bf16.shape
    assert jnp.allclose(out_bf16, ref, rtol=5e-2, atol=5e-2), \
        float(jnp.max(jnp.abs(out_bf16 - ref)))

    print("KERNEL_OK")
</pallas_src>

<mosaic_0001>
module attributes {stable_mosaic.version = 11 : i64} {
  func.func @_fused_conv_bn_conv_kernel(%arg0: i32, %arg1: memref<1x18x18x4xf32, #tpu.memory_space<vmem>>, %arg2: memref<36x8xf32, #tpu.memory_space<vmem>>, %arg3: memref<1x8xf32, #tpu.memory_space<vmem>>, %arg4: memref<72x8xf32, #tpu.memory_space<vmem>>, %arg5: memref<1x16x16x8xf32, #tpu.memory_space<vmem>>, %arg6: memref<18x18x8xf32, #tpu.memory_space<vmem>>) attributes {dimension_semantics = [#tpu.dimension_semantics<parallel>], iteration_bounds = array<i64: 2>, scalar_prefetch = 0 : i64, scratch_operands = 1 : i64, tpu.core_type = #tpu.core_type<tc>, window_params = [{transform_indices = @transform_0, window_bounds = array<i64: 1, 18, 18, 4>}, {pipeline_mode = #tpu.pipeline_mode<synchronous>, transform_indices = @transform_1, window_bounds = array<i64: 36, 8>}, {pipeline_mode = #tpu.pipeline_mode<synchronous>, transform_indices = @transform_2, window_bounds = array<i64: 1, 8>}, {pipeline_mode = #tpu.pipeline_mode<synchronous>, transform_indices = @transform_3, window_bounds = array<i64: 72, 8>}, {transform_indices = @transform_4, window_bounds = array<i64: 1, 16, 16, 8>}]} {
    %c0 = arith.constant 0 : index
    %c0_0 = arith.constant 0 : index
    %c0_1 = arith.constant 0 : index
    %c0_2 = arith.constant 0 : index
    %0 = vector.load %arg1[%c0, %c0_0, %c0_1, %c0_2] : memref<1x18x18x4xf32, #tpu.memory_space<vmem>>, vector<1x18x18x4xf32>
    %1 = vector.shape_cast %0 : vector<1x18x18x4xf32> to vector<18x18x4xf32>
    %2 = vector.extract_strided_slice %1 {offsets = [0, 0, 0], sizes = [16, 16, 4], strides = [1, 1, 1]} : vector<18x18x4xf32> to vector<16x16x4xf32>
    %3 = vector.extract_strided_slice %1 {offsets = [0, 1, 0], sizes = [16, 16, 4], strides = [1, 1, 1]} : vector<18x18x4xf32> to vector<16x16x4xf32>
    %4 = vector.extract_strided_slice %1 {offsets = [0, 2, 0], sizes = [16, 16, 4], strides = [1, 1, 1]} : vector<18x18x4xf32> to vector<16x16x4xf32>
    %5 = vector.extract_strided_slice %1 {offsets = [1, 0, 0], sizes = [16, 16, 4], strides = [1, 1, 1]} : vector<18x18x4xf32> to vector<16x16x4xf32>
    %6 = vector.extract_strided_slice %1 {offsets = [1, 1, 0], sizes = [16, 16, 4], strides = [1, 1, 1]} : vector<18x18x4xf32> to vector<16x16x4xf32>
    %7 = vector.extract_strided_slice %1 {offsets = [1, 2, 0], sizes = [16, 16, 4], strides = [1, 1, 1]} : vector<18x18x4xf32> to vector<16x16x4xf32>
    %8 = vector.extract_strided_slice %1 {offsets = [2, 0, 0], sizes = [16, 16, 4], strides = [1, 1, 1]} : vector<18x18x4xf32> to vector<16x16x4xf32>
    %9 = vector.extract_strided_slice %1 {offsets = [2, 1, 0], sizes = [16, 16, 4], strides = [1, 1, 1]} : vector<18x18x4xf32> to vector<16x16x4xf32>
    %10 = vector.extract_strided_slice %1 {offsets = [2, 2, 0], sizes = [16, 16, 4], strides = [1, 1, 1]} : vector<18x18x4xf32> to vector<16x16x4xf32>
    %11 = tpu.concatenate %2, %3, %4, %5, %6, %7, %8, %9, %10 in 2 : vector<16x16x4xf32>, vector<16x16x4xf32>, vector<16x16x4xf32>, vector<16x16x4xf32>, vector<16x16x4xf32>, vector<16x16x4xf32>, vector<16x16x4xf32>, vector<16x16x4xf32>, vector<16x16x4xf32> -> vector<16x16x36xf32>
    %12 = vector.shape_cast %11 : vector<16x16x36xf32> to vector<256x36xf32>
    %c0_3 = arith.constant 0 : index
    %c0_4 = arith.constant 0 : index
    %13 = vector.load %arg2[%c0_3, %c0_4] : memref<36x8xf32, #tpu.memory_space<vmem>>, vector<36x8xf32>
    %cst = arith.constant dense<0.000000e+00> : vector<256x8xf32>
    %14 = tpu.matmul %12, %13, %cst {dimension_numbers = #tpu.dot_dimension_numbers<[1], [0], [0], [1], [0, 0, 1, 1], [], []>} : vector<256x36xf32>, vector<36x8xf32>, vector<256x8xf32> -> vector<256x8xf32>
    %c0_5 = arith.constant 0 : index
    %c0_6 = arith.constant 0 : index
    %15 = vector.load %arg3[%c0_5, %c0_6] : memref<1x8xf32, #tpu.memory_space<vmem>>, vector<1x8xf32>
    %16 = vector.broadcast %15 : vector<1x8xf32> to vector<256x8xf32>
    %17 = arith.addf %14, %16 : vector<256x8xf32>
    %cst_7 = arith.constant 0.000000e+00 : f32
    %18 = vector.broadcast %cst_7 : f32 to vector<18x18x8xf32>
    %c0_8 = arith.constant 0 : index
    %c0_9 = arith.constant 0 : index
    %c0_10 = arith.constant 0 : index
    %19 = vector.load %arg6[%c0_8, %c0_9, %c0_10] : memref<18x18x8xf32, #tpu.memory_space<vmem>>, vector<18x18x8xf32>
    tpu.vector_store %arg6[%c0_8, %c0_9, %c0_10], %18 {strides = array<i32>} : memref<18x18x8xf32, #tpu.memory_space<vmem>>, vector<18x18x8xf32>,
    %20 = vector.shape_cast %17 : vector<256x8xf32> to vector<16x16x8xf32>
    %c1 = arith.constant 1 : index
    %c1_11 = arith.constant 1 : index
    %c0_12 = arith.constant 0 : index
    %21 = vector.load %arg6[%c1, %c1_11, %c0_12] : memref<18x18x8xf32, #tpu.memory_space<vmem>>, vector<16x16x8xf32>
    tpu.vector_store %arg6[%c1, %c1_11, %c0_12], %20 {strides = array<i32>} : memref<18x18x8xf32, #tpu.memory_space<vmem>>, vector<16x16x8xf32>,
    %c0_13 = arith.constant 0 : index
    %c0_14 = arith.constant 0 : index
    %c0_15 = arith.constant 0 : index
    %22 = vector.load %arg6[%c0_13, %c0_14, %c0_15] : memref<18x18x8xf32, #tpu.memory_space<vmem>>, vector<18x18x8xf32>
    %23 = vector.extract_strided_slice %22 {offsets = [0, 0, 0], sizes = [16, 16, 8], strides = [1, 1, 1]} : vector<18x18x8xf32> to vector<16x16x8xf32>
    %24 = vector.extract_strided_slice %22 {offsets = [0, 1, 0], sizes = [16, 16, 8], strides = [1, 1, 1]} : vector<18x18x8xf32> to vector<16x16x8xf32>
    %25 = vector.extract_strided_slice %22 {offsets = [0, 2, 0], sizes = [16, 16, 8], strides = [1, 1, 1]} : vector<18x18x8xf32> to vector<16x16x8xf32>
    %26 = vector.extract_strided_slice %22 {offsets = [1, 0, 0], sizes = [16, 16, 8], strides = [1, 1, 1]} : vector<18x18x8xf32> to vector<16x16x8xf32>
    %27 = vector.extract_strided_slice %22 {offsets = [1, 1, 0], sizes = [16, 16, 8], strides = [1, 1, 1]} : vector<18x18x8xf32> to vector<16x16x8xf32>
    %28 = vector.extract_strided_slice %22 {offsets = [1, 2, 0], sizes = [16, 16, 8], strides = [1, 1, 1]} : vector<18x18x8xf32> to vector<16x16x8xf32>
    %29 = vector.extract_strided_slice %22 {offsets = [2, 0, 0], sizes = [16, 16, 8], strides = [1, 1, 1]} : vector<18x18x8xf32> to vector<16x16x8xf32>
    %30 = vector.extract_strided_slice %22 {offsets = [2, 1, 0], sizes = [16, 16, 8], strides = [1, 1, 1]} : vector<18x18x8xf32> to vector<16x16x8xf32>
    %31 = vector.extract_strided_slice %22 {offsets = [2, 2, 0], sizes = [16, 16, 8], strides = [1, 1, 1]} : vector<18x18x8xf32> to vector<16x16x8xf32>
    %32 = tpu.concatenate %23, %24, %25, %26, %27, %28, %29, %30, %31 in 2 : vector<16x16x8xf32>, vector<16x16x8xf32>, vector<16x16x8xf32>, vector<16x16x8xf32>, vector<16x16x8xf32>, vector<16x16x8xf32>, vector<16x16x8xf32>, vector<16x16x8xf32>, vector<16x16x8xf32> -> vector<16x16x72xf32>
    %33 = vector.shape_cast %32 : vector<16x16x72xf32> to vector<256x72xf32>
    %c0_16 = arith.constant 0 : index
    %c0_17 = arith.constant 0 : index
    %34 = vector.load %arg4[%c0_16, %c0_17] : memref<72x8xf32, #tpu.memory_space<vmem>>, vector<72x8xf32>
    %cst_18 = arith.constant dense<0.000000e+00> : vector<256x8xf32>
    %35 = tpu.matmul %33, %34, %cst_18 {dimension_numbers = #tpu.dot_dimension_numbers<[1], [0], [0], [1], [0, 0, 1, 1], [], []>} : vector<256x72xf32>, vector<72x8xf32>, vector<256x8xf32> -> vector<256x8xf32>
    %36 = vector.shape_cast %35 : vector<256x8xf32> to vector<16x16x8xf32>
    %c0_19 = arith.constant 0 : index
    %c0_20 = arith.constant 0 : index
    %c0_21 = arith.constant 0 : index
    %c0_22 = arith.constant 0 : index
    %37 = vector.load %arg5[%c0_19, %c0_20, %c0_21, %c0_22] : memref<1x16x16x8xf32, #tpu.memory_space<vmem>>, vector<1x16x16x8xf32>
    %38 = vector.shape_cast %37 : vector<1x16x16x8xf32> to vector<16x16x8xf32>
    %39 = vector.shape_cast %36 : vector<16x16x8xf32> to vector<1x16x16x8xf32>
    tpu.vector_store %arg5[%c0_19, %c0_20, %c0_21, %c0_22], %39 {strides = array<i32>} : memref<1x16x16x8xf32, #tpu.memory_space<vmem>>, vector<1x16x16x8xf32>,
    return
  }
  func.func @transform_0(%arg0: i32) -> (i32, i32, i32, i32) {
    %c0_i32 = arith.constant 0 : i32
    %c0_i32_0 = arith.constant 0 : i32
    %c0_i32_1 = arith.constant 0 : i32
    %c0_i32_2 = arith.constant 0 : i32
    return %arg0, %c0_i32, %c0_i32_0, %c0_i32_1 : i32, i32, i32, i32
  }
  func.func @transform_1(%arg0: i32) -> (i32, i32) {
    %c0_i32 = arith.constant 0 : i32
    %c0_i32_0 = arith.constant 0 : i32
    %c0_i32_1 = arith.constant 0 : i32
    return %c0_i32, %c0_i32_0 : i32, i32
  }
  func.func @transform_2(%arg0: i32) -> (i32, i32) {
    %c0_i32 = arith.constant 0 : i32
    %c0_i32_0 = arith.constant 0 : i32
    %c0_i32_1 = arith.constant 0 : i32
    return %c0_i32, %c0_i32_0 : i32, i32
  }
  func.func @transform_3(%arg0: i32) -> (i32, i32) {
    %c0_i32 = arith.constant 0 : i32
    %c0_i32_0 = arith.constant 0 : i32
    %c0_i32_1 = arith.constant 0 : i32
    return %c0_i32, %c0_i32_0 : i32, i32
  }
  func.func @transform_4(%arg0: i32) -> (i32, i32, i32, i32) {
    %c0_i32 = arith.constant 0 : i32
    %c0_i32_0 = arith.constant 0 : i32
    %c0_i32_1 = arith.constant 0 : i32
    %c0_i32_2 = arith.constant 0 : i32
    return %arg0, %c0_i32, %c0_i32_0, %c0_i32_1 : i32, i32, i32, i32
  }
}

</mosaic_0001>

<llo_original>
// kernel: tpu_custom_call.1
$region0: #{tpu_custom_call.1}
  #allocation0 [shape = 'u32[]', space=smem, size = 0x4, offset = 0x4, fixed_abs, tag = 'smem constant byte address 0x4 - core index']
  #allocation1 [shape = 'u32[144,128]{1,0:T(1,128)}', space=vmem, size = 0x12000, scoped, tag = 'internal scratch']
  #allocation2 [shape = 'f32[18,18,8]{2,1,0:T(8,128)}', space=vmem, size = 0x36000, scoped, tag = 'scratch operand']
  %s0 = inlined_call_operand.vmem [shape: f32[2,18,18,4], index: 0, kind: input, shape index: {}]
  %s1 = inlined_call_operand.vmem [shape: f32[36,8], index: 1, kind: input, shape index: {}]
  %s2 = inlined_call_operand.vmem [shape: f32[1,8], index: 2, kind: input, shape index: {}]
  %s3 = inlined_call_operand.vmem [shape: f32[72,8], index: 3, kind: input, shape index: {}]
  %s4 = inlined_call_operand.vmem [shape: f32[2,16,16,8], index: 4, kind: output, shape index: {}]
  %s5 = sld [smem:[#allocation0]]
  $region49: #{tpu_custom_call.1} parent=0
    _
  %s7 = ssub.s32 1, %s5
  %s8 = scalar_select 0, %s7, %s5
  loop: start=0, step=1, limit=4
  $region2: #{tpu_custom_call.1} parent=0 // loop_pre_header
    _
  $region3: #{tpu_custom_call.1} parent=0 // loop_header
    %s10 = sphi 0, %s14
    %p11 = scmp.ge.s32.totalorder %s10, 4
    %s20 = sphi 0, %s22
    %s23 = sphi 0, %s20
    %s24 = sphi 0, %s23
    %s40 = sphi 0, %s24
    %s44 = sphi 0, %s44
    %s46 = sphi 0, %s44
    %s47 = sphi 0, %s46
    %s61 = sphi 0, %s47
    %s65 = sphi 0, %s65
    %s67 = sphi 0, %s65
    %s68 = sphi 0, %s67
    %s82 = sphi 0, %s68
    %s86 = sphi 0, %s86
    %s88 = sphi 0, %s86
    %s89 = sphi 0, %s88
    %s103 = sphi 0, %s89
    %s109 = sphi 0, %s111
    %s112 = sphi 0, %s109
    %s113 = sphi 0, %s112
    %s129 = sphi 0, %s113
  $region4: #{tpu_custom_call.1} parent=0 // loop_header_branch
    %13 = sbr.rel (%p11) target = $region8
  $region5: #{tpu_custom_call.1} parent=0 // loop_body
    %s15 = ssub.s32 %s10, 1
    %s16 = ssub.s32 %s10, 2
    %s17 = sadd.s32 %s10, 1
    %s18 = ssub.s32 %s10, %s17
    %p19 = scmp.eq.s32.totalorder %s18, 0
    %s21 = sadd.s32 %s20, 1
    %s22 = scalar_select %p19, %s20, %s21
    %p25 = pneg %p19
    %p26 = scmp.eq.s32.totalorder %s10, 1
    %p27 = por %p25, %p26
    %p28 = scmp.ne.s32.totalorder %s20, %s23
    %p29 = scmp.eq.s32.totalorder %s10, 0
    %p30 = por %p28, %p29
    %p31 = scmp.ne.s32.totalorder %s20, %s23
    %p32 = scmp.eq.s32.totalorder %s15, 1
    %p33 = por %p31, %p32
    %p34 = scmp.ne.s32.totalorder %s23, %s24
    %p35 = scmp.eq.s32.totalorder %s15, 0
    %p36 = por %p34, %p35
    %p37 = scmp.ne.s32.totalorder %s23, %s24
    %p38 = scmp.eq.s32.totalorder %s16, 1
    %p39 = por %p37, %p38
    %p41 = scmp.ne.s32.totalorder %s24, %s40
    %p42 = scmp.eq.s32.totalorder %s16, 0
    %p43 = por %p41, %p42
    %s45 = sadd.s32 %s44, 1
    %p48 = scmp.eq.s32.totalorder %s10, 1
    %p49 = scmp.ne.s32.totalorder %s44, %s46
    %p50 = scmp.eq.s32.totalorder %s10, 0
    %p51 = por %p49, %p50
    %p52 = scmp.ne.s32.totalorder %s44, %s46
    %p53 = scmp.eq.s32.totalorder %s15, 1
    %p54 = por %p52, %p53
    %p55 = scmp.ne.s32.totalorder %s46, %s47
    %p56 = scmp.eq.s32.totalorder %s15, 0
    %p57 = por %p55, %p56
    %p58 = scmp.ne.s32.totalorder %s46, %s47
    %p59 = scmp.eq.s32.totalorder %s16, 1
    %p60 = por %p58, %p59
    %p62 = scmp.ne.s32.totalorder %s47, %s61
    %p63 = scmp.eq.s32.totalorder %s16, 0
    %p64 = por %p62, %p63
    %s66 = sadd.s32 %s65, 1
    %p69 = scmp.eq.s32.totalorder %s10, 1
    %p70 = scmp.ne.s32.totalorder %s65, %s67
    %p71 = scmp.eq.s32.totalorder %s10, 0
    %p72 = por %p70, %p71
    %p73 = scmp.ne.s32.totalorder %s65, %s67
    %p74 = scmp.eq.s32.totalorder %s15, 1
    %p75 = por %p73, %p74
    %p76 = scmp.ne.s32.totalorder %s67, %s68
    %p77 = scmp.eq.s32.totalorder %s15, 0
    %p78 = por %p76, %p77
    %p79 = scmp.ne.s32.totalorder %s67, %s68
    %p80 = scmp.eq.s32.totalorder %s16, 1
    %p81 = por %p79, %p80
    %p83 = scmp.ne.s32.totalorder %s68, %s82
    %p84 = scmp.eq.s32.totalorder %s16, 0
    %p85 = por %p83, %p84
    %s87 = sadd.s32 %s86, 1
    %p90 = scmp.eq.s32.totalorder %s10, 1
    %p91 = scmp.ne.s32.totalorder %s86, %s88
    %p92 = scmp.eq.s32.totalorder %s10, 0
    %p93 = por %p91, %p92
    %p94 = scmp.ne.s32.totalorder %s86, %s88
    %p95 = scmp.eq.s32.totalorder %s15, 1
    %p96 = por %p94, %p95
    %p97 = scmp.ne.s32.totalorder %s88, %s89
    %p98 = scmp.eq.s32.totalorder %s15, 0
    %p99 = por %p97, %p98
    %p100 = scmp.ne.s32.totalorder %s88, %s89
    %p101 = scmp.eq.s32.totalorder %s16, 1
    %p102 = por %p100, %p101
    %p104 = scmp.ne.s32.totalorder %s89, %s103
    %p105 = scmp.eq.s32.totalorder %s16, 0
    %p106 = por %p104, %p105
    %s107 = ssub.s32 %s10, %s17
    %p108 = scmp.eq.s32.totalorder %s107, 0
    %s110 = sadd.s32 %s109, 1
    %s111 = scalar_select %p108, %s109, %s110
    %p114 = pneg %p108
    %p115 = scmp.eq.s32.totalorder %s10, 1
    %p116 = por %p114, %p115
    %p117 = scmp.ne.s32.totalorder %s109, %s112
    %p118 = scmp.eq.s32.totalorder %s10, 0
    %p119 = por %p117, %p118
    %p120 = scmp.ne.s32.totalorder %s109, %s112
    %p121 = scmp.eq.s32.totalorder %s15, 1
    %p122 = por %p120, %p121
    %p123 = scmp.ne.s32.totalorder %s112, %s113
    %p124 = scmp.eq.s32.totalorder %s15, 0
    %p125 = por %p123, %p124
    %p126 = scmp.ne.s32.totalorder %s112, %s113
    %p127 = scmp.eq.s32.totalorder %s16, 1
    %p128 = por %p126, %p127
    %p130 = scmp.ne.s32.totalorder %s113, %s129
    %p131 = scmp.eq.s32.totalorder %s16, 0
    %p132 = por %p130, %p131
    %p133 = scmp.le.s32.totalorder 1, %s10
    %p134 = scmp.lt.s32.totalorder %s10, 3
    %p135 = pnand %p133, %p134
    %p136 = pneg %p135
    // Predicated region
    $region9: #{tpu_custom_call.1} parent=5 // pred_check
      _
    $region10: #{tpu_custom_call.1} parent=5 // pred_check_branch
      %138 = sbr.rel (%p135) target = $region12
    $region11: #{tpu_custom_call.1} parent=5 // pred_region
      %s139 = ssub.s32 %s10, 1
      // Predicated region
      $region13: #{tpu_custom_call.1} parent=11 // pred_check
        %p140 = pneg %p57
      $region14: #{tpu_custom_call.1} parent=11 // pred_check_branch
        %142 = sbr.rel (%p140) target = $region16
      $region15: #{tpu_custom_call.1} parent=11 // pred_region
        _
      $region16: #{tpu_custom_call.1} parent=11 // pred_fallthru
        _
      // Predicated region
      $region17: #{tpu_custom_call.1} parent=11 // pred_check
        %p143 = pneg %p78
      $region18: #{tpu_custom_call.1} parent=11 // pred_check_branch
        %145 = sbr.rel (%p143) target = $region20
      $region19: #{tpu_custom_call.1} parent=11 // pred_region
        _
      $region20: #{tpu_custom_call.1} parent=11 // pred_fallthru
        _
      // Predicated region
      $region21: #{tpu_custom_call.1} parent=11 // pred_check
        %p146 = pneg %p99
      $region22: #{tpu_custom_call.1} parent=11 // pred_check_branch
        %148 = sbr.rel (%p146) target = $region24
      $region23: #{tpu_custom_call.1} parent=11 // pred_region
        _
      $region24: #{tpu_custom_call.1} parent=11 // pred_fallthru
        _
    $region12: #{tpu_custom_call.1} parent=5 // pred_fallthru
      _
    %p149 = scmp.lt.s32.totalorder %s10, 2
    // Predicated region
    $region25: #{tpu_custom_call.1} parent=5 // pred_check
      %p150 = pneg %p149
    $region26: #{tpu_custom_call.1} parent=5 // pred_check_branch
      %152 = sbr.rel (%p150) target = $region28
    $region27: #{tpu_custom_call.1} parent=5 // pred_region
      // Predicated region
      $region29: #{tpu_custom_call.1} parent=27 // pred_check
        %p153 = pneg %p30
      $region30: #{tpu_custom_call.1} parent=27 // pred_check_branch
        %155 = sbr.rel (%p153) target = $region32
      $region31: #{tpu_custom_call.1} parent=27 // pred_region
        %p156 = scmp.lt.s32.totalorder %s10, 1
        %s157 = scalar_select %p156, %s10, 1
        %s158 = smul.addr %s157, 54
        %s159 = smul.addr %s158, 8
        %s160 = scalar_lea.vmem %s0, %s159
      $region32: #{tpu_custom_call.1} parent=27 // pred_fallthru
        _
    $region28: #{tpu_custom_call.1} parent=5 // pred_fallthru
      _
    %p161 = scmp.le.s32.totalorder 1, %s10
    %p162 = scmp.lt.s32.totalorder %s10, 3
    %p163 = pnand %p161, %p162
    %p164 = pneg %p163
    // Predicated region
    $region33: #{tpu_custom_call.1} parent=5 // pred_check
      _
    $region34: #{tpu_custom_call.1} parent=5 // pred_check_branch
      %166 = sbr.rel (%p163) target = $region36
    $region35: #{tpu_custom_call.1} parent=5 // pred_region
      %s167 = ssub.s32 %s10, 1
      %p168 = scmp.lt.s32.totalorder %s15, 1
      %s169 = scalar_select %p168, %s15, 1
      %s170 = smul.addr %s169, 54
      %s171 = smul.addr %s170, 8
      %s172 = scalar_lea.vmem %s0, %s171
      %p173 = pneg %p36
      %p174 = pneg %p33
      %p175 = pneg %p57
      %p176 = pneg %p54
      %p177 = pneg %p78
      %p178 = pneg %p75
      %p179 = pneg %p99
      %p180 = pneg %p96
      %p181 = pneg %p125
      %p182 = pneg %p122
      %p183 = scmp.lt.s32.totalorder %s15, 1
      %s184 = scalar_select %p183, %s15, 1
      %s185 = smul.addr %s184, 32
      %s186 = smul.addr %s185, 8
      %s187 = scalar_lea.vmem %s4, %s186
      %p188 = scmp.lt.s32.totalorder %s15, 1
      %s189 = scalar_select %p188, %s15, 1
      %s190 = smul.addr %s189, 54
      %s191 = smul.addr %s190, 8
      %s192 = scalar_lea.vmem %s0, %s191
      %p193 = scmp.lt.s32.totalorder %s15, 1
      %s194 = scalar_select %p193, %s15, 1
      %s195 = smul.addr %s194, 32
      %s196 = smul.addr %s195, 8
      %s197 = scalar_lea.vmem %s4, %s196
      %v198 = vld [vmem:[%s192] sm:$0xff]
      %v199 = vld [vmem:[%s192 + $0x8] sm:$0xff]
      %v200 = vld [vmem:[%s192 + $0x10] sm:$0x3]
      %v201 = vld [vmem:[%s192 + $0x18] sm:$0xff]
      %v202 = vld [vmem:[%s192 + $0x20] sm:$0xff]
      %v203 = vld [vmem:[%s192 + $0x28] sm:$0x3]
      %v204 = vld [vmem:[%s192 + $0x30] sm:$0xff]
      %v205 = vld [vmem:[%s192 + $0x38] sm:$0xff]
      %v206 = vld [vmem:[%s192 + $0x40] sm:$0x3]
      %v207 = vld [vmem:[%s192 + $0x48] sm:$0xff]
      %v208 = vld [vmem:[%s192 + $0x50] sm:$0xff]
      %v209 = vld [vmem:[%s192 + $0x58] sm:$0x3]
      %v210 = vld [vmem:[%s192 + $0x60] sm:$0xff]
      %v211 = vld [vmem:[%s192 + $0x68] sm:$0xff]
      %v212 = vld [vmem:[%s192 + $0x70] sm:$0x3]
      %v213 = vld [vmem:[%s192 + $0x78] sm:$0xff]
      %v214 = vld [vmem:[%s192 + $0x80] sm:$0xff]
      %v215 = vld [vmem:[%s192 + $0x88] sm:$0x3]
      %v216 = vld [vmem:[%s192 + $0x90] sm:$0xff]
      %v217 = vld [vmem:[%s192 + $0x98] sm:$0xff]
      %v218 = vld [vmem:[%s192 + $0xa0] sm:$0x3]
      %v219 = vld [vmem:[%s192 + $0xa8] sm:$0xff]
      %v220 = vld [vmem:[%s192 + $0xb0] sm:$0xff]
      %v221 = vld [vmem:[%s192 + $0xb8] sm:$0x3]
      %v222 = vld [vmem:[%s192 + $0xc0] sm:$0xff]
      %v223 = vld [vmem:[%s192 + $0xc8] sm:$0xff]
      %v224 = vld [vmem:[%s192 + $0xd0] sm:$0x3]
      %v225 = vld [vmem:[%s192 + $0xd8] sm:$0xff]
      %v226 = vld [vmem:[%s192 + $0xe0] sm:$0xff]
      %v227 = vld [vmem:[%s192 + $0xe8] sm:$0x3]
      %v228 = vld [vmem:[%s192 + $0xf0] sm:$0xff]
      %v229 = vld [vmem:[%s192 + $0xf8] sm:$0xff]
      %v230 = vld [vmem:[%s192 + $0x100] sm:$0x3]
      %v231 = vld [vmem:[%s192 + $0x108] sm:$0xff]
      %v232 = vld [vmem:[%s192 + $0x110] sm:$0xff]
      %v233 = vld [vmem:[%s192 + $0x118] sm:$0x3]
      %v234 = vld [vmem:[%s192 + $0x120] sm:$0xff]
      %v235 = vld [vmem:[%s192 + $0x128] sm:$0xff]
      %v236 = vld [vmem:[%s192 + $0x130] sm:$0x3]
      %v237 = vld [vmem:[%s192 + $0x138] sm:$0xff]
      %v238 = vld [vmem:[%s192 + $0x140] sm:$0xff]
      %v239 = vld [vmem:[%s192 + $0x148] sm:$0x3]
      %v240 = vld [vmem:[%s192 + $0x150] sm:$0xff]
      %v241 = vld [vmem:[%s192 + $0x158] sm:$0xff]
      %v242 = vld [vmem:[%s192 + $0x160] sm:$0x3]
      %v243 = vld [vmem:[%s192 + $0x168] sm:$0xff]
      %v244 = vld [vmem:[%s192 + $0x170] sm:$0xff]
      %v245 = vld [vmem:[%s192 + $0x178] sm:$0x3]
      %v246 = vld [vmem:[%s192 + $0x180] sm:$0xff]
      %v247 = vld [vmem:[%s192 + $0x188] sm:$0xff]
      %v248 = vld [vmem:[%s192 + $0x190] sm:$0x3]
      %v249 = vld [vmem:[%s192 + $0x198] sm:$0xff]
      %v250 = vld [vmem:[%s192 + $0x1a0] sm:$0xff]
      %v251 = vld [vmem:[%s192 + $0x1a8] sm:$0x3]
      %vm300 = vcmask 1046528
      %v301 = vrot.slane %v198, 1
      %v302 = vrot.slane %v199, 1
      %v303 = vsel %vm300, %v301, %v302
      %v304 = vrot.slane %v200, 1
      %v305 = vsel %vm300, %v302, %v304
      %v306 = vrot.slane %v201, 1
      %v307 = vrot.slane %v202, 1
      %v308 = vsel %vm300, %v306, %v307
      %v309 = vrot.slane %v203, 1
      %v310 = vsel %vm300, %v307, %v309
      %v311 = vrot.slane %v204, 1
      %v312 = vrot.slane %v205, 1
      %v313 = vsel %vm300, %v311, %v312
      %v314 = vrot.slane %v206, 1
      %v315 = vsel %vm300, %v312, %v314
      %v316 = vrot.slane %v207, 1
      %v317 = vrot.slane %v208, 1
      %v318 = vsel %vm300, %v316, %v317
      %v319 = vrot.slane %v209, 1
      %v320 = vsel %vm300, %v317, %v319
      %v321 = vrot.slane %v210, 1
      %v322 = vrot.slane %v211, 1
      %v323 = vsel %vm300, %v321, %v322
      %v324 = vrot.slane %v212, 1
      %v325 = vsel %vm300, %v322, %v324
      %v326 = vrot.slane %v213, 1
      %v327 = vrot.slane %v214, 1
      %v328 = vsel %vm300, %v326, %v327
      %v329 = vrot.slane %v215, 1
      %v330 = vsel %vm300, %v327, %v329
      %v331 = vrot.slane %v216, 1
      %v332 = vrot.slane %v217, 1
      %v333 = vsel %vm300, %v331, %v332
      %v334 = vrot.slane %v218, 1
      %v335 = vsel %vm300, %v332, %v334
      %v336 = vrot.slane %v219, 1
      %v337 = vrot.slane %v220, 1
      %v338 = vsel %vm300, %v336, %v337
      %v339 = vrot.slane %v221, 1
      %v340 = vsel %vm300, %v337, %v339
      %v341 = vrot.slane %v222, 1
      %v342 = vrot.slane %v223, 1
      %v343 = vsel %vm300, %v341, %v342
      %v344 = vrot.slane %v224, 1
      %v345 = vsel %vm300, %v342, %v344
      %v346 = vrot.slane %v225, 1
      %v347 = vrot.slane %v226, 1
      %v348 = vsel %vm300, %v346, %v347
      %v349 = vrot.slane %v227, 1
      %v350 = vsel %vm300, %v347, %v349
      %v351 = vrot.slane %v228, 1
      %v352 = vrot.slane %v229, 1
      %v353 = vsel %vm300, %v351, %v352
      %v354 = vrot.slane %v230, 1
      %v355 = vsel %vm300, %v352, %v354
      %v356 = vrot.slane %v231, 1
      %v357 = vrot.slane %v232, 1
      %v358 = vsel %vm300, %v356, %v357
      %v359 = vrot.slane %v233, 1
      %v360 = vsel %vm300, %v357, %v359
      %v361 = vrot.slane %v234, 1
      %v362 = vrot.slane %v235, 1
      %v363 = vsel %vm300, %v361, %v362
      %v364 = vrot.slane %v236, 1
      %v365 = vsel %vm300, %v362, %v364
      %v366 = vrot.slane %v237, 1
      %v367 = vrot.slane %v238, 1
      %v368 = vsel %vm300, %v366, %v367
      %v369 = vrot.slane %v239, 1
      %v370 = vsel %vm300, %v367, %v369
      %v371 = vrot.slane %v240, 1
      %v372 = vrot.slane %v241, 1
      %v373 = vsel %vm300, %v371, %v372
      %v374 = vrot.slane %v242, 1
      %v375 = vsel %vm300, %v372, %v374
      %v376 = vrot.slane %v243, 1
      %v377 = vrot.slane %v244, 1
      %v378 = vsel %vm300, %v376, %v377
      %v379 = vrot.slane %v245, 1
      %v380 = vsel %vm300, %v377, %v379
      %381 = vrot.lane.b32.xlu0 %v303, 4
      %v382 = vpop.permute.xlu0 %381
      %383 = vrot.lane.b32.xlu0 %v305, 4
      %v384 = vpop.permute.xlu0 %383
      %385 = vrot.lane.b32.xlu0 %v308, 4
      %v386 = vpop.permute.xlu0 %385
      %387 = vrot.lane.b32.xlu0 %v310, 4
      %v388 = vpop.permute.xlu0 %387
      %389 = vrot.lane.b32.xlu0 %v313, 4
      %v390 = vpop.permute.xlu0 %389
      %391 = vrot.lane.b32.xlu0 %v315, 4
      %v392 = vpop.permute.xlu0 %391
      %393 = vrot.lane.b32.xlu0 %v318, 4
      %v394 = vpop.permute.xlu0 %393
      %395 = vrot.lane.b32.xlu0 %v320, 4
      %v396 = vpop.permute.xlu0 %395
      %397 = vrot.lane.b32.xlu0 %v323, 4
      %v398 = vpop.permute.xlu0 %397
      %399 = vrot.lane.b32.xlu0 %v325, 4
      %v400 = vpop.permute.xlu0 %399
      %401 = vrot.lane.b32.xlu0 %v328, 4
      %v402 = vpop.permute.xlu0 %401
      %403 = vrot.lane.b32.xlu0 %v330, 4
      %v404 = vpop.permute.xlu0 %403
      %405 = vrot.lane.b32.xlu0 %v333, 4
      %v406 = vpop.permute.xlu0 %405
      %407 = vrot.lane.b32.xlu0 %v335, 4
      %v408 = vpop.permute.xlu0 %407
      %409 = vrot.lane.b32.xlu0 %v338, 4
      %v410 = vpop.permute.xlu0 %409
      %411 = vrot.lane.b32.xlu0 %v340, 4
      %v412 = vpop.permute.xlu0 %411
      %413 = vrot.lane.b32.xlu0 %v343, 4
      %v414 = vpop.permute.xlu0 %413
      %415 = vrot.lane.b32.xlu0 %v345, 4
      %v416 = vpop.permute.xlu0 %415
      %417 = vrot.lane.b32.xlu0 %v348, 4
      %v418 = vpop.permute.xlu0 %417
      %419 = vrot.lane.b32.xlu0 %v350, 4
      %v420 = vpop.permute.xlu0 %419
      %421 = vrot.lane.b32.xlu0 %v353, 4
      %v422 = vpop.permute.xlu0 %421
      %423 = vrot.lane.b32.xlu0 %v355, 4
      %v424 = vpop.permute.xlu0 %423
      %425 = vrot.lane.b32.xlu0 %v358, 4
      %v426 = vpop.permute.xlu0 %425
      %427 = vrot.lane.b32.xlu0 %v360, 4
      %v428 = vpop.permute.xlu0 %427
      %429 = vrot.lane.b32.xlu0 %v363, 4
      %v430 = vpop.permute.xlu0 %429
      %431 = vrot.lane.b32.xlu0 %v365, 4
      %v432 = vpop.permute.xlu0 %431
      %433 = vrot.lane.b32.xlu0 %v368, 4
      %v434 = vpop.permute.xlu0 %433
      %435 = vrot.lane.b32.xlu0 %v370, 4
      %v436 = vpop.permute.xlu0 %435
      %437 = vrot.lane.b32.xlu0 %v373, 4
      %v438 = vpop.permute.xlu0 %437
      %439 = vrot.lane.b32.xlu0 %v375, 4
      %v440 = vpop.permute.xlu0 %439
      %441 = vrot.lane.b32.xlu0 %v378, 4
      %v442 = vpop.permute.xlu0 %441
      %443 = vrot.lane.b32.xlu0 %v380, 4
      %v444 = vpop.permute.xlu0 %443
      %vm477 = vcmask 1045504
      %v478 = vrot.slane %v198, 2
      %v479 = vrot.slane %v199, 2
      %v480 = vsel %vm477, %v478, %v479
      %v481 = vrot.slane %v200, 2
      %v482 = vsel %vm477, %v479, %v481
      %v483 = vrot.slane %v201, 2
      %v484 = vrot.slane %v202, 2
      %v485 = vsel %vm477, %v483, %v484
      %v486 = vrot.slane %v203, 2
      %v487 = vsel %vm477, %v484, %v486
      %v488 = vrot.slane %v204, 2
      %v489 = vrot.slane %v205, 2
      %v490 = vsel %vm477, %v488, %v489
      %v491 = vrot.slane %v206, 2
      %v492 = vsel %vm477, %v489, %v491
      %v493 = vrot.slane %v207, 2
      %v494 = vrot.slane %v208, 2
      %v495 = vsel %vm477, %v493, %v494
      %v496 = vrot.slane %v209, 2
      %v497 = vsel %vm477, %v494, %v496
      %v498 = vrot.slane %v210, 2
      %v499 = vrot.slane %v211, 2
      %v500 = vsel %vm477, %v498, %v499
      %v501 = vrot.slane %v212, 2
      %v502 = vsel %vm477, %v499, %v501
      %v503 = vrot.slane %v213, 2
      %v504 = vrot.slane %v214, 2
      %v505 = vsel %vm477, %v503, %v504
      %v506 = vrot.slane %v215, 2
      %v507 = vsel %vm477, %v504, %v506
      %v508 = vrot.slane %v216, 2
      %v509 = vrot.slane %v217, 2
      %v510 = vsel %vm477, %v508, %v509
      %v511 = vrot.slane %v218, 2
      %v512 = vsel %vm477, %v509, %v511
      %v513 = vrot.slane %v219, 2
      %v514 = vrot.slane %v220, 2
      %v515 = vsel %vm477, %v513, %v514
      %v516 = vrot.slane %v221, 2
      %v517 = vsel %vm477, %v514, %v516
      %v518 = vrot.slane %v222, 2
      %v519 = vrot.slane %v223, 2
      %v520 = vsel %vm477, %v518, %v519
      %v521 = vrot.slane %v224, 2
      %v522 = vsel %vm477, %v519, %v521
      %v523 = vrot.slane %v225, 2
      %v524 = vrot.slane %v226, 2
      %v525 = vsel %vm477, %v523, %v524
      %v526 = vrot.slane %v227, 2
      %v527 = vsel %vm477, %v524, %v526
      %v528 = vrot.slane %v228, 2
      %v529 = vrot.slane %v229, 2
      %v530 = vsel %vm477, %v528, %v529
      %v531 = vrot.slane %v230, 2
      %v532 = vsel %vm477, %v529, %v531
      %v533 = vrot.slane %v231, 2
      %v534 = vrot.slane %v232, 2
      %v535 = vsel %vm477, %v533, %v534
      %v536 = vrot.slane %v233, 2
      %v537 = vsel %vm477, %v534, %v536
      %v538 = vrot.slane %v234, 2
      %v539 = vrot.slane %v235, 2
      %v540 = vsel %vm477, %v538, %v539
      %v541 = vrot.slane %v236, 2
      %v542 = vsel %vm477, %v539, %v541
      %v543 = vrot.slane %v237, 2
      %v544 = vrot.slane %v238, 2
      %v545 = vsel %vm477, %v543, %v544
      %v546 = vrot.slane %v239, 2
      %v547 = vsel %vm477, %v544, %v546
      %v548 = vrot.slane %v240, 2
      %v549 = vrot.slane %v241, 2
      %v550 = vsel %vm477, %v548, %v549
      %v551 = vrot.slane %v242, 2
      %v552 = vsel %vm477, %v549, %v551
      %v553 = vrot.slane %v243, 2
      %v554 = vrot.slane %v244, 2
      %v555 = vsel %vm477, %v553, %v554
      %v556 = vrot.slane %v245, 2
      %v557 = vsel %vm477, %v554, %v556
      %558 = vrot.lane.b32.xlu0 %v480, 8
      %v559 = vpop.permute.xlu0 %558
      %560 = vrot.lane.b32.xlu0 %v482, 8
      %v561 = vpop.permute.xlu0 %560
      %562 = vrot.lane.b32.xlu0 %v485, 8
      %v563 = vpop.permute.xlu0 %562
      %564 = vrot.lane.b32.xlu0 %v487, 8
      %v565 = vpop.permute.xlu0 %564
      %566 = vrot.lane.b32.xlu0 %v490, 8
      %v567 = vpop.permute.xlu0 %566
      %568 = vrot.lane.b32.xlu0 %v492, 8
      %v569 = vpop.permute.xlu0 %568
      %570 = vrot.lane.b32.xlu0 %v495, 8
      %v571 = vpop.permute.xlu0 %570
      %572 = vrot.lane.b32.xlu0 %v497, 8
      %v573 = vpop.permute.xlu0 %572
      %574 = vrot.lane.b32.xlu0 %v500, 8
      %v575 = vpop.permute.xlu0 %574
      %576 = vrot.lane.b32.xlu0 %v502, 8
      %v577 = vpop.permute.xlu0 %576
      %578 = vrot.lane.b32.xlu0 %v505, 8
      %v579 = vpop.permute.xlu0 %578
      %580 = vrot.lane.b32.xlu0 %v507, 8
      %v581 = vpop.permute.xlu0 %580
      %582 = vrot.lane.b32.xlu0 %v510, 8
      %v583 = vpop.permute.xlu0 %582
      %584 = vrot.lane.b32.xlu0 %v512, 8
      %v585 = vpop.permute.xlu0 %584
      %586 = vrot.lane.b32.xlu0 %v515, 8
      %v587 = vpop.permute.xlu0 %586
      %588 = vrot.lane.b32.xlu0 %v517, 8
      %v589 = vpop.permute.xlu0 %588
      %590 = vrot.lane.b32.xlu0 %v520, 8
      %v591 = vpop.permute.xlu0 %590
      %592 = vrot.lane.b32.xlu0 %v522, 8
      %v593 = vpop.permute.xlu0 %592
      %594 = vrot.lane.b32.xlu0 %v525, 8
      %v595 = vpop.permute.xlu0 %594
      %596 = vrot.lane.b32.xlu0 %v527, 8
      %v597 = vpop.permute.xlu0 %596
      %598 = vrot.lane.b32.xlu0 %v530, 8
      %v599 = vpop.permute.xlu0 %598
      %600 = vrot.lane.b32.xlu0 %v532, 8
      %v601 = vpop.permute.xlu0 %600
      %602 = vrot.lane.b32.xlu0 %v535, 8
      %v603 = vpop.permute.xlu0 %602
      %604 = vrot.lane.b32.xlu0 %v537, 8
      %v605 = vpop.permute.xlu0 %604
      %606 = vrot.lane.b32.xlu0 %v540, 8
      %v607 = vpop.permute.xlu0 %606
      %608 = vrot.lane.b32.xlu0 %v542, 8
      %v609 = vpop.permute.xlu0 %608
      %610 = vrot.lane.b32.xlu0 %v545, 8
      %v611 = vpop.permute.xlu0 %610
      %612 = vrot.lane.b32.xlu0 %v547, 8
      %v613 = vpop.permute.xlu0 %612
      %614 = vrot.lane.b32.xlu0 %v550, 8
      %v615 = vpop.permute.xlu0 %614
      %616 = vrot.lane.b32.xlu0 %v552, 8
      %v617 = vpop.permute.xlu0 %616
      %618 = vrot.lane.b32.xlu0 %v555, 8
      %v619 = vpop.permute.xlu0 %618
      %620 = vrot.lane.b32.xlu0 %v557, 8
      %v621 = vpop.permute.xlu0 %620
      %656 = vrot.lane.b32.xlu0 %v201, 12
      %v657 = vpop.permute.xlu0 %656
      %658 = vrot.lane.b32.xlu0 %v202, 12
      %v659 = vpop.permute.xlu0 %658
      %660 = vrot.lane.b32.xlu0 %v204, 12
      %v661 = vpop.permute.xlu0 %660
      %662 = vrot.lane.b32.xlu0 %v205, 12
      %v663 = vpop.permute.xlu0 %662
      %664 = vrot.lane.b32.xlu0 %v207, 12
      %v665 = vpop.permute.xlu0 %664
      %666 = vrot.lane.b32.xlu0 %v208, 12
      %v667 = vpop.permute.xlu0 %666
      %668 = vrot.lane.b32.xlu0 %v210, 12
      %v669 = vpop.permute.xlu0 %668
      %670 = vrot.lane.b32.xlu0 %v211, 12
      %v671 = vpop.permute.xlu0 %670
      %672 = vrot.lane.b32.xlu0 %v213, 12
      %v673 = vpop.permute.xlu0 %672
      %674 = vrot.lane.b32.xlu0 %v214, 12
      %v675 = vpop.permute.xlu0 %674
      %676 = vrot.lane.b32.xlu0 %v216, 12
      %v677 = vpop.permute.xlu0 %676
      %678 = vrot.lane.b32.xlu0 %v217, 12
      %v679 = vpop.permute.xlu0 %678
      %680 = vrot.lane.b32.xlu0 %v219, 12
      %v681 = vpop.permute.xlu0 %680
      %682 = vrot.lane.b32.xlu0 %v220, 12
      %v683 = vpop.permute.xlu0 %682
      %684 = vrot.lane.b32.xlu0 %v222, 12
      %v685 = vpop.permute.xlu0 %684
      %686 = vrot.lane.b32.xlu0 %v223, 12
      %v687 = vpop.permute.xlu0 %686
      %688 = vrot.lane.b32.xlu0 %v225, 12
      %v689 = vpop.permute.xlu0 %688
      %690 = vrot.lane.b32.xlu0 %v226, 12
      %v691 = vpop.permute.xlu0 %690
      %692 = vrot.lane.b32.xlu0 %v228, 12
      %v693 = vpop.permute.xlu0 %692
      %694 = vrot.lane.b32.xlu0 %v229, 12
      %v695 = vpop.permute.xlu0 %694
      %696 = vrot.lane.b32.xlu0 %v231, 12
      %v697 = vpop.permute.xlu0 %696
      %698 = vrot.lane.b32.xlu0 %v232, 12
      %v699 = vpop.permute.xlu0 %698
      %700 = vrot.lane.b32.xlu0 %v234, 12
      %v701 = vpop.permute.xlu0 %700
      %702 = vrot.lane.b32.xlu0 %v235, 12
      %v703 = vpop.permute.xlu0 %702
      %704 = vrot.lane.b32.xlu0 %v237, 12
      %v705 = vpop.permute.xlu0 %704
      %706 = vrot.lane.b32.xlu0 %v238, 12
      %v707 = vpop.permute.xlu0 %706
      %708 = vrot.lane.b32.xlu0 %v240, 12
      %v709 = vpop.permute.xlu0 %708
      %710 = vrot.lane.b32.xlu0 %v241, 12
      %v711 = vpop.permute.xlu0 %710
      %712 = vrot.lane.b32.xlu0 %v243, 12
      %v713 = vpop.permute.xlu0 %712
      %714 = vrot.lane.b32.xlu0 %v244, 12
      %v715 = vpop.permute.xlu0 %714
      %716 = vrot.lane.b32.xlu0 %v246, 12
      %v717 = vpop.permute.xlu0 %716
      %718 = vrot.lane.b32.xlu0 %v247, 12
      %v719 = vpop.permute.xlu0 %718
      %v753 = vrot.slane %v246, 1
      %v754 = vrot.slane %v247, 1
      %v755 = vsel %vm300, %v753, %v754
      %v756 = vrot.slane %v248, 1
      %v757 = vsel %vm300, %v754, %v756
      %758 = vrot.lane.b32.xlu0 %v308, 16
      %v759 = vpop.permute.xlu0 %758
      %760 = vrot.lane.b32.xlu0 %v310, 16
      %v761 = vpop.permute.xlu0 %760
      %762 = vrot.lane.b32.xlu0 %v313, 16
      %v763 = vpop.permute.xlu0 %762
      %764 = vrot.lane.b32.xlu0 %v315, 16
      %v765 = vpop.permute.xlu0 %764
      %766 = vrot.lane.b32.xlu0 %v318, 16
      %v767 = vpop.permute.xlu0 %766
      %768 = vrot.lane.b32.xlu0 %v320, 16
      %v769 = vpop.permute.xlu0 %768
      %770 = vrot.lane.b32.xlu0 %v323, 16
      %v771 = vpop.permute.xlu0 %770
      %772 = vrot.lane.b32.xlu0 %v325, 16
      %v773 = vpop.permute.xlu0 %772
      %774 = vrot.lane.b32.xlu0 %v328, 16
      %v775 = vpop.permute.xlu0 %774
      %776 = vrot.lane.b32.xlu0 %v330, 16
      %v777 = vpop.permute.xlu0 %776
      %778 = vrot.lane.b32.xlu0 %v333, 16
      %v779 = vpop.permute.xlu0 %778
      %780 = vrot.lane.b32.xlu0 %v335, 16
      %v781 = vpop.permute.xlu0 %780
      %782 = vrot.lane.b32.xlu0 %v338, 16
      %v783 = vpop.permute.xlu0 %782
      %784 = vrot.lane.b32.xlu0 %v340, 16
      %v785 = vpop.permute.xlu0 %784
      %786 = vrot.lane.b32.xlu0 %v343, 16
      %v787 = vpop.permute.xlu0 %786
      %788 = vrot.lane.b32.xlu0 %v345, 16
      %v789 = vpop.permute.xlu0 %788
      %790 = vrot.lane.b32.xlu0 %v348, 16
      %v791 = vpop.permute.xlu0 %790
      %792 = vrot.lane.b32.xlu0 %v350, 16
      %v793 = vpop.permute.xlu0 %792
      %794 = vrot.lane.b32.xlu0 %v353, 16
      %v795 = vpop.permute.xlu0 %794
      %796 = vrot.lane.b32.xlu0 %v355, 16
      %v797 = vpop.permute.xlu0 %796
      %798 = vrot.lane.b32.xlu0 %v358, 16
      %v799 = vpop.permute.xlu0 %798
      %800 = vrot.lane.b32.xlu0 %v360, 16
      %v801 = vpop.permute.xlu0 %800
      %802 = vrot.lane.b32.xlu0 %v363, 16
      %v803 = vpop.permute.xlu0 %802
      %804 = vrot.lane.b32.xlu0 %v365, 16
      %v805 = vpop.permute.xlu0 %804
      %806 = vrot.lane.b32.xlu0 %v368, 16
      %v807 = vpop.permute.xlu0 %806
      %808 = vrot.lane.b32.xlu0 %v370, 16
      %v809 = vpop.permute.xlu0 %808
      %810 = vrot.lane.b32.xlu0 %v373, 16
      %v811 = vpop.permute.xlu0 %810
      %812 = vrot.lane.b32.xlu0 %v375, 16
      %v813 = vpop.permute.xlu0 %812
      %814 = vrot.lane.b32.xlu0 %v378, 16
      %v815 = vpop.permute.xlu0 %814
      %816 = vrot.lane.b32.xlu0 %v380, 16
      %v817 = vpop.permute.xlu0 %816
      %818 = vrot.lane.b32.xlu0 %v755, 16
      %v819 = vpop.permute.xlu0 %818
      %820 = vrot.lane.b32.xlu0 %v757, 16
      %v821 = vpop.permute.xlu0 %820
      %v854 = vrot.slane %v246, 2
      %v855 = vrot.slane %v247, 2
      %v856 = vsel %vm477, %v854, %v855
      %v857 = vrot.slane %v248, 2
      %v858 = vsel %vm477, %v855, %v857
      %859 = vrot.lane.b32.xlu0 %v485, 20
      %v860 = vpop.permute.xlu0 %859
      %861 = vrot.lane.b32.xlu0 %v487, 20
      %v862 = vpop.permute.xlu0 %861
      %863 = vrot.lane.b32.xlu0 %v490, 20
      %v864 = vpop.permute.xlu0 %863
      %865 = vrot.lane.b32.xlu0 %v492, 20
      %v866 = vpop.permute.xlu0 %865
      %867 = vrot.lane.b32.xlu0 %v495, 20
      %v868 = vpop.permute.xlu0 %867
      %869 = vrot.lane.b32.xlu0 %v497, 20
      %v870 = vpop.permute.xlu0 %869
      %871 = vrot.lane.b32.xlu0 %v500, 20
      %v872 = vpop.permute.xlu0 %871
      %873 = vrot.lane.b32.xlu0 %v502, 20
      %v874 = vpop.permute.xlu0 %873
      %875 = vrot.lane.b32.xlu0 %v505, 20
      %v876 = vpop.permute.xlu0 %875
      %877 = vrot.lane.b32.xlu0 %v507, 20
      %v878 = vpop.permute.xlu0 %877
      %879 = vrot.lane.b32.xlu0 %v510, 20
      %v880 = vpop.permute.xlu0 %879
      %881 = vrot.lane.b32.xlu0 %v512, 20
      %v882 = vpop.permute.xlu0 %881
      %883 = vrot.lane.b32.xlu0 %v515, 20
      %v884 = vpop.permute.xlu0 %883
      %885 = vrot.lane.b32.xlu0 %v517, 20
      %v886 = vpop.permute.xlu0 %885
      %887 = vrot.lane.b32.xlu0 %v520, 20
      %v888 = vpop.permute.xlu0 %887
      %889 = vrot.lane.b32.xlu0 %v522, 20
      %v890 = vpop.permute.xlu0 %889
      %891 = vrot.lane.b32.xlu0 %v525, 20
      %v892 = vpop.permute.xlu0 %891
      %893 = vrot.lane.b32.xlu0 %v527, 20
      %v894 = vpop.permute.xlu0 %893
      %895 = vrot.lane.b32.xlu0 %v530, 20
      %v896 = vpop.permute.xlu0 %895
      %897 = vrot.lane.b32.xlu0 %v532, 20
      %v898 = vpop.permute.xlu0 %897
      %899 = vrot.lane.b32.xlu0 %v535, 20
      %v900 = vpop.permute.xlu0 %899
      %901 = vrot.lane.b32.xlu0 %v537, 20
      %v902 = vpop.permute.xlu0 %901
      %903 = vrot.lane.b32.xlu0 %v540, 20
      %v904 = vpop.permute.xlu0 %903
      %905 = vrot.lane.b32.xlu0 %v542, 20
      %v906 = vpop.permute.xlu0 %905
      %907 = vrot.lane.b32.xlu0 %v545, 20
      %v908 = vpop.permute.xlu0 %907
      %909 = vrot.lane.b32.xlu0 %v547, 20
      %v910 = vpop.permute.xlu0 %909
      %911 = vrot.lane.b32.xlu0 %v550, 20
      %v912 = vpop.permute.xlu0 %911
      %913 = vrot.lane.b32.xlu0 %v552, 20
      %v914 = vpop.permute.xlu0 %913
      %915 = vrot.lane.b32.xlu0 %v555, 20
      %v916 = vpop.permute.xlu0 %915
      %917 = vrot.lane.b32.xlu0 %v557, 20
      %v918 = vpop.permute.xlu0 %917
      %919 = vrot.lane.b32.xlu0 %v856, 20
      %v920 = vpop.permute.xlu0 %919
      %921 = vrot.lane.b32.xlu0 %v858, 20
      %v922 = vpop.permute.xlu0 %921
      %957 = vrot.lane.b32.xlu0 %v204, 24
      %v958 = vpop.permute.xlu0 %957
      %959 = vrot.lane.b32.xlu0 %v205, 24
      %v960 = vpop.permute.xlu0 %959
      %961 = vrot.lane.b32.xlu0 %v207, 24
      %v962 = vpop.permute.xlu0 %961
      %963 = vrot.lane.b32.xlu0 %v208, 24
      %v964 = vpop.permute.xlu0 %963
      %965 = vrot.lane.b32.xlu0 %v210, 24
      %v966 = vpop.permute.xlu0 %965
      %967 = vrot.lane.b32.xlu0 %v211, 24
      %v968 = vpop.permute.xlu0 %967
      %969 = vrot.lane.b32.xlu0 %v213, 24
      %v970 = vpop.permute.xlu0 %969
      %971 = vrot.lane.b32.xlu0 %v214, 24
      %v972 = vpop.permute.xlu0 %971
      %973 = vrot.lane.b32.xlu0 %v216, 24
      %v974 = vpop.permute.xlu0 %973
      %975 = vrot.lane.b32.xlu0 %v217, 24
      %v976 = vpop.permute.xlu0 %975
      %977 = vrot.lane.b32.xlu0 %v219, 24
      %v978 = vpop.permute.xlu0 %977
      %979 = vrot.lane.b32.xlu0 %v220, 24
      %v980 = vpop.permute.xlu0 %979
      %981 = vrot.lane.b32.xlu0 %v222, 24
      %v982 = vpop.permute.xlu0 %981
      %983 = vrot.lane.b32.xlu0 %v223, 24
      %v984 = vpop.permute.xlu0 %983
      %985 = vrot.lane.b32.xlu0 %v225, 24
      %v986 = vpop.permute.xlu0 %985
      %987 = vrot.lane.b32.xlu0 %v226, 24
      %v988 = vpop.permute.xlu0 %987
      %989 = vrot.lane.b32.xlu0 %v228, 24
      %v990 = vpop.permute.xlu0 %989
      %991 = vrot.lane.b32.xlu0 %v229, 24
      %v992 = vpop.permute.xlu0 %991
      %993 = vrot.lane.b32.xlu0 %v231, 24
      %v994 = vpop.permute.xlu0 %993
      %995 = vrot.lane.b32.xlu0 %v232, 24
      %v996 = vpop.permute.xlu0 %995
      %997 = vrot.lane.b32.xlu0 %v234, 24
      %v998 = vpop.permute.xlu0 %997
      %999 = vrot.lane.b32.xlu0 %v235, 24
      %v1000 = vpop.permute.xlu0 %999
      %1001 = vrot.lane.b32.xlu0 %v237, 24
      %v1002 = vpop.permute.xlu0 %1001
      %1003 = vrot.lane.b32.xlu0 %v238, 24
      %v1004 = vpop.permute.xlu0 %1003
      %1005 = vrot.lane.b32.xlu0 %v240, 24
      %v1006 = vpop.permute.xlu0 %1005
      %1007 = vrot.lane.b32.xlu0 %v241, 24
      %v1008 = vpop.permute.xlu0 %1007
      %1009 = vrot.lane.b32.xlu0 %v243, 24
      %v1010 = vpop.permute.xlu0 %1009
      %1011 = vrot.lane.b32.xlu0 %v244, 24
      %v1012 = vpop.permute.xlu0 %1011
      %1013 = vrot.lane.b32.xlu0 %v246, 24
      %v1014 = vpop.permute.xlu0 %1013
      %1015 = vrot.lane.b32.xlu0 %v247, 24
      %v1016 = vpop.permute.xlu0 %1015
      %1017 = vrot.lane.b32.xlu0 %v249, 24
      %v1018 = vpop.permute.xlu0 %1017
      %1019 = vrot.lane.b32.xlu0 %v250, 24
      %v1020 = vpop.permute.xlu0 %1019
      %v1054 = vrot.slane %v249, 1
      %v1055 = vrot.slane %v250, 1
      %v1056 = vsel %vm300, %v1054, %v1055
      %v1057 = vrot.slane %v251, 1
      %v1058 = vsel %vm300, %v1055, %v1057
      %1059 = vrot.lane.b32.xlu0 %v313, 28
      %v1060 = vpop.permute.xlu0 %1059
      %1061 = vrot.lane.b32.xlu0 %v315, 28
      %v1062 = vpop.permute.xlu0 %1061
      %1063 = vrot.lane.b32.xlu0 %v318, 28
      %v1064 = vpop.permute.xlu0 %1063
      %1065 = vrot.lane.b32.xlu0 %v320, 28
      %v1066 = vpop.permute.xlu0 %1065
      %1067 = vrot.lane.b32.xlu0 %v323, 28
      %v1068 = vpop.permute.xlu0 %1067
      %1069 = vrot.lane.b32.xlu0 %v325, 28
      %v1070 = vpop.permute.xlu0 %1069
      %1071 = vrot.lane.b32.xlu0 %v328, 28
      %v1072 = vpop.permute.xlu0 %1071
      %1073 = vrot.lane.b32.xlu0 %v330, 28
      %v1074 = vpop.permute.xlu0 %1073
      %1075 = vrot.lane.b32.xlu0 %v333, 28
      %v1076 = vpop.permute.xlu0 %1075
      %1077 = vrot.lane.b32.xlu0 %v335, 28
      %v1078 = vpop.permute.xlu0 %1077
      %1079 = vrot.lane.b32.xlu0 %v338, 28
      %v1080 = vpop.permute.xlu0 %1079
      %1081 = vrot.lane.b32.xlu0 %v340, 28
      %v1082 = vpop.permute.xlu0 %1081
      %1083 = vrot.lane.b32.xlu0 %v343, 28
      %v1084 = vpop.permute.xlu0 %1083
      %1085 = vrot.lane.b32.xlu0 %v345, 28
      %v1086 = vpop.permute.xlu0 %1085
      %1087 = vrot.lane.b32.xlu0 %v348, 28
      %v1088 = vpop.permute.xlu0 %1087
      %1089 = vrot.lane.b32.xlu0 %v350, 28
      %v1090 = vpop.permute.xlu0 %1089
      %1091 = vrot.lane.b32.xlu0 %v353, 28
      %v1092 = vpop.permute.xlu0 %1091
      %1093 = vrot.lane.b32.xlu0 %v355, 28
      %v1094 = vpop.permute.xlu0 %1093
      %1095 = vrot.lane.b32.xlu0 %v358, 28
      %v1096 = vpop.permute.xlu0 %1095
      %1097 = vrot.lane.b32.xlu0 %v360, 28
      %v1098 = vpop.permute.xlu0 %1097
      %1099 = vrot.lane.b32.xlu0 %v363, 28
      %v1100 = vpop.permute.xlu0 %1099
      %1101 = vrot.lane.b32.xlu0 %v365, 28
      %v1102 = vpop.permute.xlu0 %1101
      %1103 = vrot.lane.b32.xlu0 %v368, 28
      %v1104 = vpop.permute.xlu0 %1103
      %1105 = vrot.lane.b32.xlu0 %v370, 28
      %v1106 = vpop.permute.xlu0 %1105
      %1107 = vrot.lane.b32.xlu0 %v373, 28
      %v1108 = vpop.permute.xlu0 %1107
      %1109 = vrot.lane.b32.xlu0 %v375, 28
      %v1110 = vpop.permute.xlu0 %1109
      %1111 = vrot.lane.b32.xlu0 %v378, 28
      %v1112 = vpop.permute.xlu0 %1111
      %1113 = vrot.lane.b32.xlu0 %v380, 28
      %v1114 = vpop.permute.xlu0 %1113
      %1115 = vrot.lane.b32.xlu0 %v755, 28
      %v1116 = vpop.permute.xlu0 %1115
      %1117 = vrot.lane.b32.xlu0 %v757, 28
      %v1118 = vpop.permute.xlu0 %1117
      %1119 = vrot.lane.b32.xlu0 %v1056, 28
      %v1120 = vpop.permute.xlu0 %1119
      %1121 = vrot.lane.b32.xlu0 %v1058, 28
      %v1122 = vpop.permute.xlu0 %1121
      %v1155 = vrot.slane %v249, 2
      %v1156 = vrot.slane %v250, 2
      %v1157 = vsel %vm477, %v1155, %v1156
      %v1158 = vrot.slane %v251, 2
      %v1159 = vsel %vm477, %v1156, %v1158
      %1160 = vrot.lane.b32.xlu0 %v490, 32
      %v1161 = vpop.permute.xlu0 %1160
      %1162 = vrot.lane.b32.xlu0 %v492, 32
      %v1163 = vpop.permute.xlu0 %1162
      %1164 = vrot.lane.b32.xlu0 %v495, 32
      %v1165 = vpop.permute.xlu0 %1164
      %1166 = vrot.lane.b32.xlu0 %v497, 32
      %v1167 = vpop.permute.xlu0 %1166
      %1168 = vrot.lane.b32.xlu0 %v500, 32
      %v1169 = vpop.permute.xlu0 %1168
      %1170 = vrot.lane.b32.xlu0 %v502, 32
      %v1171 = vpop.permute.xlu0 %1170
      %1172 = vrot.lane.b32.xlu0 %v505, 32
      %v1173 = vpop.permute.xlu0 %1172
      %1174 = vrot.lane.b32.xlu0 %v507, 32
      %v1175 = vpop.permute.xlu0 %1174
      %1176 = vrot.lane.b32.xlu0 %v510, 32
      %v1177 = vpop.permute.xlu0 %1176
      %1178 = vrot.lane.b32.xlu0 %v512, 32
      %v1179 = vpop.permute.xlu0 %1178
      %1180 = vrot.lane.b32.xlu0 %v515, 32
      %v1181 = vpop.permute.xlu0 %1180
      %1182 = vrot.lane.b32.xlu0 %v517, 32
      %v1183 = vpop.permute.xlu0 %1182
      %1184 = vrot.lane.b32.xlu0 %v520, 32
      %v1185 = vpop.permute.xlu0 %1184
      %1186 = vrot.lane.b32.xlu0 %v522, 32
      %v1187 = vpop.permute.xlu0 %1186
      %1188 = vrot.lane.b32.xlu0 %v525, 32
      %v1189 = vpop.permute.xlu0 %1188
      %1190 = vrot.lane.b32.xlu0 %v527, 32
      %v1191 = vpop.permute.xlu0 %1190
      %1192 = vrot.lane.b32.xlu0 %v530, 32
      %v1193 = vpop.permute.xlu0 %1192
      %1194 = vrot.lane.b32.xlu0 %v532, 32
      %v1195 = vpop.permute.xlu0 %1194
      %1196 = vrot.lane.b32.xlu0 %v535, 32
      %v1197 = vpop.permute.xlu0 %1196
      %1198 = vrot.lane.b32.xlu0 %v537, 32
      %v1199 = vpop.permute.xlu0 %1198
      %1200 = vrot.lane.b32.xlu0 %v540, 32
      %v1201 = vpop.permute.xlu0 %1200
      %1202 = vrot.lane.b32.xlu0 %v542, 32
      %v1203 = vpop.permute.xlu0 %1202
      %1204 = vrot.lane.b32.xlu0 %v545, 32
      %v1205 = vpop.permute.xlu0 %1204
      %1206 = vrot.lane.b32.xlu0 %v547, 32
      %v1207 = vpop.permute.xlu0 %1206
      %1208 = vrot.lane.b32.xlu0 %v550, 32
      %v1209 = vpop.permute.xlu0 %1208
      %1210 = vrot.lane.b32.xlu0 %v552, 32
      %v1211 = vpop.permute.xlu0 %1210
      %1212 = vrot.lane.b32.xlu0 %v555, 32
      %v1213 = vpop.permute.xlu0 %1212
      %1214 = vrot.lane.b32.xlu0 %v557, 32
      %v1215 = vpop.permute.xlu0 %1214
      %1216 = vrot.lane.b32.xlu0 %v856, 32
      %v1217 = vpop.permute.xlu0 %1216
      %1218 = vrot.lane.b32.xlu0 %v858, 32
      %v1219 = vpop.permute.xlu0 %1218
      %1220 = vrot.lane.b32.xlu0 %v1157, 32
      %v1221 = vpop.permute.xlu0 %1220
      %1222 = vrot.lane.b32.xlu0 %v1159, 32
      %v1223 = vpop.permute.xlu0 %1222
      %vm1256 = vcmask 31744
      %v1257 = vsel %vm1256, %v198, %v382
      %v1258 = vsel %vm1256, %v199, %v384
      %v1259 = vsel %vm1256, %v201, %v386
      %v1260 = vsel %vm1256, %v202, %v388
      %v1261 = vsel %vm1256, %v204, %v390
      %v1262 = vsel %vm1256, %v205, %v392
      %v1263 = vsel %vm1256, %v207, %v394
      %v1264 = vsel %vm1256, %v208, %v396
      %v1265 = vsel %vm1256, %v210, %v398
      %v1266 = vsel %vm1256, %v211, %v400
      %v1267 = vsel %vm1256, %v213, %v402
      %v1268 = vsel %vm1256, %v214, %v404
      %v1269 = vsel %vm1256, %v216, %v406
      %v1270 = vsel %vm1256, %v217, %v408
      %v1271 = vsel %vm1256, %v219, %v410
      %v1272 = vsel %vm1256, %v220, %v412
      %v1273 = vsel %vm1256, %v222, %v414
      %v1274 = vsel %vm1256, %v223, %v416
      %v1275 = vsel %vm1256, %v225, %v418
      %v1276 = vsel %vm1256, %v226, %v420
      %v1277 = vsel %vm1256, %v228, %v422
      %v1278 = vsel %vm1256, %v229, %v424
      %v1279 = vsel %vm1256, %v231, %v426
      %v1280 = vsel %vm1256, %v232, %v428
      %v1281 = vsel %vm1256, %v234, %v430
      %v1282 = vsel %vm1256, %v235, %v432
      %v1283 = vsel %vm1256, %v237, %v434
      %v1284 = vsel %vm1256, %v238, %v436
      %v1285 = vsel %vm1256, %v240, %v438
      %v1286 = vsel %vm1256, %v241, %v440
      %v1287 = vsel %vm1256, %v243, %v442
      %v1288 = vsel %vm1256, %v244, %v444
      %vm1289 = vcmask 64512
      %v1290 = vsel %vm1289, %v1257, %v559
      %v1291 = vsel %vm1289, %v1258, %v561
      %v1292 = vsel %vm1289, %v1259, %v563
      %v1293 = vsel %vm1289, %v1260, %v565
      %v1294 = vsel %vm1289, %v1261, %v567
      %v1295 = vsel %vm1289, %v1262, %v569
      %v1296 = vsel %vm1289, %v1263, %v571
      %v1297 = vsel %vm1289, %v1264, %v573
      %v1298 = vsel %vm1289, %v1265, %v575
      %v1299 = vsel %vm1289, %v1266, %v577
      %v1300 = vsel %vm1289, %v1267, %v579
      %v1301 = vsel %vm1289, %v1268, %v581
      %v1302 = vsel %vm1289, %v1269, %v583
      %v1303 = vsel %vm1289, %v1270, %v585
      %v1304 = vsel %vm1289, %v1271, %v587
      %v1305 = vsel %vm1289, %v1272, %v589
      %v1306 = vsel %vm1289, %v1273, %v591
      %v1307 = vsel %vm1289, %v1274, %v593
      %v1308 = vsel %vm1289, %v1275, %v595
      %v1309 = vsel %vm1289, %v1276, %v597
      %v1310 = vsel %vm1289, %v1277, %v599
      %v1311 = vsel %vm1289, %v1278, %v601
      %v1312 = vsel %vm1289, %v1279, %v603
      %v1313 = vsel %vm1289, %v1280, %v605
      %v1314 = vsel %vm1289, %v1281, %v607
      %v1315 = vsel %vm1289, %v1282, %v609
      %v1316 = vsel %vm1289, %v1283, %v611
      %v1317 = vsel %vm1289, %v1284, %v613
      %v1318 = vsel %vm1289, %v1285, %v615
      %v1319 = vsel %vm1289, %v1286, %v617
      %v1320 = vsel %vm1289, %v1287, %v619
      %v1321 = vsel %vm1289, %v1288, %v621
      %vm1322 = vcmask 97280
      %v1323 = vsel %vm1322, %v1290, %v657
      %v1324 = vsel %vm1322, %v1291, %v659
      %v1325 = vsel %vm1322, %v1292, %v661
      %v1326 = vsel %vm1322, %v1293, %v663
      %v1327 = vsel %vm1322, %v1294, %v665
      %v1328 = vsel %vm1322, %v1295, %v667
      %v1329 = vsel %vm1322, %v1296, %v669
      %v1330 = vsel %vm1322, %v1297, %v671
      %v1331 = vsel %vm1322, %v1298, %v673
      %v1332 = vsel %vm1322, %v1299, %v675
      %v1333 = vsel %vm1322, %v1300, %v677
      %v1334 = vsel %vm1322, %v1301, %v679
      %v1335 = vsel %vm1322, %v1302, %v681
      %v1336 = vsel %vm1322, %v1303, %v683
      %v1337 = vsel %vm1322, %v1304, %v685
      %v1338 = vsel %vm1322, %v1305, %v687
      %v1339 = vsel %vm1322, %v1306, %v689
      %v1340 = vsel %vm1322, %v1307, %v691
      %v1341 = vsel %vm1322, %v1308, %v693
      %v1342 = vsel %vm1322, %v1309, %v695
      %v1343 = vsel %vm1322, %v1310, %v697
      %v1344 = vsel %vm1322, %v1311, %v699
      %v1345 = vsel %vm1322, %v1312, %v701
      %v1346 = vsel %vm1322, %v1313, %v703
      %v1347 = vsel %vm1322, %v1314, %v705
      %v1348 = vsel %vm1322, %v1315, %v707
      %v1349 = vsel %vm1322, %v1316, %v709
      %v1350 = vsel %vm1322, %v1317, %v711
      %v1351 = vsel %vm1322, %v1318, %v713
      %v1352 = vsel %vm1322, %v1319, %v715
      %v1353 = vsel %vm1322, %v1320, %v717
      %v1354 = vsel %vm1322, %v1321, %v719
      %vm1355 = vcmask 130048
      %v1356 = vsel %vm1355, %v1323, %v759
      %v1357 = vsel %vm1355, %v1324, %v761
      %v1358 = vsel %vm1355, %v1325, %v763
      %v1359 = vsel %vm1355, %v1326, %v765
      %v1360 = vsel %vm1355, %v1327, %v767
      %v1361 = vsel %vm1355, %v1328, %v769
      %v1362 = vsel %vm1355, %v1329, %v771
      %v1363 = vsel %vm1355, %v1330, %v773
      %v1364 = vsel %vm1355, %v1331, %v775
      %v1365 = vsel %vm1355, %v1332, %v777
      %v1366 = vsel %vm1355, %v1333, %v779
      %v1367 = vsel %vm1355, %v1334, %v781
      %v1368 = vsel %vm1355, %v1335, %v783
      %v1369 = vsel %vm1355, %v1336, %v785
      %v1370 = vsel %vm1355, %v1337, %v787
      %v1371 = vsel %vm1355, %v1338, %v789
      %v1372 = vsel %vm1355, %v1339, %v791
      %v1373 = vsel %vm1355, %v1340, %v793
      %v1374 = vsel %vm1355, %v1341, %v795
      %v1375 = vsel %vm1355, %v1342, %v797
      %v1376 = vsel %vm1355, %v1343, %v799
      %v1377 = vsel %vm1355, %v1344, %v801
      %v1378 = vsel %vm1355, %v1345, %v803
      %v1379 = vsel %vm1355, %v1346, %v805
      %v1380 = vsel %vm1355, %v1347, %v807
      %v1381 = vsel %vm1355, %v1348, %v809
      %v1382 = vsel %vm1355, %v1349, %v811
      %v1383 = vsel %vm1355, %v1350, %v813
      %v1384 = vsel %vm1355, %v1351, %v815
      %v1385 = vsel %vm1355, %v1352, %v817
      %v1386 = vsel %vm1355, %v1353, %v819
      %v1387 = vsel %vm1355, %v1354, %v821
      %vm1388 = vcmask 162816
      %v1389 = vsel %vm1388, %v1356, %v860
      %v1390 = vsel %vm1388, %v1357, %v862
      %v1391 = vsel %vm1388, %v1358, %v864
      %v1392 = vsel %vm1388, %v1359, %v866
      %v1393 = vsel %vm1388, %v1360, %v868
      %v1394 = vsel %vm1388, %v1361, %v870
      %v1395 = vsel %vm1388, %v1362, %v872
      %v1396 = vsel %vm1388, %v1363, %v874
      %v1397 = vsel %vm1388, %v1364, %v876
      %v1398 = vsel %vm1388, %v1365, %v878
      %v1399 = vsel %vm1388, %v1366, %v880
      %v1400 = vsel %vm1388, %v1367, %v882
      %v1401 = vsel %vm1388, %v1368, %v884
      %v1402 = vsel %vm1388, %v1369, %v886
      %v1403 = vsel %vm1388, %v1370, %v888
      %v1404 = vsel %vm1388, %v1371, %v890
      %v1405 = vsel %vm1388, %v1372, %v892
      %v1406 = vsel %vm1388, %v1373, %v894
      %v1407 = vsel %vm1388, %v1374, %v896
      %v1408 = vsel %vm1388, %v1375, %v898
      %v1409 = vsel %vm1388, %v1376, %v900
      %v1410 = vsel %vm1388, %v1377, %v902
      %v1411 = vsel %vm1388, %v1378, %v904
      %v1412 = vsel %vm1388, %v1379, %v906
      %v1413 = vsel %vm1388, %v1380, %v908
      %v1414 = vsel %vm1388, %v1381, %v910
      %v1415 = vsel %vm1388, %v1382, %v912
      %v1416 = vsel %vm1388, %v1383, %v914
      %v1417 = vsel %vm1388, %v1384, %v916
      %v1418 = vsel %vm1388, %v1385, %v918
      %v1419 = vsel %vm1388, %v1386, %v920
      %v1420 = vsel %vm1388, %v1387, %v922
      %vm1421 = vcmask 195584
      %v1422 = vsel %vm1421, %v1389, %v958
      %v1423 = vsel %vm1421, %v1390, %v960
      %v1424 = vsel %vm1421, %v1391, %v962
      %v1425 = vsel %vm1421, %v1392, %v964
      %v1426 = vsel %vm1421, %v1393, %v966
      %v1427 = vsel %vm1421, %v1394, %v968
      %v1428 = vsel %vm1421, %v1395, %v970
      %v1429 = vsel %vm1421, %v1396, %v972
      %v1430 = vsel %vm1421, %v1397, %v974
      %v1431 = vsel %vm1421, %v1398, %v976
      %v1432 = vsel %vm1421, %v1399, %v978
      %v1433 = vsel %vm1421, %v1400, %v980
      %v1434 = vsel %vm1421, %v1401, %v982
      %v1435 = vsel %vm1421, %v1402, %v984
      %v1436 = vsel %vm1421, %v1403, %v986
      %v1437 = vsel %vm1421, %v1404, %v988
      %v1438 = vsel %vm1421, %v1405, %v990
      %v1439 = vsel %vm1421, %v1406, %v992
      %v1440 = vsel %vm1421, %v1407, %v994
      %v1441 = vsel %vm1421, %v1408, %v996
      %v1442 = vsel %vm1421, %v1409, %v998
      %v1443 = vsel %vm1421, %v1410, %v1000
      %v1444 = vsel %vm1421, %v1411, %v1002
      %v1445 = vsel %vm1421, %v1412, %v1004
      %v1446 = vsel %vm1421, %v1413, %v1006
      %v1447 = vsel %vm1421, %v1414, %v1008
      %v1448 = vsel %vm1421, %v1415, %v1010
      %v1449 = vsel %vm1421, %v1416, %v1012
      %v1450 = vsel %vm1421, %v1417, %v1014
      %v1451 = vsel %vm1421, %v1418, %v1016
      %v1452 = vsel %vm1421, %v1419, %v1018
      %v1453 = vsel %vm1421, %v1420, %v1020
      %vm1454 = vcmask 228352
      %v1455 = vsel %vm1454, %v1422, %v1060
      %v1456 = vsel %vm1454, %v1423, %v1062
      %v1457 = vsel %vm1454, %v1424, %v1064
      %v1458 = vsel %vm1454, %v1425, %v1066
      %v1459 = vsel %vm1454, %v1426, %v1068
      %v1460 = vsel %vm1454, %v1427, %v1070
      %v1461 = vsel %vm1454, %v1428, %v1072
      %v1462 = vsel %vm1454, %v1429, %v1074
      %v1463 = vsel %vm1454, %v1430, %v1076
      %v1464 = vsel %vm1454, %v1431, %v1078
      %v1465 = vsel %vm1454, %v1432, %v1080
      %v1466 = vsel %vm1454, %v1433, %v1082
      %v1467 = vsel %vm1454, %v1434, %v1084
      %v1468 = vsel %vm1454, %v1435, %v1086
      %v1469 = vsel %vm1454, %v1436, %v1088
      %v1470 = vsel %vm1454, %v1437, %v1090
      %v1471 = vsel %vm1454, %v1438, %v1092
      %v1472 = vsel %vm1454, %v1439, %v1094
      %v1473 = vsel %vm1454, %v1440, %v1096
      %v1474 = vsel %vm1454, %v1441, %v1098
      %v1475 = vsel %vm1454, %v1442, %v1100
      %v1476 = vsel %vm1454, %v1443, %v1102
      %v1477 = vsel %vm1454, %v1444, %v1104
      %v1478 = vsel %vm1454, %v1445, %v1106
      %v1479 = vsel %vm1454, %v1446, %v1108
      %v1480 = vsel %vm1454, %v1447, %v1110
      %v1481 = vsel %vm1454, %v1448, %v1112
      %v1482 = vsel %vm1454, %v1449, %v1114
      %v1483 = vsel %vm1454, %v1450, %v1116
      %v1484 = vsel %vm1454, %v1451, %v1118
      %v1485 = vsel %vm1454, %v1452, %v1120
      %v1486 = vsel %vm1454, %v1453, %v1122
      %vm1487 = vcmask 261120
      %v1488 = vsel %vm1487, %v1455, %v1161
      %v1489 = vsel %vm1487, %v1456, %v1163
      %v1490 = vsel %vm1487, %v1457, %v1165
      %v1491 = vsel %vm1487, %v1458, %v1167
      %v1492 = vsel %vm1487, %v1459, %v1169
      %v1493 = vsel %vm1487, %v1460, %v1171
      %v1494 = vsel %vm1487, %v1461, %v1173
      %v1495 = vsel %vm1487, %v1462, %v1175
      %v1496 = vsel %vm1487, %v1463, %v1177
      %v1497 = vsel %vm1487, %v1464, %v1179
      %v1498 = vsel %vm1487, %v1465, %v1181
      %v1499 = vsel %vm1487, %v1466, %v1183
      %v1500 = vsel %vm1487, %v1467, %v1185
      %v1501 = vsel %vm1487, %v1468, %v1187
      %v1502 = vsel %vm1487, %v1469, %v1189
      %v1503 = vsel %vm1487, %v1470, %v1191
      %v1504 = vsel %vm1487, %v1471, %v1193
      %v1505 = vsel %vm1487, %v1472, %v1195
      %v1506 = vsel %vm1487, %v1473, %v1197
      %v1507 = vsel %vm1487, %v1474, %v1199
      %v1508 = vsel %vm1487, %v1475, %v1201
      %v1509 = vsel %vm1487, %v1476, %v1203
      %v1510 = vsel %vm1487, %v1477, %v1205
      %v1511 = vsel %vm1487, %v1478, %v1207
      %v1512 = vsel %vm1487, %v1479, %v1209
      %v1513 = vsel %vm1487, %v1480, %v1211
      %v1514 = vsel %vm1487, %v1481, %v1213
      %v1515 = vsel %vm1487, %v1482, %v1215
      %v1516 = vsel %vm1487, %v1483, %v1217
      %v1517 = vsel %vm1487, %v1484, %v1219
      %v1518 = vsel %vm1487, %v1485, %v1221
      %v1519 = vsel %vm1487, %v1486, %v1223
      %v1520 = vld [vmem:[%s1] sm:$0xff]
      %v1521 = vld [vmem:[%s1 + $0x8] sm:$0xff]
      %v1522 = vld [vmem:[%s1 + $0x10] sm:$0xff]
      %v1523 = vld [vmem:[%s1 + $0x18] sm:$0xff]
      %v1524 = vld [vmem:[%s1 + $0x20] sm:$0xf]
      %v1525 = vld [vmem:[%s2] sm:$0x1]
      %v1527 = vlaneseq
      %v1528 = vshrl.u32 %v1527, 7
      %v1529 = vsub.s32 0, %v1528
      %v1530 = vrot.slane %v1525, %v1529
      %vm1532 = vcmask 293888
      %v1534 = vsel %vm1532, %v1488, 0
      %v1537 = vsel %vm1532, %v1489, 0
      %v1540 = vsel %vm1532, %v1490, 0
      %v1543 = vsel %vm1532, %v1491, 0
      %v1546 = vsel %vm1532, %v1492, 0
      %v1549 = vsel %vm1532, %v1493, 0
      %v1552 = vsel %vm1532, %v1494, 0
      %v1555 = vsel %vm1532, %v1495, 0
      %v1558 = vsel %vm1532, %v1496, 0
      %v1561 = vsel %vm1532, %v1497, 0
      %v1564 = vsel %vm1532, %v1498, 0
      %v1567 = vsel %vm1532, %v1499, 0
      %v1570 = vsel %vm1532, %v1500, 0
      %v1573 = vsel %vm1532, %v1501, 0
      %v1576 = vsel %vm1532, %v1502, 0
      %v1579 = vsel %vm1532, %v1503, 0
      %v1582 = vsel %vm1532, %v1504, 0
      %v1585 = vsel %vm1532, %v1505, 0
      %v1588 = vsel %vm1532, %v1506, 0
      %v1591 = vsel %vm1532, %v1507, 0
      %v1594 = vsel %vm1532, %v1508, 0
      %v1597 = vsel %vm1532, %v1509, 0
      %v1600 = vsel %vm1532, %v1510, 0
      %v1603 = vsel %vm1532, %v1511, 0
      %v1606 = vsel %vm1532, %v1512, 0
      %v1609 = vsel %vm1532, %v1513, 0
      %v1612 = vsel %vm1532, %v1514, 0
      %v1615 = vsel %vm1532, %v1515, 0
      %v1618 = vsel %vm1532, %v1516, 0
      %v1621 = vsel %vm1532, %v1517, 0
      %v1624 = vsel %vm1532, %v1518, 0
      %v1627 = vsel %vm1532, %v1519, 0
      %vm1629 = vcmask 1043456
      %v1631 = vsel %vm1629, %v1524, 0
      %1633 = vmatprep.subr.mxu0 0.0
      %1634 = vmatpush1.msra.mxu0 0.0
      %1635 = vmatprep.subr.mxu0 0.0
      %1636 = vmatpush1.msra.mxu0 0.0
      %1637 = vmatprep.subr.mxu0 0.0
      %1638 = vmatpush1.msra.mxu0 0.0
      %1639 = vmatprep.subr.mxu0 0.0
      %1640 = vmatpush1.msra.mxu0 0.0
      %1641 = vmatprep.subr.mxu0 0.0
      %1642 = vmatpush1.msra.mxu0 0.0
      %1643 = vmatprep.subr.mxu0 0.0
      %1644 = vmatpush1.msra.mxu0 0.0
      %1645 = vmatprep.subr.mxu0 0.0
      %1646 = vmatpush1.msra.mxu0 0.0
      %1647 = vmatprep.subr.mxu0 0.0
      %1648 = vmatpush1.msra.mxu0 0.0
      %1649 = vmatprep.subr.mxu0 0.0
      %1650 = vmatpush1.msra.mxu0 0.0
      %1651 = vmatprep.subr.mxu0 0.0
      %1652 = vmatpush1.msra.mxu0 0.0
      %1653 = vmatprep.subr.mxu0 0.0
      %1654 = vmatpush1.msra.mxu0 0.0
      %1655 = vmatprep.subr.mxu0 0.0
      %1656 = vmatpush1.msra.mxu0 %v1631
      %1657 = vmatprep.subr.mxu0 0.0
      %1658 = vmatpush1.msra.mxu0 %v1523
      %1659 = vmatprep.subr.mxu0 0.0
      %1660 = vmatpush1.msra.mxu0 %v1522
      %1661 = vmatprep.subr.mxu0 0.0
      %1662 = vmatpush1.msra.mxu0 %v1521
      %1663 = vmatprep.subr.mxu0 0.0
      %1664 = vmatpush1.msra.mxu0 %v1520
      %1665 = vmatprep.subr.mxu0 0.0
      %1666 = vmatpush2.msra.mxu0 0.0
      %1667 = vmatprep.subr.mxu0 0.0
      %1668 = vmatpush2.msra.mxu0 0.0
      %1669 = vmatprep.subr.mxu0 0.0
      %1670 = vmatpush2.msra.mxu0 0.0
      %1671 = vmatprep.subr.mxu0 0.0
      %1672 = vmatpush2.msra.mxu0 0.0
      %1673 = vmatprep.subr.mxu0 0.0
      %1674 = vmatpush2.msra.mxu0 0.0
      %1675 = vmatprep.subr.mxu0 0.0
      %1676 = vmatpush2.msra.mxu0 0.0
      %1677 = vmatprep.subr.mxu0 0.0
      %1678 = vmatpush2.msra.mxu0 0.0
      %1679 = vmatprep.subr.mxu0 0.0
      %1680 = vmatpush2.msra.mxu0 0.0
      %1681 = vmatprep.subr.mxu0 0.0
      %1682 = vmatpush2.msra.mxu0 0.0
      %1683 = vmatprep.subr.mxu0 0.0
      %1684 = vmatpush2.msra.mxu0 0.0
      %1685 = vmatprep.subr.mxu0 0.0
      %1686 = vmatpush2.msra.mxu0 0.0
      %1687 = vmatprep.subr.mxu0 0.0
      %1688 = vmatpush2.msra.mxu0 0.0
      %1689 = vmatprep.subr.mxu0 0.0
      %1690 = vmatpush2.msra.mxu0 0.0
      %1691 = vmatprep.subr.mxu0 0.0
      %1692 = vmatpush2.msra.mxu0 0.0
      %1693 = vmatprep.subr.mxu0 0.0
      %1694 = vmatpush2.msra.mxu0 0.0
      %1695 = vmatprep.subr.mxu0 0.0
      %1696 = vmatpush2.msra.mxu0 0.0
      %1697 = vmatprep.mubr.f32.mxu0 0.0
      %1698 = vmatmul.mubr.f32.gmra.mxu0 %v1534
      %v1699 = vpop.f32.mrf.mxu0
      %v1700 = vadd.f32 %v1530, %v1699
      %v1701 = vpop.f32.mrf.mxu0
      %1702 = vmatprep.mubr.f32.mxu0 0.0
      %1703 = vmatmul.mubr.f32.gmra.mxu0 %v1537
      %v1704 = vpop.f32.mrf.mxu0
      %v1705 = vadd.f32 %v1530, %v1704
      %v1706 = vpop.f32.mrf.mxu0
      %1707 = vmatprep.mubr.f32.mxu0 0.0
      %1708 = vmatmul.mubr.f32.gmra.mxu0 %v1540
      %v1709 = vpop.f32.mrf.mxu0
      %v1710 = vadd.f32 %v1530, %v1709
      %v1711 = vpop.f32.mrf.mxu0
      %1712 = vmatprep.mubr.f32.mxu0 0.0
      %1713 = vmatmul.mubr.f32.gmra.mxu0 %v1543
      %v1714 = vpop.f32.mrf.mxu0
      %v1715 = vadd.f32 %v1530, %v1714
      %v1716 = vpop.f32.mrf.mxu0
      %1717 = vmatprep.mubr.f32.mxu0 0.0
      %1718 = vmatmul.mubr.f32.gmra.mxu0 %v1546
      %v1719 = vpop.f32.mrf.mxu0
      %v1720 = vadd.f32 %v1530, %v1719
      %v1721 = vpop.f32.mrf.mxu0
      %1722 = vmatprep.mubr.f32.mxu0 0.0
      %1723 = vmatmul.mubr.f32.gmra.mxu0 %v1549
      %v1724 = vpop.f32.mrf.mxu0
      %v1725 = vadd.f32 %v1530, %v1724
      %v1726 = vpop.f32.mrf.mxu0
      %1727 = vmatprep.mubr.f32.mxu0 0.0
      %1728 = vmatmul.mubr.f32.gmra.mxu0 %v1552
      %v1729 = vpop.f32.mrf.mxu0
      %v1730 = vadd.f32 %v1530, %v1729
      %v1731 = vpop.f32.mrf.mxu0
      %1732 = vmatprep.mubr.f32.mxu0 0.0
      %1733 = vmatmul.mubr.f32.gmra.mxu0 %v1555
      %v1734 = vpop.f32.mrf.mxu0
      %v1735 = vadd.f32 %v1530, %v1734
      %v1736 = vpop.f32.mrf.mxu0
      %1737 = vmatprep.mubr.f32.mxu0 0.0
      %1738 = vmatmul.mubr.f32.gmra.mxu0 %v1558
      %v1739 = vpop.f32.mrf.mxu0
      %v1740 = vadd.f32 %v1530, %v1739
      %v1741 = vpop.f32.mrf.mxu0
      %1742 = vmatprep.mubr.f32.mxu0 0.0
      %1743 = vmatmul.mubr.f32.gmra.mxu0 %v1561
      %v1744 = vpop.f32.mrf.mxu0
      %v1745 = vadd.f32 %v1530, %v1744
      %v1746 = vpop.f32.mrf.mxu0
      %1747 = vmatprep.mubr.f32.mxu0 0.0
      %1748 = vmatmul.mubr.f32.gmra.mxu0 %v1564
      %v1749 = vpop.f32.mrf.mxu0
      %v1750 = vadd.f32 %v1530, %v1749
      %v1751 = vpop.f32.mrf.mxu0
      %1752 = vmatprep.mubr.f32.mxu0 0.0
      %1753 = vmatmul.mubr.f32.gmra.mxu0 %v1567
      %v1754 = vpop.f32.mrf.mxu0
      %v1755 = vadd.f32 %v1530, %v1754
      %v1756 = vpop.f32.mrf.mxu0
      %1757 = vmatprep.mubr.f32.mxu0 0.0
      %1758 = vmatmul.mubr.f32.gmra.mxu0 %v1570
      %v1759 = vpop.f32.mrf.mxu0
      %v1760 = vadd.f32 %v1530, %v1759
      %v1761 = vpop.f32.mrf.mxu0
      %1762 = vmatprep.mubr.f32.mxu0 0.0
      %1763 = vmatmul.mubr.f32.gmra.mxu0 %v1573
      %v1764 = vpop.f32.mrf.mxu0
      %v1765 = vadd.f32 %v1530, %v1764
      %v1766 = vpop.f32.mrf.mxu0
      %1767 = vmatprep.mubr.f32.mxu0 0.0
      %1768 = vmatmul.mubr.f32.gmra.mxu0 %v1576
      %v1769 = vpop.f32.mrf.mxu0
      %v1770 = vadd.f32 %v1530, %v1769
      %v1771 = vpop.f32.mrf.mxu0
      %1772 = vmatprep.mubr.f32.mxu0 0.0
      %1773 = vmatmul.mubr.f32.gmra.mxu0 %v1579
      %v1774 = vpop.f32.mrf.mxu0
      %v1775 = vadd.f32 %v1530, %v1774
      %v1776 = vpop.f32.mrf.mxu0
      %1777 = vmatprep.mubr.f32.mxu0 0.0
      %1778 = vmatmul.mubr.f32.gmra.mxu0 %v1582
      %v1779 = vpop.f32.mrf.mxu0
      %v1780 = vadd.f32 %v1530, %v1779
      %v1781 = vpop.f32.mrf.mxu0
      %1782 = vmatprep.mubr.f32.mxu0 0.0
      %1783 = vmatmul.mubr.f32.gmra.mxu0 %v1585
      %v1784 = vpop.f32.mrf.mxu0
      %v1785 = vadd.f32 %v1530, %v1784
      %v1786 = vpop.f32.mrf.mxu0
      %1787 = vmatprep.mubr.f32.mxu0 0.0
      %1788 = vmatmul.mubr.f32.gmra.mxu0 %v1588
      %v1789 = vpop.f32.mrf.mxu0
      %v1790 = vadd.f32 %v1530, %v1789
      %v1791 = vpop.f32.mrf.mxu0
      %1792 = vmatprep.mubr.f32.mxu0 0.0
      %1793 = vmatmul.mubr.f32.gmra.mxu0 %v1591
      %v1794 = vpop.f32.mrf.mxu0
      %v1795 = vadd.f32 %v1530, %v1794
      %v1796 = vpop.f32.mrf.mxu0
      %1797 = vmatprep.mubr.f32.mxu0 0.0
      %1798 = vmatmul.mubr.f32.gmra.mxu0 %v1594
      %v1799 = vpop.f32.mrf.mxu0
      %v1800 = vadd.f32 %v1530, %v1799
      %v1801 = vpop.f32.mrf.mxu0
      %1802 = vmatprep.mubr.f32.mxu0 0.0
      %1803 = vmatmul.mubr.f32.gmra.mxu0 %v1597
      %v1804 = vpop.f32.mrf.mxu0
      %v1805 = vadd.f32 %v1530, %v1804
      %v1806 = vpop.f32.mrf.mxu0
      %1807 = vmatprep.mubr.f32.mxu0 0.0
      %1808 = vmatmul.mubr.f32.gmra.mxu0 %v1600
      %v1809 = vpop.f32.mrf.mxu0
      %v1810 = vadd.f32 %v1530, %v1809
      %v1811 = vpop.f32.mrf.mxu0
      %1812 = vmatprep.mubr.f32.mxu0 0.0
      %1813 = vmatmul.mubr.f32.gmra.mxu0 %v1603
      %v1814 = vpop.f32.mrf.mxu0
      %v1815 = vadd.f32 %v1530, %v1814
      %v1816 = vpop.f32.mrf.mxu0
      %1817 = vmatprep.mubr.f32.mxu0 0.0
      %1818 = vmatmul.mubr.f32.gmra.mxu0 %v1606
      %v1819 = vpop.f32.mrf.mxu0
      %v1820 = vadd.f32 %v1530, %v1819
      %v1821 = vpop.f32.mrf.mxu0
      %1822 = vmatprep.mubr.f32.mxu0 0.0
      %1823 = vmatmul.mubr.f32.gmra.mxu0 %v1609
      %v1824 = vpop.f32.mrf.mxu0
      %v1825 = vadd.f32 %v1530, %v1824
      %v1826 = vpop.f32.mrf.mxu0
      %1827 = vmatprep.mubr.f32.mxu0 0.0
      %1828 = vmatmul.mubr.f32.gmra.mxu0 %v1612
      %v1829 = vpop.f32.mrf.mxu0
      %v1830 = vadd.f32 %v1530, %v1829
      %v1831 = vpop.f32.mrf.mxu0
      %1832 = vmatprep.mubr.f32.mxu0 0.0
      %1833 = vmatmul.mubr.f32.gmra.mxu0 %v1615
      %v1834 = vpop.f32.mrf.mxu0
      %v1835 = vadd.f32 %v1530, %v1834
      %v1836 = vpop.f32.mrf.mxu0
      %1837 = vmatprep.mubr.f32.mxu0 0.0
      %1838 = vmatmul.mubr.f32.gmra.mxu0 %v1618
      %v1839 = vpop.f32.mrf.mxu0
      %v1840 = vadd.f32 %v1530, %v1839
      %v1841 = vpop.f32.mrf.mxu0
      %1842 = vmatprep.mubr.f32.mxu0 0.0
      %1843 = vmatmul.mubr.f32.gmra.mxu0 %v1621
      %v1844 = vpop.f32.mrf.mxu0
      %v1845 = vadd.f32 %v1530, %v1844
      %v1846 = vpop.f32.mrf.mxu0
      %1847 = vmatprep.mubr.f32.mxu0 0.0
      %1848 = vmatmul.mubr.f32.gmra.mxu0 %v1624
      %v1849 = vpop.f32.mrf.mxu0
      %v1850 = vadd.f32 %v1530, %v1849
      %v1851 = vpop.f32.mrf.mxu0
      %1852 = vmatprep.mubr.f32.mxu0 0.0
      %1853 = vmatmul.mubr.f32.gmra.mxu0 %v1627
      %v1854 = vpop.f32.mrf.mxu0
      %v1855 = vadd.f32 %v1530, %v1854
      %v1856 = vpop.f32.mrf.mxu0
      %1857 = vdwg.mxu0
      %1858 = vst.msk [vmem:[#allocation2] sm:$0xff] %vm1289, 0.0
      %1859 = vst.msk [vmem:[#allocation2 + $0x8] sm:$0xff] %vm1289, 0.0
      %vm1860 = vcmask 58368
      %1861 = vst.msk [vmem:[#allocation2 + $0x10] sm:$0x3] %vm1860, 0.0
      %1862 = vst.msk [vmem:[#allocation2 + $0x18] sm:$0xff] %vm1289, 0.0
      %1863 = vst.msk [vmem:[#allocation2 + $0x20] sm:$0xff] %vm1289, 0.0
      %1864 = vst.msk [vmem:[#allocation2 + $0x28] sm:$0x3] %vm1860, 0.0
      %1865 = vst.msk [vmem:[#allocation2 + $0x30] sm:$0xff] %vm1289, 0.0
      %1866 = vst.msk [vmem:[#allocation2 + $0x38] sm:$0xff] %vm1289, 0.0
      %1867 = vst.msk [vmem:[#allocation2 + $0x40] sm:$0x3] %vm1860, 0.0
      %1868 = vst.msk [vmem:[#allocation2 + $0x48] sm:$0xff] %vm1289, 0.0
      %1869 = vst.msk [vmem:[#allocation2 + $0x50] sm:$0xff] %vm1289, 0.0
      %1870 = vst.msk [vmem:[#allocation2 + $0x58] sm:$0x3] %vm1860, 0.0
      %1871 = vst.msk [vmem:[#allocation2 + $0x60] sm:$0xff] %vm1289, 0.0
      %1872 = vst.msk [vmem:[#allocation2 + $0x68] sm:$0xff] %vm1289, 0.0
      %1873 = vst.msk [vmem:[#allocation2 + $0x70] sm:$0x3] %vm1860, 0.0
      %1874 = vst.msk [vmem:[#allocation2 + $0x78] sm:$0xff] %vm1289, 0.0
      %1875 = vst.msk [vmem:[#allocation2 + $0x80] sm:$0xff] %vm1289, 0.0
      %1876 = vst.msk [vmem:[#allocation2 + $0x88] sm:$0x3] %vm1860, 0.0
      %1877 = vst.msk [vmem:[#allocation2 + $0x90] sm:$0xff] %vm1289, 0.0
      %1878 = vst.msk [vmem:[#allocation2 + $0x98] sm:$0xff] %vm1289, 0.0
      %1879 = vst.msk [vmem:[#allocation2 + $0xa0] sm:$0x3] %vm1860, 0.0
      %1880 = vst.msk [vmem:[#allocation2 + $0xa8] sm:$0xff] %vm1289, 0.0
      %1881 = vst.msk [vmem:[#allocation2 + $0xb0] sm:$0xff] %vm1289, 0.0
      %1882 = vst.msk [vmem:[#allocation2 + $0xb8] sm:$0x3] %vm1860, 0.0
      %1883 = vst.msk [vmem:[#allocation2 + $0xc0] sm:$0xff] %vm1289, 0.0
      %1884 = vst.msk [vmem:[#allocation2 + $0xc8] sm:$0xff] %vm1289, 0.0
      %1885 = vst.msk [vmem:[#allocation2 + $0xd0] sm:$0x3] %vm1860, 0.0
      %1886 = vst.msk [vmem:[#allocation2 + $0xd8] sm:$0xff] %vm1289, 0.0
      %1887 = vst.msk [vmem:[#allocation2 + $0xe0] sm:$0xff] %vm1289, 0.0
      %1888 = vst.msk [vmem:[#allocation2 + $0xe8] sm:$0x3] %vm1860, 0.0
      %1889 = vst.msk [vmem:[#allocation2 + $0xf0] sm:$0xff] %vm1289, 0.0
      %1890 = vst.msk [vmem:[#allocation2 + $0xf8] sm:$0xff] %vm1289, 0.0
      %1891 = vst.msk [vmem:[#allocation2 + $0x100] sm:$0x3] %vm1860, 0.0
      %1892 = vst.msk [vmem:[#allocation2 + $0x108] sm:$0xff] %vm1289, 0.0
      %1893 = vst.msk [vmem:[#allocation2 + $0x110] sm:$0xff] %vm1289, 0.0
      %1894 = vst.msk [vmem:[#allocation2 + $0x118] sm:$0x3] %vm1860, 0.0
      %1895 = vst.msk [vmem:[#allocation2 + $0x120] sm:$0xff] %vm1289, 0.0
      %1896 = vst.msk [vmem:[#allocation2 + $0x128] sm:$0xff] %vm1289, 0.0
      %1897 = vst.msk [vmem:[#allocation2 + $0x130] sm:$0x3] %vm1860, 0.0
      %1898 = vst.msk [vmem:[#allocation2 + $0x138] sm:$0xff] %vm1289, 0.0
      %1899 = vst.msk [vmem:[#allocation2 + $0x140] sm:$0xff] %vm1289, 0.0
      %1900 = vst.msk [vmem:[#allocation2 + $0x148] sm:$0x3] %vm1860, 0.0
      %1901 = vst.msk [vmem:[#allocation2 + $0x150] sm:$0xff] %vm1289, 0.0
      %1902 = vst.msk [vmem:[#allocation2 + $0x158] sm:$0xff] %vm1289, 0.0
      %1903 = vst.msk [vmem:[#allocation2 + $0x160] sm:$0x3] %vm1860, 0.0
      %1904 = vst.msk [vmem:[#allocation2 + $0x168] sm:$0xff] %vm1289, 0.0
      %1905 = vst.msk [vmem:[#allocation2 + $0x170] sm:$0xff] %vm1289, 0.0
      %1906 = vst.msk [vmem:[#allocation2 + $0x178] sm:$0x3] %vm1860, 0.0
      %1907 = vst.msk [vmem:[#allocation2 + $0x180] sm:$0xff] %vm1289, 0.0
      %1908 = vst.msk [vmem:[#allocation2 + $0x188] sm:$0xff] %vm1289, 0.0
      %1909 = vst.msk [vmem:[#allocation2 + $0x190] sm:$0x3] %vm1860, 0.0
      %1910 = vst.msk [vmem:[#allocation2 + $0x198] sm:$0xff] %vm1289, 0.0
      %1911 = vst.msk [vmem:[#allocation2 + $0x1a0] sm:$0xff] %vm1289, 0.0
      %1912 = vst.msk [vmem:[#allocation2 + $0x1a8] sm:$0x3] %vm1860, 0.0
      %s1913 = scalar_lea.vmem [#allocation2], 24
      %1914 = vst.msk [vmem:[%s1913 + $0x1] sm:$0xff] %vm1289, %v1700
      %1915 = vst.msk [vmem:[%s1913 + $0x9] sm:$0xff] %vm1289, %v1705
      %1916 = vst.msk [vmem:[%s1913 + $0x19] sm:$0xff] %vm1289, %v1710
      %1917 = vst.msk [vmem:[%s1913 + $0x21] sm:$0xff] %vm1289, %v1715
      %1918 = vst.msk [vmem:[%s1913 + $0x31] sm:$0xff] %vm1289, %v1720
      %1919 = vst.msk [vmem:[%s1913 + $0x39] sm:$0xff] %vm1289, %v1725
      %1920 = vst.msk [vmem:[%s1913 + $0x49] sm:$0xff] %vm1289, %v1730
      %1921 = vst.msk [vmem:[%s1913 + $0x51] sm:$0xff] %vm1289, %v1735
      %1922 = vst.msk [vmem:[%s1913 + $0x61] sm:$0xff] %vm1289, %v1740
      %1923 = vst.msk [vmem:[%s1913 + $0x69] sm:$0xff] %vm1289, %v1745
      %1924 = vst.msk [vmem:[%s1913 + $0x79] sm:$0xff] %vm1289, %v1750
      %1925 = vst.msk [vmem:[%s1913 + $0x81] sm:$0xff] %vm1289, %v1755
      %1926 = vst.msk [vmem:[%s1913 + $0x91] sm:$0xff] %vm1289, %v1760
      %1927 = vst.msk [vmem:[%s1913 + $0x99] sm:$0xff] %vm1289, %v1765
      %1928 = vst.msk [vmem:[%s1913 + $0xa9] sm:$0xff] %vm1289, %v1770
      %1929 = vst.msk [vmem:[%s1913 + $0xb1] sm:$0xff] %vm1289, %v1775
      %1930 = vst.msk [vmem:[%s1913 + $0xc1] sm:$0xff] %vm1289, %v1780
      %1931 = vst.msk [vmem:[%s1913 + $0xc9] sm:$0xff] %vm1289, %v1785
      %1932 = vst.msk [vmem:[%s1913 + $0xd9] sm:$0xff] %vm1289, %v1790
      %1933 = vst.msk [vmem:[%s1913 + $0xe1] sm:$0xff] %vm1289, %v1795
      %1934 = vst.msk [vmem:[%s1913 + $0xf1] sm:$0xff] %vm1289, %v1800
      %1935 = vst.msk [vmem:[%s1913 + $0xf9] sm:$0xff] %vm1289, %v1805
      %1936 = vst.msk [vmem:[%s1913 + $0x109] sm:$0xff] %vm1289, %v1810
      %1937 = vst.msk [vmem:[%s1913 + $0x111] sm:$0xff] %vm1289, %v1815
      %1938 = vst.msk [vmem:[%s1913 + $0x121] sm:$0xff] %vm1289, %v1820
      %1939 = vst.msk [vmem:[%s1913 + $0x129] sm:$0xff] %vm1289, %v1825
      %1940 = vst.msk [vmem:[%s1913 + $0x139] sm:$0xff] %vm1289, %v1830
      %1941 = vst.msk [vmem:[%s1913 + $0x141] sm:$0xff] %vm1289, %v1835
      %1942 = vst.msk [vmem:[%s1913 + $0x151] sm:$0xff] %vm1289, %v1840
      %1943 = vst.msk [vmem:[%s1913 + $0x159] sm:$0xff] %vm1289, %v1845
      %1944 = vst.msk [vmem:[%s1913 + $0x169] sm:$0xff] %vm1289, %v1850
      %1945 = vst.msk [vmem:[%s1913 + $0x171] sm:$0xff] %vm1289, %v1855
      %v1946 = vld [vmem:[#allocation2] sm:$0xff]
      %v1947 = vld [vmem:[#allocation2 + $0x8] sm:$0xff]
      %v1948 = vld [vmem:[#allocation2 + $0x10] sm:$0x3]
      %v1949 = vld [vmem:[#allocation2 + $0x18] sm:$0xff]
      %v1950 = vld [vmem:[#allocation2 + $0x20] sm:$0xff]
      %v1951 = vld [vmem:[#allocation2 + $0x28] sm:$0x3]
      %v1952 = vld [vmem:[#allocation2 + $0x30] sm:$0xff]
      %v1953 = vld [vmem:[#allocation2 + $0x38] sm:$0xff]
      %v1954 = vld [vmem:[#allocation2 + $0x40] sm:$0x3]
      %v1955 = vld [vmem:[#allocation2 + $0x48] sm:$0xff]
      %v1956 = vld [vmem:[#allocation2 + $0x50] sm:$0xff]
      %v1957 = vld [vmem:[#allocation2 + $0x58] sm:$0x3]
      %v1958 = vld [vmem:[#allocation2 + $0x60] sm:$0xff]
      %v1959 = vld [vmem:[#allocation2 + $0x68] sm:$0xff]
      %v1960 = vld [vmem:[#allocation2 + $0x70] sm:$0x3]
      %v1961 = vld [vmem:[#allocation2 + $0x78] sm:$0xff]
      %v1962 = vld [vmem:[#allocation2 + $0x80] sm:$0xff]
      %v1963 = vld [vmem:[#allocation2 + $0x88] sm:$0x3]
      %v1964 = vld [vmem:[#allocation2 + $0x90] sm:$0xff]
      %v1965 = vld [vmem:[#allocation2 + $0x98] sm:$0xff]
      %v1966 = vld [vmem:[#allocation2 + $0xa0] sm:$0x3]
      %v1967 = vld [vmem:[#allocation2 + $0xa8] sm:$0xff]
      %v1968 = vld [vmem:[#allocation2 + $0xb0] sm:$0xff]
      %v1969 = vld [vmem:[#allocation2 + $0xb8] sm:$0x3]
      %v1970 = vld [vmem:[#allocation2 + $0xc0] sm:$0xff]
      %v1971 = vld [vmem:[#allocation2 + $0xc8] sm:$0xff]
      %v1972 = vld [vmem:[#allocation2 + $0xd0] sm:$0x3]
      %v1973 = vld [vmem:[#allocation2 + $0xd8] sm:$0xff]
      %v1974 = vld [vmem:[#allocation2 + $0xe0] sm:$0xff]
      %v1975 = vld [vmem:[#allocation2 + $0xe8] sm:$0x3]
      %v1976 = vld [vmem:[#allocation2 + $0xf0] sm:$0xff]
      %v1977 = vld [vmem:[#allocation2 + $0xf8] sm:$0xff]
      %v1978 = vld [vmem:[#allocation2 + $0x100] sm:$0x3]
      %v1979 = vld [vmem:[#allocation2 + $0x108] sm:$0xff]
      %v1980 = vld [vmem:[#allocation2 + $0x110] sm:$0xff]
      %v1981 = vld [vmem:[#allocation2 + $0x118] sm:$0x3]
      %v1982 = vld [vmem:[#allocation2 + $0x120] sm:$0xff]
      %v1983 = vld [vmem:[#allocation2 + $0x128] sm:$0xff]
      %v1984 = vld [vmem:[#allocation2 + $0x130] sm:$0x3]
      %v1985 = vld [vmem:[#allocation2 + $0x138] sm:$0xff]
      %v1986 = vld [vmem:[#allocation2 + $0x140] sm:$0xff]
      %v1987 = vld [vmem:[#allocation2 + $0x148] sm:$0x3]
      %v1988 = vld [vmem:[#allocation2 + $0x150] sm:$0xff]
      %v1989 = vld [vmem:[#allocation2 + $0x158] sm:$0xff]
      %v1990 = vld [vmem:[#allocation2 + $0x160] sm:$0x3]
      %v1991 = vld [vmem:[#allocation2 + $0x168] sm:$0xff]
      %v1992 = vld [vmem:[#allocation2 + $0x170] sm:$0xff]
      %v1993 = vld [vmem:[#allocation2 + $0x178] sm:$0x3]
      %v1994 = vld [vmem:[#allocation2 + $0x180] sm:$0xff]
      %v1995 = vld [vmem:[#allocation2 + $0x188] sm:$0xff]
      %v1996 = vld [vmem:[#allocation2 + $0x190] sm:$0x3]
      %v1997 = vld [vmem:[#allocation2 + $0x198] sm:$0xff]
      %v1998 = vld [vmem:[#allocation2 + $0x1a0] sm:$0xff]
      %v1999 = vld [vmem:[#allocation2 + $0x1a8] sm:$0x3]
      %v2048 = vrot.slane %v1946, 1
      %v2049 = vrot.slane %v1947, 1
      %v2050 = vsel %vm300, %v2048, %v2049
      %v2051 = vrot.slane %v1948, 1
      %v2052 = vsel %vm300, %v2049, %v2051
      %v2053 = vrot.slane %v1949, 1
      %v2054 = vrot.slane %v1950, 1
      %v2055 = vsel %vm300, %v2053, %v2054
      %v2056 = vrot.slane %v1951, 1
      %v2057 = vsel %vm300, %v2054, %v2056
      %v2058 = vrot.slane %v1952, 1
      %v2059 = vrot.slane %v1953, 1
      %v2060 = vsel %vm300, %v2058, %v2059
      %v2061 = vrot.slane %v1954, 1
      %v2062 = vsel %vm300, %v2059, %v2061
      %v2063 = vrot.slane %v1955, 1
      %v2064 = vrot.slane %v1956, 1
      %v2065 = vsel %vm300, %v2063, %v2064
      %v2066 = vrot.slane %v1957, 1
      %v2067 = vsel %vm300, %v2064, %v2066
      %v2068 = vrot.slane %v1958, 1
      %v2069 = vrot.slane %v1959, 1
      %v2070 = vsel %vm300, %v2068, %v2069
      %v2071 = vrot.slane %v1960, 1
      %v2072 = vsel %vm300, %v2069, %v2071
      %v2073 = vrot.slane %v1961, 1
      %v2074 = vrot.slane %v1962, 1
      %v2075 = vsel %vm300, %v2073, %v2074
      %v2076 = vrot.slane %v1963, 1
      %v2077 = vsel %vm300, %v2074, %v2076
      %v2078 = vrot.slane %v1964, 1
      %v2079 = vrot.slane %v1965, 1
      %v2080 = vsel %vm300, %v2078, %v2079
      %v2081 = vrot.slane %v1966, 1
      %v2082 = vsel %vm300, %v2079, %v2081
      %v2083 = vrot.slane %v1967, 1
      %v2084 = vrot.slane %v1968, 1
      %v2085 = vsel %vm300, %v2083, %v2084
      %v2086 = vrot.slane %v1969, 1
      %v2087 = vsel %vm300, %v2084, %v2086
      %v2088 = vrot.slane %v1970, 1
      %v2089 = vrot.slane %v1971, 1
      %v2090 = vsel %vm300, %v2088, %v2089
      %v2091 = vrot.slane %v1972, 1
      %v2092 = vsel %vm300, %v2089, %v2091
      %v2093 = vrot.slane %v1973, 1
      %v2094 = vrot.slane %v1974, 1
      %v2095 = vsel %vm300, %v2093, %v2094
      %v2096 = vrot.slane %v1975, 1
      %v2097 = vsel %vm300, %v2094, %v2096
      %v2098 = vrot.slane %v1976, 1
      %v2099 = vrot.slane %v1977, 1
      %v2100 = vsel %vm300, %v2098, %v2099
      %v2101 = vrot.slane %v1978, 1
      %v2102 = vsel %vm300, %v2099, %v2101
      %v2103 = vrot.slane %v1979, 1
      %v2104 = vrot.slane %v1980, 1
      %v2105 = vsel %vm300, %v2103, %v2104
      %v2106 = vrot.slane %v1981, 1
      %v2107 = vsel %vm300, %v2104, %v2106
      %v2108 = vrot.slane %v1982, 1
      %v2109 = vrot.slane %v1983, 1
      %v2110 = vsel %vm300, %v2108, %v2109
      %v2111 = vrot.slane %v1984, 1
      %v2112 = vsel %vm300, %v2109, %v2111
      %v2113 = vrot.slane %v1985, 1
      %v2114 = vrot.slane %v1986, 1
      %v2115 = vsel %vm300, %v2113, %v2114
      %v2116 = vrot.slane %v1987, 1
      %v2117 = vsel %vm300, %v2114, %v2116
      %v2118 = vrot.slane %v1988, 1
      %v2119 = vrot.slane %v1989, 1
      %v2120 = vsel %vm300, %v2118, %v2119
      %v2121 = vrot.slane %v1990, 1
      %v2122 = vsel %vm300, %v2119, %v2121
      %v2123 = vrot.slane %v1991, 1
      %v2124 = vrot.slane %v1992, 1
      %v2125 = vsel %vm300, %v2123, %v2124
      %v2126 = vrot.slane %v1993, 1
      %v2127 = vsel %vm300, %v2124, %v2126
      %2128 = vrot.lane.b32.xlu0 %v2050, 8
      %v2129 = vpop.permute.xlu0 %2128
      %2130 = vrot.lane.b32.xlu0 %v2052, 8
      %v2131 = vpop.permute.xlu0 %2130
      %2132 = vrot.lane.b32.xlu0 %v2055, 8
      %v2133 = vpop.permute.xlu0 %2132
      %2134 = vrot.lane.b32.xlu0 %v2057, 8
      %v2135 = vpop.permute.xlu0 %2134
      %2136 = vrot.lane.b32.xlu0 %v2060, 8
      %v2137 = vpop.permute.xlu0 %2136
      %2138 = vrot.lane.b32.xlu0 %v2062, 8
      %v2139 = vpop.permute.xlu0 %2138
      %2140 = vrot.lane.b32.xlu0 %v2065, 8
      %v2141 = vpop.permute.xlu0 %2140
      %2142 = vrot.lane.b32.xlu0 %v2067, 8
      %v2143 = vpop.permute.xlu0 %2142
      %2144 = vrot.lane.b32.xlu0 %v2070, 8
      %v2145 = vpop.permute.xlu0 %2144
      %2146 = vrot.lane.b32.xlu0 %v2072, 8
      %v2147 = vpop.permute.xlu0 %2146
      %2148 = vrot.lane.b32.xlu0 %v2075, 8
      %v2149 = vpop.permute.xlu0 %2148
      %2150 = vrot.lane.b32.xlu0 %v2077, 8
      %v2151 = vpop.permute.xlu0 %2150
      %2152 = vrot.lane.b32.xlu0 %v2080, 8
      %v2153 = vpop.permute.xlu0 %2152
      %2154 = vrot.lane.b32.xlu0 %v2082, 8
      %v2155 = vpop.permute.xlu0 %2154
      %2156 = vrot.lane.b32.xlu0 %v2085, 8
      %v2157 = vpop.permute.xlu0 %2156
      %2158 = vrot.lane.b32.xlu0 %v2087, 8
      %v2159 = vpop.permute.xlu0 %2158
      %2160 = vrot.lane.b32.xlu0 %v2090, 8
      %v2161 = vpop.permute.xlu0 %2160
      %2162 = vrot.lane.b32.xlu0 %v2092, 8
      %v2163 = vpop.permute.xlu0 %2162
      %2164 = vrot.lane.b32.xlu0 %v2095, 8
      %v2165 = vpop.permute.xlu0 %2164
      %2166 = vrot.lane.b32.xlu0 %v2097, 8
      %v2167 = vpop.permute.xlu0 %2166
      %2168 = vrot.lane.b32.xlu0 %v2100, 8
      %v2169 = vpop.permute.xlu0 %2168
      %2170 = vrot.lane.b32.xlu0 %v2102, 8
      %v2171 = vpop.permute.xlu0 %2170
      %2172 = vrot.lane.b32.xlu0 %v2105, 8
      %v2173 = vpop.permute.xlu0 %2172
      %2174 = vrot.lane.b32.xlu0 %v2107, 8
      %v2175 = vpop.permute.xlu0 %2174
      %2176 = vrot.lane.b32.xlu0 %v2110, 8
      %v2177 = vpop.permute.xlu0 %2176
      %2178 = vrot.lane.b32.xlu0 %v2112, 8
      %v2179 = vpop.permute.xlu0 %2178
      %2180 = vrot.lane.b32.xlu0 %v2115, 8
      %v2181 = vpop.permute.xlu0 %2180
      %2182 = vrot.lane.b32.xlu0 %v2117, 8
      %v2183 = vpop.permute.xlu0 %2182
      %2184 = vrot.lane.b32.xlu0 %v2120, 8
      %v2185 = vpop.permute.xlu0 %2184
      %2186 = vrot.lane.b32.xlu0 %v2122, 8
      %v2187 = vpop.permute.xlu0 %2186
      %2188 = vrot.lane.b32.xlu0 %v2125, 8
      %v2189 = vpop.permute.xlu0 %2188
      %2190 = vrot.lane.b32.xlu0 %v2127, 8
      %v2191 = vpop.permute.xlu0 %2190
      %v2224 = vrot.slane %v1946, 2
      %v2225 = vrot.slane %v1947, 2
      %v2226 = vsel %vm477, %v2224, %v2225
      %v2227 = vrot.slane %v1948, 2
      %v2228 = vsel %vm477, %v2225, %v2227
      %v2229 = vrot.slane %v1949, 2
      %v2230 = vrot.slane %v1950, 2
      %v2231 = vsel %vm477, %v2229, %v2230
      %v2232 = vrot.slane %v1951, 2
      %v2233 = vsel %vm477, %v2230, %v2232
      %v2234 = vrot.slane %v1952, 2
      %v2235 = vrot.slane %v1953, 2
      %v2236 = vsel %vm477, %v2234, %v2235
      %v2237 = vrot.slane %v1954, 2
      %v2238 = vsel %vm477, %v2235, %v2237
      %v2239 = vrot.slane %v1955, 2
      %v2240 = vrot.slane %v1956, 2
      %v2241 = vsel %vm477, %v2239, %v2240
      %v2242 = vrot.slane %v1957, 2
      %v2243 = vsel %vm477, %v2240, %v2242
      %v2244 = vrot.slane %v1958, 2
      %v2245 = vrot.slane %v1959, 2
      %v2246 = vsel %vm477, %v2244, %v2245
      %v2247 = vrot.slane %v1960, 2
      %v2248 = vsel %vm477, %v2245, %v2247
      %v2249 = vrot.slane %v1961, 2
      %v2250 = vrot.slane %v1962, 2
      %v2251 = vsel %vm477, %v2249, %v2250
      %v2252 = vrot.slane %v1963, 2
      %v2253 = vsel %vm477, %v2250, %v2252
      %v2254 = vrot.slane %v1964, 2
      %v2255 = vrot.slane %v1965, 2
      %v2256 = vsel %vm477, %v2254, %v2255
      %v2257 = vrot.slane %v1966, 2
      %v2258 = vsel %vm477, %v2255, %v2257
      %v2259 = vrot.slane %v1967, 2
      %v2260 = vrot.slane %v1968, 2
      %v2261 = vsel %vm477, %v2259, %v2260
      %v2262 = vrot.slane %v1969, 2
      %v2263 = vsel %vm477, %v2260, %v2262
      %v2264 = vrot.slane %v1970, 2
      %v2265 = vrot.slane %v1971, 2
      %v2266 = vsel %vm477, %v2264, %v2265
      %v2267 = vrot.slane %v1972, 2
      %v2268 = vsel %vm477, %v2265, %v2267
      %v2269 = vrot.slane %v1973, 2
      %v2270 = vrot.slane %v1974, 2
      %v2271 = vsel %vm477, %v2269, %v2270
      %v2272 = vrot.slane %v1975, 2
      %v2273 = vsel %vm477, %v2270, %v2272
      %v2274 = vrot.slane %v1976, 2
      %v2275 = vrot.slane %v1977, 2
      %v2276 = vsel %vm477, %v2274, %v2275
      %v2277 = vrot.slane %v1978, 2
      %v2278 = vsel %vm477, %v2275, %v2277
      %v2279 = vrot.slane %v1979, 2
      %v2280 = vrot.slane %v1980, 2
      %v2281 = vsel %vm477, %v2279, %v2280
      %v2282 = vrot.slane %v1981, 2
      %v2283 = vsel %vm477, %v2280, %v2282
      %v2284 = vrot.slane %v1982, 2
      %v2285 = vrot.slane %v1983, 2
      %v2286 = vsel %vm477, %v2284, %v2285
      %v2287 = vrot.slane %v1984, 2
      %v2288 = vsel %vm477, %v2285, %v2287
      %v2289 = vrot.slane %v1985, 2
      %v2290 = vrot.slane %v1986, 2
      %v2291 = vsel %vm477, %v2289, %v2290
      %v2292 = vrot.slane %v1987, 2
      %v2293 = vsel %vm477, %v2290, %v2292
      %v2294 = vrot.slane %v1988, 2
      %v2295 = vrot.slane %v1989, 2
      %v2296 = vsel %vm477, %v2294, %v2295
      %v2297 = vrot.slane %v1990, 2
      %v2298 = vsel %vm477, %v2295, %v2297
      %v2299 = vrot.slane %v1991, 2
      %v2300 = vrot.slane %v1992, 2
      %v2301 = vsel %vm477, %v2299, %v2300
      %v2302 = vrot.slane %v1993, 2
      %v2303 = vsel %vm477, %v2300, %v2302
      %2304 = vrot.lane.b32.xlu0 %v2226, 16
      %v2305 = vpop.permute.xlu0 %2304
      %2306 = vrot.lane.b32.xlu0 %v2228, 16
      %v2307 = vpop.permute.xlu0 %2306
      %2308 = vrot.lane.b32.xlu0 %v2231, 16
      %v2309 = vpop.permute.xlu0 %2308
      %2310 = vrot.lane.b32.xlu0 %v2233, 16
      %v2311 = vpop.permute.xlu0 %2310
      %2312 = vrot.lane.b32.xlu0 %v2236, 16
      %v2313 = vpop.permute.xlu0 %2312
      %2314 = vrot.lane.b32.xlu0 %v2238, 16
      %v2315 = vpop.permute.xlu0 %2314
      %2316 = vrot.lane.b32.xlu0 %v2241, 16
      %v2317 = vpop.permute.xlu0 %2316
      %2318 = vrot.lane.b32.xlu0 %v2243, 16
      %v2319 = vpop.permute.xlu0 %2318
      %2320 = vrot.lane.b32.xlu0 %v2246, 16
      %v2321 = vpop.permute.xlu0 %2320
      %2322 = vrot.lane.b32.xlu0 %v2248, 16
      %v2323 = vpop.permute.xlu0 %2322
      %2324 = vrot.lane.b32.xlu0 %v2251, 16
      %v2325 = vpop.permute.xlu0 %2324
      %2326 = vrot.lane.b32.xlu0 %v2253, 16
      %v2327 = vpop.permute.xlu0 %2326
      %2328 = vrot.lane.b32.xlu0 %v2256, 16
      %v2329 = vpop.permute.xlu0 %2328
      %2330 = vrot.lane.b32.xlu0 %v2258, 16
      %v2331 = vpop.permute.xlu0 %2330
      %2332 = vrot.lane.b32.xlu0 %v2261, 16
      %v2333 = vpop.permute.xlu0 %2332
      %2334 = vrot.lane.b32.xlu0 %v2263, 16
      %v2335 = vpop.permute.xlu0 %2334
      %2336 = vrot.lane.b32.xlu0 %v2266, 16
      %v2337 = vpop.permute.xlu0 %2336
      %2338 = vrot.lane.b32.xlu0 %v2268, 16
      %v2339 = vpop.permute.xlu0 %2338
      %2340 = vrot.lane.b32.xlu0 %v2271, 16
      %v2341 = vpop.permute.xlu0 %2340
      %2342 = vrot.lane.b32.xlu0 %v2273, 16
      %v2343 = vpop.permute.xlu0 %2342
      %2344 = vrot.lane.b32.xlu0 %v2276, 16
      %v2345 = vpop.permute.xlu0 %2344
      %2346 = vrot.lane.b32.xlu0 %v2278, 16
      %v2347 = vpop.permute.xlu0 %2346
      %2348 = vrot.lane.b32.xlu0 %v2281, 16
      %v2349 = vpop.permute.xlu0 %2348
      %2350 = vrot.lane.b32.xlu0 %v2283, 16
      %v2351 = vpop.permute.xlu0 %2350
      %2352 = vrot.lane.b32.xlu0 %v2286, 16
      %v2353 = vpop.permute.xlu0 %2352
      %2354 = vrot.lane.b32.xlu0 %v2288, 16
      %v2355 = vpop.permute.xlu0 %2354
      %2356 = vrot.lane.b32.xlu0 %v2291, 16
      %v2357 = vpop.permute.xlu0 %2356
      %2358 = vrot.lane.b32.xlu0 %v2293, 16
      %v2359 = vpop.permute.xlu0 %2358
      %2360 = vrot.lane.b32.xlu0 %v2296, 16
      %v2361 = vpop.permute.xlu0 %2360
      %2362 = vrot.lane.b32.xlu0 %v2298, 16
      %v2363 = vpop.permute.xlu0 %2362
      %2364 = vrot.lane.b32.xlu0 %v2301, 16
      %v2365 = vpop.permute.xlu0 %2364
      %2366 = vrot.lane.b32.xlu0 %v2303, 16
      %v2367 = vpop.permute.xlu0 %2366
      %2402 = vrot.lane.b32.xlu0 %v1949, 24
      %v2403 = vpop.permute.xlu0 %2402
      %2404 = vrot.lane.b32.xlu0 %v1950, 24
      %v2405 = vpop.permute.xlu0 %2404
      %2406 = vrot.lane.b32.xlu0 %v1952, 24
      %v2407 = vpop.permute.xlu0 %2406
      %2408 = vrot.lane.b32.xlu0 %v1953, 24
      %v2409 = vpop.permute.xlu0 %2408
      %2410 = vrot.lane.b32.xlu0 %v1955, 24
      %v2411 = vpop.permute.xlu0 %2410
      %2412 = vrot.lane.b32.xlu0 %v1956, 24
      %v2413 = vpop.permute.xlu0 %2412
      %2414 = vrot.lane.b32.xlu0 %v1958, 24
      %v2415 = vpop.permute.xlu0 %2414
      %2416 = vrot.lane.b32.xlu0 %v1959, 24
      %v2417 = vpop.permute.xlu0 %2416
      %2418 = vrot.lane.b32.xlu0 %v1961, 24
      %v2419 = vpop.permute.xlu0 %2418
      %2420 = vrot.lane.b32.xlu0 %v1962, 24
      %v2421 = vpop.permute.xlu0 %2420
      %2422 = vrot.lane.b32.xlu0 %v1964, 24
      %v2423 = vpop.permute.xlu0 %2422
      %2424 = vrot.lane.b32.xlu0 %v1965, 24
      %v2425 = vpop.permute.xlu0 %2424
      %2426 = vrot.lane.b32.xlu0 %v1967, 24
      %v2427 = vpop.permute.xlu0 %2426
      %2428 = vrot.lane.b32.xlu0 %v1968, 24
      %v2429 = vpop.permute.xlu0 %2428
      %2430 = vrot.lane.b32.xlu0 %v1970, 24
      %v2431 = vpop.permute.xlu0 %2430
      %2432 = vrot.lane.b32.xlu0 %v1971, 24
      %v2433 = vpop.permute.xlu0 %2432
      %2434 = vrot.lane.b32.xlu0 %v1973, 24
      %v2435 = vpop.permute.xlu0 %2434
      %2436 = vrot.lane.b32.xlu0 %v1974, 24
      %v2437 = vpop.permute.xlu0 %2436
      %2438 = vrot.lane.b32.xlu0 %v1976, 24
      %v2439 = vpop.permute.xlu0 %2438
      %2440 = vrot.lane.b32.xlu0 %v1977, 24
      %v2441 = vpop.permute.xlu0 %2440
      %2442 = vrot.lane.b32.xlu0 %v1979, 24
      %v2443 = vpop.permute.xlu0 %2442
      %2444 = vrot.lane.b32.xlu0 %v1980, 24
      %v2445 = vpop.permute.xlu0 %2444
      %2446 = vrot.lane.b32.xlu0 %v1982, 24
      %v2447 = vpop.permute.xlu0 %2446
      %2448 = vrot.lane.b32.xlu0 %v1983, 24
      %v2449 = vpop.permute.xlu0 %2448
      %2450 = vrot.lane.b32.xlu0 %v1985, 24
      %v2451 = vpop.permute.xlu0 %2450
      %2452 = vrot.lane.b32.xlu0 %v1986, 24
      %v2453 = vpop.permute.xlu0 %2452
      %2454 = vrot.lane.b32.xlu0 %v1988, 24
      %v2455 = vpop.permute.xlu0 %2454
      %2456 = vrot.lane.b32.xlu0 %v1989, 24
      %v2457 = vpop.permute.xlu0 %2456
      %2458 = vrot.lane.b32.xlu0 %v1991, 24
      %v2459 = vpop.permute.xlu0 %2458
      %2460 = vrot.lane.b32.xlu0 %v1992, 24
      %v2461 = vpop.permute.xlu0 %2460
      %2462 = vrot.lane.b32.xlu0 %v1994, 24
      %v2463 = vpop.permute.xlu0 %2462
      %2464 = vrot.lane.b32.xlu0 %v1995, 24
      %v2465 = vpop.permute.xlu0 %2464
      %v2499 = vrot.slane %v1994, 1
      %v2500 = vrot.slane %v1995, 1
      %v2501 = vsel %vm300, %v2499, %v2500
      %v2502 = vrot.slane %v1996, 1
      %v2503 = vsel %vm300, %v2500, %v2502
      %2504 = vrot.lane.b32.xlu0 %v2055, 32
      %v2505 = vpop.permute.xlu0 %2504
      %2506 = vrot.lane.b32.xlu0 %v2057, 32
      %v2507 = vpop.permute.xlu0 %2506
      %2508 = vrot.lane.b32.xlu0 %v2060, 32
      %v2509 = vpop.permute.xlu0 %2508
      %2510 = vrot.lane.b32.xlu0 %v2062, 32
      %v2511 = vpop.permute.xlu0 %2510
      %2512 = vrot.lane.b32.xlu0 %v2065, 32
      %v2513 = vpop.permute.xlu0 %2512
      %2514 = vrot.lane.b32.xlu0 %v2067, 32
      %v2515 = vpop.permute.xlu0 %2514
      %2516 = vrot.lane.b32.xlu0 %v2070, 32
      %v2517 = vpop.permute.xlu0 %2516
      %2518 = vrot.lane.b32.xlu0 %v2072, 32
      %v2519 = vpop.permute.xlu0 %2518
      %2520 = vrot.lane.b32.xlu0 %v2075, 32
      %v2521 = vpop.permute.xlu0 %2520
      %2522 = vrot.lane.b32.xlu0 %v2077, 32
      %v2523 = vpop.permute.xlu0 %2522
      %2524 = vrot.lane.b32.xlu0 %v2080, 32
      %v2525 = vpop.permute.xlu0 %2524
      %2526 = vrot.lane.b32.xlu0 %v2082, 32
      %v2527 = vpop.permute.xlu0 %2526
      %2528 = vrot.lane.b32.xlu0 %v2085, 32
      %v2529 = vpop.permute.xlu0 %2528
      %2530 = vrot.lane.b32.xlu0 %v2087, 32
      %v2531 = vpop.permute.xlu0 %2530
      %2532 = vrot.lane.b32.xlu0 %v2090, 32
      %v2533 = vpop.permute.xlu0 %2532
      %2534 = vrot.lane.b32.xlu0 %v2092, 32
      %v2535 = vpop.permute.xlu0 %2534
      %2536 = vrot.lane.b32.xlu0 %v2095, 32
      %v2537 = vpop.permute.xlu0 %2536
      %2538 = vrot.lane.b32.xlu0 %v2097, 32
      %v2539 = vpop.permute.xlu0 %2538
      %2540 = vrot.lane.b32.xlu0 %v2100, 32
      %v2541 = vpop.permute.xlu0 %2540
      %2542 = vrot.lane.b32.xlu0 %v2102, 32
      %v2543 = vpop.permute.xlu0 %2542
      %2544 = vrot.lane.b32.xlu0 %v2105, 32
      %v2545 = vpop.permute.xlu0 %2544
      %2546 = vrot.lane.b32.xlu0 %v2107, 32
      %v2547 = vpop.permute.xlu0 %2546
      %2548 = vrot.lane.b32.xlu0 %v2110, 32
      %v2549 = vpop.permute.xlu0 %2548
      %2550 = vrot.lane.b32.xlu0 %v2112, 32
      %v2551 = vpop.permute.xlu0 %2550
      %2552 = vrot.lane.b32.xlu0 %v2115, 32
      %v2553 = vpop.permute.xlu0 %2552
      %2554 = vrot.lane.b32.xlu0 %v2117, 32
      %v2555 = vpop.permute.xlu0 %2554
      %2556 = vrot.lane.b32.xlu0 %v2120, 32
      %v2557 = vpop.permute.xlu0 %2556
      %2558 = vrot.lane.b32.xlu0 %v2122, 32
      %v2559 = vpop.permute.xlu0 %2558
      %2560 = vrot.lane.b32.xlu0 %v2125, 32
      %v2561 = vpop.permute.xlu0 %2560
      %2562 = vrot.lane.b32.xlu0 %v2127, 32
      %v2563 = vpop.permute.xlu0 %2562
      %2564 = vrot.lane.b32.xlu0 %v2501, 32
      %v2565 = vpop.permute.xlu0 %2564
      %2566 = vrot.lane.b32.xlu0 %v2503, 32
      %v2567 = vpop.permute.xlu0 %2566
      %v2600 = vrot.slane %v1994, 2
      %v2601 = vrot.slane %v1995, 2
      %v2602 = vsel %vm477, %v2600, %v2601
      %v2603 = vrot.slane %v1996, 2
      %v2604 = vsel %vm477, %v2601, %v2603
      %2605 = vrot.lane.b32.xlu0 %v2231, 40
      %v2606 = vpop.permute.xlu0 %2605
      %2607 = vrot.lane.b32.xlu0 %v2233, 40
      %v2608 = vpop.permute.xlu0 %2607
      %2609 = vrot.lane.b32.xlu0 %v2236, 40
      %v2610 = vpop.permute.xlu0 %2609
      %2611 = vrot.lane.b32.xlu0 %v2238, 40
      %v2612 = vpop.permute.xlu0 %2611
      %2613 = vrot.lane.b32.xlu0 %v2241, 40
      %v2614 = vpop.permute.xlu0 %2613
      %2615 = vrot.lane.b32.xlu0 %v2243, 40
      %v2616 = vpop.permute.xlu0 %2615
      %2617 = vrot.lane.b32.xlu0 %v2246, 40
      %v2618 = vpop.permute.xlu0 %2617
      %2619 = vrot.lane.b32.xlu0 %v2248, 40
      %v2620 = vpop.permute.xlu0 %2619
      %2621 = vrot.lane.b32.xlu0 %v2251, 40
      %v2622 = vpop.permute.xlu0 %2621
      %2623 = vrot.lane.b32.xlu0 %v2253, 40
      %v2624 = vpop.permute.xlu0 %2623
      %2625 = vrot.lane.b32.xlu0 %v2256, 40
      %v2626 = vpop.permute.xlu0 %2625
      %2627 = vrot.lane.b32.xlu0 %v2258, 40
      %v2628 = vpop.permute.xlu0 %2627
      %2629 = vrot.lane.b32.xlu0 %v2261, 40
      %v2630 = vpop.permute.xlu0 %2629
      %2631 = vrot.lane.b32.xlu0 %v2263, 40
      %v2632 = vpop.permute.xlu0 %2631
      %2633 = vrot.lane.b32.xlu0 %v2266, 40
      %v2634 = vpop.permute.xlu0 %2633
      %2635 = vrot.lane.b32.xlu0 %v2268, 40
      %v2636 = vpop.permute.xlu0 %2635
      %2637 = vrot.lane.b32.xlu0 %v2271, 40
      %v2638 = vpop.permute.xlu0 %2637
      %2639 = vrot.lane.b32.xlu0 %v2273, 40
      %v2640 = vpop.permute.xlu0 %2639
      %2641 = vrot.lane.b32.xlu0 %v2276, 40
      %v2642 = vpop.permute.xlu0 %2641
      %2643 = vrot.lane.b32.xlu0 %v2278, 40
      %v2644 = vpop.permute.xlu0 %2643
      %2645 = vrot.lane.b32.xlu0 %v2281, 40
      %v2646 = vpop.permute.xlu0 %2645
      %2647 = vrot.lane.b32.xlu0 %v2283, 40
      %v2648 = vpop.permute.xlu0 %2647
      %2649 = vrot.lane.b32.xlu0 %v2286, 40
      %v2650 = vpop.permute.xlu0 %2649
      %2651 = vrot.lane.b32.xlu0 %v2288, 40
      %v2652 = vpop.permute.xlu0 %2651
      %2653 = vrot.lane.b32.xlu0 %v2291, 40
      %v2654 = vpop.permute.xlu0 %2653
      %2655 = vrot.lane.b32.xlu0 %v2293, 40
      %v2656 = vpop.permute.xlu0 %2655
      %2657 = vrot.lane.b32.xlu0 %v2296, 40
      %v2658 = vpop.permute.xlu0 %2657
      %2659 = vrot.lane.b32.xlu0 %v2298, 40
      %v2660 = vpop.permute.xlu0 %2659
      %2661 = vrot.lane.b32.xlu0 %v2301, 40
      %v2662 = vpop.permute.xlu0 %2661
      %2663 = vrot.lane.b32.xlu0 %v2303, 40
      %v2664 = vpop.permute.xlu0 %2663
      %2665 = vrot.lane.b32.xlu0 %v2602, 40
      %v2666 = vpop.permute.xlu0 %2665
      %2667 = vrot.lane.b32.xlu0 %v2604, 40
      %v2668 = vpop.permute.xlu0 %2667
      %2703 = vrot.lane.b32.xlu0 %v1952, 48
      %v2704 = vpop.permute.xlu0 %2703
      %2705 = vrot.lane.b32.xlu0 %v1953, 48
      %v2706 = vpop.permute.xlu0 %2705
      %2707 = vrot.lane.b32.xlu0 %v1955, 48
      %v2708 = vpop.permute.xlu0 %2707
      %2709 = vrot.lane.b32.xlu0 %v1956, 48
      %v2710 = vpop.permute.xlu0 %2709
      %2711 = vrot.lane.b32.xlu0 %v1958, 48
      %v2712 = vpop.permute.xlu0 %2711
      %2713 = vrot.lane.b32.xlu0 %v1959, 48
      %v2714 = vpop.permute.xlu0 %2713
      %2715 = vrot.lane.b32.xlu0 %v1961, 48
      %v2716 = vpop.permute.xlu0 %2715
      %2717 = vrot.lane.b32.xlu0 %v1962, 48
      %v2718 = vpop.permute.xlu0 %2717
      %2719 = vrot.lane.b32.xlu0 %v1964, 48
      %v2720 = vpop.permute.xlu0 %2719
      %2721 = vrot.lane.b32.xlu0 %v1965, 48
      %v2722 = vpop.permute.xlu0 %2721
      %2723 = vrot.lane.b32.xlu0 %v1967, 48
      %v2724 = vpop.permute.xlu0 %2723
      %2725 = vrot.lane.b32.xlu0 %v1968, 48
      %v2726 = vpop.permute.xlu0 %2725
      %2727 = vrot.lane.b32.xlu0 %v1970, 48
      %v2728 = vpop.permute.xlu0 %2727
      %2729 = vrot.lane.b32.xlu0 %v1971, 48
      %v2730 = vpop.permute.xlu0 %2729
      %2731 = vrot.lane.b32.xlu0 %v1973, 48
      %v2732 = vpop.permute.xlu0 %2731
      %2733 = vrot.lane.b32.xlu0 %v1974, 48
      %v2734 = vpop.permute.xlu0 %2733
      %2735 = vrot.lane.b32.xlu0 %v1976, 48
      %v2736 = vpop.permute.xlu0 %2735
      %2737 = vrot.lane.b32.xlu0 %v1977, 48
      %v2738 = vpop.permute.xlu0 %2737
      %2739 = vrot.lane.b32.xlu0 %v1979, 48
      %v2740 = vpop.permute.xlu0 %2739
      %2741 = vrot.lane.b32.xlu0 %v1980, 48
      %v2742 = vpop.permute.xlu0 %2741
      %2743 = vrot.lane.b32.xlu0 %v1982, 48
      %v2744 = vpop.permute.xlu0 %2743
      %2745 = vrot.lane.b32.xlu0 %v1983, 48
      %v2746 = vpop.permute.xlu0 %2745
      %2747 = vrot.lane.b32.xlu0 %v1985, 48
      %v2748 = vpop.permute.xlu0 %2747
      %2749 = vrot.lane.b32.xlu0 %v1986, 48
      %v2750 = vpop.permute.xlu0 %2749
      %2751 = vrot.lane.b32.xlu0 %v1988, 48
      %v2752 = vpop.permute.xlu0 %2751
      %2753 = vrot.lane.b32.xlu0 %v1989, 48
      %v2754 = vpop.permute.xlu0 %2753
      %2755 = vrot.lane.b32.xlu0 %v1991, 48
      %v2756 = vpop.permute.xlu0 %2755
      %2757 = vrot.lane.b32.xlu0 %v1992, 48
      %v2758 = vpop.permute.xlu0 %2757
      %2759 = vrot.lane.b32.xlu0 %v1994, 48
      %v2760 = vpop.permute.xlu0 %2759
      %2761 = vrot.lane.b32.xlu0 %v1995, 48
      %v2762 = vpop.permute.xlu0 %2761
      %2763 = vrot.lane.b32.xlu0 %v1997, 48
      %v2764 = vpop.permute.xlu0 %2763
      %2765 = vrot.lane.b32.xlu0 %v1998, 48
      %v2766 = vpop.permute.xlu0 %2765
      %v2800 = vrot.slane %v1997, 1
      %v2801 = vrot.slane %v1998, 1
      %v2802 = vsel %vm300, %v2800, %v2801
      %v2803 = vrot.slane %v1999, 1
      %v2804 = vsel %vm300, %v2801, %v2803
      %2805 = vrot.lane.b32.xlu0 %v2060, 56
      %v2806 = vpop.permute.xlu0 %2805
      %2807 = vrot.lane.b32.xlu0 %v2062, 56
      %v2808 = vpop.permute.xlu0 %2807
      %2809 = vrot.lane.b32.xlu0 %v2065, 56
      %v2810 = vpop.permute.xlu0 %2809
      %2811 = vrot.lane.b32.xlu0 %v2067, 56
      %v2812 = vpop.permute.xlu0 %2811
      %2813 = vrot.lane.b32.xlu0 %v2070, 56
      %v2814 = vpop.permute.xlu0 %2813
      %2815 = vrot.lane.b32.xlu0 %v2072, 56
      %v2816 = vpop.permute.xlu0 %2815
      %2817 = vrot.lane.b32.xlu0 %v2075, 56
      %v2818 = vpop.permute.xlu0 %2817
      %2819 = vrot.lane.b32.xlu0 %v2077, 56
      %v2820 = vpop.permute.xlu0 %2819
      %2821 = vrot.lane.b32.xlu0 %v2080, 56
      %v2822 = vpop.permute.xlu0 %2821
      %2823 = vrot.lane.b32.xlu0 %v2082, 56
      %v2824 = vpop.permute.xlu0 %2823
      %2825 = vrot.lane.b32.xlu0 %v2085, 56
      %v2826 = vpop.permute.xlu0 %2825
      %2827 = vrot.lane.b32.xlu0 %v2087, 56
      %v2828 = vpop.permute.xlu0 %2827
      %2829 = vrot.lane.b32.xlu0 %v2090, 56
      %v2830 = vpop.permute.xlu0 %2829
      %2831 = vrot.lane.b32.xlu0 %v2092, 56
      %v2832 = vpop.permute.xlu0 %2831
      %2833 = vrot.lane.b32.xlu0 %v2095, 56
      %v2834 = vpop.permute.xlu0 %2833
      %2835 = vrot.lane.b32.xlu0 %v2097, 56
      %v2836 = vpop.permute.xlu0 %2835
      %2837 = vrot.lane.b32.xlu0 %v2100, 56
      %v2838 = vpop.permute.xlu0 %2837
      %2839 = vrot.lane.b32.xlu0 %v2102, 56
      %v2840 = vpop.permute.xlu0 %2839
      %2841 = vrot.lane.b32.xlu0 %v2105, 56
      %v2842 = vpop.permute.xlu0 %2841
      %2843 = vrot.lane.b32.xlu0 %v2107, 56
      %v2844 = vpop.permute.xlu0 %2843
      %2845 = vrot.lane.b32.xlu0 %v2110, 56
      %v2846 = vpop.permute.xlu0 %2845
      %2847 = vrot.lane.b32.xlu0 %v2112, 56
      %v2848 = vpop.permute.xlu0 %2847
      %2849 = vrot.lane.b32.xlu0 %v2115, 56
      %v2850 = vpop.permute.xlu0 %2849
      %2851 = vrot.lane.b32.xlu0 %v2117, 56
      %v2852 = vpop.permute.xlu0 %2851
      %2853 = vrot.lane.b32.xlu0 %v2120, 56
      %v2854 = vpop.permute.xlu0 %2853
      %2855 = vrot.lane.b32.xlu0 %v2122, 56
      %v2856 = vpop.permute.xlu0 %2855
      %2857 = vrot.lane.b32.xlu0 %v2125, 56
      %v2858 = vpop.permute.xlu0 %2857
      %2859 = vrot.lane.b32.xlu0 %v2127, 56
      %v2860 = vpop.permute.xlu0 %2859
      %2861 = vrot.lane.b32.xlu0 %v2501, 56
      %v2862 = vpop.permute.xlu0 %2861
      %2863 = vrot.lane.b32.xlu0 %v2503, 56
      %v2864 = vpop.permute.xlu0 %2863
      %2865 = vrot.lane.b32.xlu0 %v2802, 56
      %v2866 = vpop.permute.xlu0 %2865
      %2867 = vrot.lane.b32.xlu0 %v2804, 56
      %v2868 = vpop.permute.xlu0 %2867
      %v2901 = vrot.slane %v1997, 2
      %v2902 = vrot.slane %v1998, 2
      %v2903 = vsel %vm477, %v2901, %v2902
      %v2904 = vrot.slane %v1999, 2
      %v2905 = vsel %vm477, %v2902, %v2904
      %2906 = vrot.lane.b32.xlu0 %v2236, 64
      %v2907 = vpop.permute.xlu0 %2906
      %2908 = vrot.lane.b32.xlu0 %v2238, 64
      %v2909 = vpop.permute.xlu0 %2908
      %2910 = vrot.lane.b32.xlu0 %v2241, 64
      %v2911 = vpop.permute.xlu0 %2910
      %2912 = vrot.lane.b32.xlu0 %v2243, 64
      %v2913 = vpop.permute.xlu0 %2912
      %2914 = vrot.lane.b32.xlu0 %v2246, 64
      %v2915 = vpop.permute.xlu0 %2914
      %2916 = vrot.lane.b32.xlu0 %v2248, 64
      %v2917 = vpop.permute.xlu0 %2916
      %2918 = vrot.lane.b32.xlu0 %v2251, 64
      %v2919 = vpop.permute.xlu0 %2918
      %2920 = vrot.lane.b32.xlu0 %v2253, 64
      %v2921 = vpop.permute.xlu0 %2920
      %2922 = vrot.lane.b32.xlu0 %v2256, 64
      %v2923 = vpop.permute.xlu0 %2922
      %2924 = vrot.lane.b32.xlu0 %v2258, 64
      %v2925 = vpop.permute.xlu0 %2924
      %2926 = vrot.lane.b32.xlu0 %v2261, 64
      %v2927 = vpop.permute.xlu0 %2926
      %2928 = vrot.lane.b32.xlu0 %v2263, 64
      %v2929 = vpop.permute.xlu0 %2928
      %2930 = vrot.lane.b32.xlu0 %v2266, 64
      %v2931 = vpop.permute.xlu0 %2930
      %2932 = vrot.lane.b32.xlu0 %v2268, 64
      %v2933 = vpop.permute.xlu0 %2932
      %2934 = vrot.lane.b32.xlu0 %v2271, 64
      %v2935 = vpop.permute.xlu0 %2934
      %2936 = vrot.lane.b32.xlu0 %v2273, 64
      %v2937 = vpop.permute.xlu0 %2936
      %2938 = vrot.lane.b32.xlu0 %v2276, 64
      %v2939 = vpop.permute.xlu0 %2938
      %2940 = vrot.lane.b32.xlu0 %v2278, 64
      %v2941 = vpop.permute.xlu0 %2940
      %2942 = vrot.lane.b32.xlu0 %v2281, 64
      %v2943 = vpop.permute.xlu0 %2942
      %2944 = vrot.lane.b32.xlu0 %v2283, 64
      %v2945 = vpop.permute.xlu0 %2944
      %2946 = vrot.lane.b32.xlu0 %v2286, 64
      %v2947 = vpop.permute.xlu0 %2946
      %2948 = vrot.lane.b32.xlu0 %v2288, 64
      %v2949 = vpop.permute.xlu0 %2948
      %2950 = vrot.lane.b32.xlu0 %v2291, 64
      %v2951 = vpop.permute.xlu0 %2950
      %2952 = vrot.lane.b32.xlu0 %v2293, 64
      %v2953 = vpop.permute.xlu0 %2952
      %2954 = vrot.lane.b32.xlu0 %v2296, 64
      %v2955 = vpop.permute.xlu0 %2954
      %2956 = vrot.lane.b32.xlu0 %v2298, 64
      %v2957 = vpop.permute.xlu0 %2956
      %2958 = vrot.lane.b32.xlu0 %v2301, 64
      %v2959 = vpop.permute.xlu0 %2958
      %2960 = vrot.lane.b32.xlu0 %v2303, 64
      %v2961 = vpop.permute.xlu0 %2960
      %2962 = vrot.lane.b32.xlu0 %v2602, 64
      %v2963 = vpop.permute.xlu0 %2962
      %2964 = vrot.lane.b32.xlu0 %v2604, 64
      %v2965 = vpop.permute.xlu0 %2964
      %2966 = vrot.lane.b32.xlu0 %v2903, 64
      %v2967 = vpop.permute.xlu0 %2966
      %2968 = vrot.lane.b32.xlu0 %v2905, 64
      %v2969 = vpop.permute.xlu0 %2968
      %v3002 = vsel %vm1289, %v1946, %v2129
      %v3003 = vsel %vm1289, %v1947, %v2131
      %v3004 = vsel %vm1289, %v1949, %v2133
      %v3005 = vsel %vm1289, %v1950, %v2135
      %v3006 = vsel %vm1289, %v1952, %v2137
      %v3007 = vsel %vm1289, %v1953, %v2139
      %v3008 = vsel %vm1289, %v1955, %v2141
      %v3009 = vsel %vm1289, %v1956, %v2143
      %v3010 = vsel %vm1289, %v1958, %v2145
      %v3011 = vsel %vm1289, %v1959, %v2147
      %v3012 = vsel %vm1289, %v1961, %v2149
      %v3013 = vsel %vm1289, %v1962, %v2151
      %v3014 = vsel %vm1289, %v1964, %v2153
      %v3015 = vsel %vm1289, %v1965, %v2155
      %v3016 = vsel %vm1289, %v1967, %v2157
      %v3017 = vsel %vm1289, %v1968, %v2159
      %v3018 = vsel %vm1289, %v1970, %v2161
      %v3019 = vsel %vm1289, %v1971, %v2163
      %v3020 = vsel %vm1289, %v1973, %v2165
      %v3021 = vsel %vm1289, %v1974, %v2167
      %v3022 = vsel %vm1289, %v1976, %v2169
      %v3023 = vsel %vm1289, %v1977, %v2171
      %v3024 = vsel %vm1289, %v1979, %v2173
      %v3025 = vsel %vm1289, %v1980, %v2175
      %v3026 = vsel %vm1289, %v1982, %v2177
      %v3027 = vsel %vm1289, %v1983, %v2179
      %v3028 = vsel %vm1289, %v1985, %v2181
      %v3029 = vsel %vm1289, %v1986, %v2183
      %v3030 = vsel %vm1289, %v1988, %v2185
      %v3031 = vsel %vm1289, %v1989, %v2187
      %v3032 = vsel %vm1289, %v1991, %v2189
      %v3033 = vsel %vm1289, %v1992, %v2191
      %v3034 = vsel %vm1355, %v3002, %v2305
      %v3035 = vsel %vm1355, %v3003, %v2307
      %v3036 = vsel %vm1355, %v3004, %v2309
      %v3037 = vsel %vm1355, %v3005, %v2311
      %v3038 = vsel %vm1355, %v3006, %v2313
      %v3039 = vsel %vm1355, %v3007, %v2315
      %v3040 = vsel %vm1355, %v3008, %v2317
      %v3041 = vsel %vm1355, %v3009, %v2319
      %v3042 = vsel %vm1355, %v3010, %v2321
      %v3043 = vsel %vm1355, %v3011, %v2323
      %v3044 = vsel %vm1355, %v3012, %v2325
      %v3045 = vsel %vm1355, %v3013, %v2327
      %v3046 = vsel %vm1355, %v3014, %v2329
      %v3047 = vsel %vm1355, %v3015, %v2331
      %v3048 = vsel %vm1355, %v3016, %v2333
      %v3049 = vsel %vm1355, %v3017, %v2335
      %v3050 = vsel %vm1355, %v3018, %v2337
      %v3051 = vsel %vm1355, %v3019, %v2339
      %v3052 = vsel %vm1355, %v3020, %v2341
      %v3053 = vsel %vm1355, %v3021, %v2343
      %v3054 = vsel %vm1355, %v3022, %v2345
      %v3055 = vsel %vm1355, %v3023, %v2347
      %v3056 = vsel %vm1355, %v3024, %v2349
      %v3057 = vsel %vm1355, %v3025, %v2351
      %v3058 = vsel %vm1355, %v3026, %v2353
      %v3059 = vsel %vm1355, %v3027, %v2355
      %v3060 = vsel %vm1355, %v3028, %v2357
      %v3061 = vsel %vm1355, %v3029, %v2359
      %v3062 = vsel %vm1355, %v3030, %v2361
      %v3063 = vsel %vm1355, %v3031, %v2363
      %v3064 = vsel %vm1355, %v3032, %v2365
      %v3065 = vsel %vm1355, %v3033, %v2367
      %v3066 = vsel %vm1421, %v3034, %v2403
      %v3067 = vsel %vm1421, %v3035, %v2405
      %v3068 = vsel %vm1421, %v3036, %v2407
      %v3069 = vsel %vm1421, %v3037, %v2409
      %v3070 = vsel %vm1421, %v3038, %v2411
      %v3071 = vsel %vm1421, %v3039, %v2413
      %v3072 = vsel %vm1421, %v3040, %v2415
      %v3073 = vsel %vm1421, %v3041, %v2417
      %v3074 = vsel %vm1421, %v3042, %v2419
      %v3075 = vsel %vm1421, %v3043, %v2421
      %v3076 = vsel %vm1421, %v3044, %v2423
      %v3077 = vsel %vm1421, %v3045, %v2425
      %v3078 = vsel %vm1421, %v3046, %v2427
      %v3079 = vsel %vm1421, %v3047, %v2429
      %v3080 = vsel %vm1421, %v3048, %v2431
      %v3081 = vsel %vm1421, %v3049, %v2433
      %v3082 = vsel %vm1421, %v3050, %v2435
      %v3083 = vsel %vm1421, %v3051, %v2437
      %v3084 = vsel %vm1421, %v3052, %v2439
      %v3085 = vsel %vm1421, %v3053, %v2441
      %v3086 = vsel %vm1421, %v3054, %v2443
      %v3087 = vsel %vm1421, %v3055, %v2445
      %v3088 = vsel %vm1421, %v3056, %v2447
      %v3089 = vsel %vm1421, %v3057, %v2449
      %v3090 = vsel %vm1421, %v3058, %v2451
      %v3091 = vsel %vm1421, %v3059, %v2453
      %v3092 = vsel %vm1421, %v3060, %v2455
      %v3093 = vsel %vm1421, %v3061, %v2457
      %v3094 = vsel %vm1421, %v3062, %v2459
      %v3095 = vsel %vm1421, %v3063, %v2461
      %v3096 = vsel %vm1421, %v3064, %v2463
      %v3097 = vsel %vm1421, %v3065, %v2465
      %v3098 = vsel %vm1487, %v3066, %v2505
      %v3099 = vsel %vm1487, %v3067, %v2507
      %v3100 = vsel %vm1487, %v3068, %v2509
      %v3101 = vsel %vm1487, %v3069, %v2511
      %v3102 = vsel %vm1487, %v3070, %v2513
      %v3103 = vsel %vm1487, %v3071, %v2515
      %v3104 = vsel %vm1487, %v3072, %v2517
      %v3105 = vsel %vm1487, %v3073, %v2519
      %v3106 = vsel %vm1487, %v3074, %v2521
      %v3107 = vsel %vm1487, %v3075, %v2523
      %v3108 = vsel %vm1487, %v3076, %v2525
      %v3109 = vsel %vm1487, %v3077, %v2527
      %v3110 = vsel %vm1487, %v3078, %v2529
      %v3111 = vsel %vm1487, %v3079, %v2531
      %v3112 = vsel %vm1487, %v3080, %v2533
      %v3113 = vsel %vm1487, %v3081, %v2535
      %v3114 = vsel %vm1487, %v3082, %v2537
      %v3115 = vsel %vm1487, %v3083, %v2539
      %v3116 = vsel %vm1487, %v3084, %v2541
      %v3117 = vsel %vm1487, %v3085, %v2543
      %v3118 = vsel %vm1487, %v3086, %v2545
      %v3119 = vsel %vm1487, %v3087, %v2547
      %v3120 = vsel %vm1487, %v3088, %v2549
      %v3121 = vsel %vm1487, %v3089, %v2551
      %v3122 = vsel %vm1487, %v3090, %v2553
      %v3123 = vsel %vm1487, %v3091, %v2555
      %v3124 = vsel %vm1487, %v3092, %v2557
      %v3125 = vsel %vm1487, %v3093, %v2559
      %v3126 = vsel %vm1487, %v3094, %v2561
      %v3127 = vsel %vm1487, %v3095, %v2563
      %v3128 = vsel %vm1487, %v3096, %v2565
      %v3129 = vsel %vm1487, %v3097, %v2567
      %vm3130 = vcmask 326656
      %v3131 = vsel %vm3130, %v3098, %v2606
      %v3132 = vsel %vm3130, %v3099, %v2608
      %v3133 = vsel %vm3130, %v3100, %v2610
      %v3134 = vsel %vm3130, %v3101, %v2612
      %v3135 = vsel %vm3130, %v3102, %v2614
      %v3136 = vsel %vm3130, %v3103, %v2616
      %v3137 = vsel %vm3130, %v3104, %v2618
      %v3138 = vsel %vm3130, %v3105, %v2620
      %v3139 = vsel %vm3130, %v3106, %v2622
      %v3140 = vsel %vm3130, %v3107, %v2624
      %v3141 = vsel %vm3130, %v3108, %v2626
      %v3142 = vsel %vm3130, %v3109, %v2628
      %v3143 = vsel %vm3130, %v3110, %v2630
      %v3144 = vsel %vm3130, %v3111, %v2632
      %v3145 = vsel %vm3130, %v3112, %v2634
      %v3146 = vsel %vm3130, %v3113, %v2636
      %v3147 = vsel %vm3130, %v3114, %v2638
      %v3148 = vsel %vm3130, %v3115, %v2640
      %v3149 = vsel %vm3130, %v3116, %v2642
      %v3150 = vsel %vm3130, %v3117, %v2644
      %v3151 = vsel %vm3130, %v3118, %v2646
      %v3152 = vsel %vm3130, %v3119, %v2648
      %v3153 = vsel %vm3130, %v3120, %v2650
      %v3154 = vsel %vm3130, %v3121, %v2652
      %v3155 = vsel %vm3130, %v3122, %v2654
      %v3156 = vsel %vm3130, %v3123, %v2656
      %v3157 = vsel %vm3130, %v3124, %v2658
      %v3158 = vsel %vm3130, %v3125, %v2660
      %v3159 = vsel %vm3130, %v3126, %v2662
      %v3160 = vsel %vm3130, %v3127, %v2664
      %v3161 = vsel %vm3130, %v3128, %v2666
      %v3162 = vsel %vm3130, %v3129, %v2668
      %vm3163 = vcmask 392192
      %v3164 = vsel %vm3163, %v3131, %v2704
      %v3165 = vsel %vm3163, %v3132, %v2706
      %v3166 = vsel %vm3163, %v3133, %v2708
      %v3167 = vsel %vm3163, %v3134, %v2710
      %v3168 = vsel %vm3163, %v3135, %v2712
      %v3169 = vsel %vm3163, %v3136, %v2714
      %v3170 = vsel %vm3163, %v3137, %v2716
      %v3171 = vsel %vm3163, %v3138, %v2718
      %v3172 = vsel %vm3163, %v3139, %v2720
      %v3173 = vsel %vm3163, %v3140, %v2722
      %v3174 = vsel %vm3163, %v3141, %v2724
      %v3175 = vsel %vm3163, %v3142, %v2726
      %v3176 = vsel %vm3163, %v3143, %v2728
      %v3177 = vsel %vm3163, %v3144, %v2730
      %v3178 = vsel %vm3163, %v3145, %v2732
      %v3179 = vsel %vm3163, %v3146, %v2734
      %v3180 = vsel %vm3163, %v3147, %v2736
      %v3181 = vsel %vm3163, %v3148, %v2738
      %v3182 = vsel %vm3163, %v3149, %v2740
      %v3183 = vsel %vm3163, %v3150, %v2742
      %v3184 = vsel %vm3163, %v3151, %v2744
      %v3185 = vsel %vm3163, %v3152, %v2746
      %v3186 = vsel %vm3163, %v3153, %v2748
      %v3187 = vsel %vm3163, %v3154, %v2750
      %v3188 = vsel %vm3163, %v3155, %v2752
      %v3189 = vsel %vm3163, %v3156, %v2754
      %v3190 = vsel %vm3163, %v3157, %v2756
      %v3191 = vsel %vm3163, %v3158, %v2758
      %v3192 = vsel %vm3163, %v3159, %v2760
      %v3193 = vsel %vm3163, %v3160, %v2762
      %v3194 = vsel %vm3163, %v3161, %v2764
      %v3195 = vsel %vm3163, %v3162, %v2766
      %vm3196 = vcmask 457728
      %v3197 = vsel %vm3196, %v3164, %v2806
      %v3198 = vsel %vm3196, %v3165, %v2808
      %v3199 = vsel %vm3196, %v3166, %v2810
      %v3200 = vsel %vm3196, %v3167, %v2812
      %v3201 = vsel %vm3196, %v3168, %v2814
      %v3202 = vsel %vm3196, %v3169, %v2816
      %v3203 = vsel %vm3196, %v3170, %v2818
      %v3204 = vsel %vm3196, %v3171, %v2820
      %v3205 = vsel %vm3196, %v3172, %v2822
      %v3206 = vsel %vm3196, %v3173, %v2824
      %v3207 = vsel %vm3196, %v3174, %v2826
      %v3208 = vsel %vm3196, %v3175, %v2828
      %v3209 = vsel %vm3196, %v3176, %v2830
      %v3210 = vsel %vm3196, %v3177, %v2832
      %v3211 = vsel %vm3196, %v3178, %v2834
      %v3212 = vsel %vm3196, %v3179, %v2836
      %v3213 = vsel %vm3196, %v3180, %v2838
      %v3214 = vsel %vm3196, %v3181, %v2840
      %v3215 = vsel %vm3196, %v3182, %v2842
      %v3216 = vsel %vm3196, %v3183, %v2844
      %v3217 = vsel %vm3196, %v3184, %v2846
      %v3218 = vsel %vm3196, %v3185, %v2848
      %v3219 = vsel %vm3196, %v3186, %v2850
      %v3220 = vsel %vm3196, %v3187, %v2852
      %v3221 = vsel %vm3196, %v3188, %v2854
      %v3222 = vsel %vm3196, %v3189, %v2856
      %v3223 = vsel %vm3196, %v3190, %v2858
      %v3224 = vsel %vm3196, %v3191, %v2860
      %v3225 = vsel %vm3196, %v3192, %v2862
      %v3226 = vsel %vm3196, %v3193, %v2864
      %v3227 = vsel %vm3196, %v3194, %v2866
      %v3228 = vsel %vm3196, %v3195, %v2868
      %vm3229 = vcmask 523264
      %v3230 = vsel %vm3229, %v3197, %v2907
      %v3231 = vsel %vm3229, %v3198, %v2909
      %v3232 = vsel %vm3229, %v3199, %v2911
      %v3233 = vsel %vm3229, %v3200, %v2913
      %v3234 = vsel %vm3229, %v3201, %v2915
      %v3235 = vsel %vm3229, %v3202, %v2917
      %v3236 = vsel %vm3229, %v3203, %v2919
      %v3237 = vsel %vm3229, %v3204, %v2921
      %v3238 = vsel %vm3229, %v3205, %v2923
      %v3239 = vsel %vm3229, %v3206, %v2925
      %v3240 = vsel %vm3229, %v3207, %v2927
      %v3241 = vsel %vm3229, %v3208, %v2929
      %v3242 = vsel %vm3229, %v3209, %v2931
      %v3243 = vsel %vm3229, %v3210, %v2933
      %v3244 = vsel %vm3229, %v3211, %v2935
      %v3245 = vsel %vm3229, %v3212, %v2937
      %v3246 = vsel %vm3229, %v3213, %v2939
      %v3247 = vsel %vm3229, %v3214, %v2941
      %v3248 = vsel %vm3229, %v3215, %v2943
      %v3249 = vsel %vm3229, %v3216, %v2945
      %v3250 = vsel %vm3229, %v3217, %v2947
      %v3251 = vsel %vm3229, %v3218, %v2949
      %v3252 = vsel %vm3229, %v3219, %v2951
      %v3253 = vsel %vm3229, %v3220, %v2953
      %v3254 = vsel %vm3229, %v3221, %v2955
      %v3255 = vsel %vm3229, %v3222, %v2957
      %v3256 = vsel %vm3229, %v3223, %v2959
      %v3257 = vsel %vm3229, %v3224, %v2961
      %v3258 = vsel %vm3229, %v3225, %v2963
      %v3259 = vsel %vm3229, %v3226, %v2965
      %v3260 = vsel %vm3229, %v3227, %v2967
      %v3261 = vsel %vm3229, %v3228, %v2969
      %v3262 = vld [vmem:[%s3] sm:$0xff]
      %v3263 = vld [vmem:[%s3 + $0x8] sm:$0xff]
      %v3264 = vld [vmem:[%s3 + $0x10] sm:$0xff]
      %v3265 = vld [vmem:[%s3 + $0x18] sm:$0xff]
      %v3266 = vld [vmem:[%s3 + $0x20] sm:$0xff]
      %v3267 = vld [vmem:[%s3 + $0x28] sm:$0xff]
      %v3268 = vld [vmem:[%s3 + $0x30] sm:$0xff]
      %v3269 = vld [vmem:[%s3 + $0x38] sm:$0xff]
      %v3270 = vld [vmem:[%s3 + $0x40] sm:$0xff]
      %vm3271 = vcmask 588800
      %v3273 = vsel %vm3271, %v3230, 0
      %v3276 = vsel %vm3271, %v3231, 0
      %v3279 = vsel %vm3271, %v3232, 0
      %v3282 = vsel %vm3271, %v3233, 0
      %v3285 = vsel %vm3271, %v3234, 0
      %v3288 = vsel %vm3271, %v3235, 0
      %v3291 = vsel %vm3271, %v3236, 0
      %v3294 = vsel %vm3271, %v3237, 0
      %v3297 = vsel %vm3271, %v3238, 0
      %v3300 = vsel %vm3271, %v3239, 0
      %v3303 = vsel %vm3271, %v3240, 0
      %v3306 = vsel %vm3271, %v3241, 0
      %v3309 = vsel %vm3271, %v3242, 0
      %v3312 = vsel %vm3271, %v3243, 0
      %v3315 = vsel %vm3271, %v3244, 0
      %v3318 = vsel %vm3271, %v3245, 0
      %v3321 = vsel %vm3271, %v3246, 0
      %v3324 = vsel %vm3271, %v3247, 0
      %v3327 = vsel %vm3271, %v3248, 0
      %v3330 = vsel %vm3271, %v3249, 0
      %v3333 = vsel %vm3271, %v3250, 0
      %v3336 = vsel %vm3271, %v3251, 0
      %v3339 = vsel %vm3271, %v3252, 0
      %v3342 = vsel %vm3271, %v3253, 0
      %v3345 = vsel %vm3271, %v3254, 0
      %v3348 = vsel %vm3271, %v3255, 0
      %v3351 = vsel %vm3271, %v3256, 0
      %v3354 = vsel %vm3271, %v3257, 0
      %v3357 = vsel %vm3271, %v3258, 0
      %v3360 = vsel %vm3271, %v3259, 0
      %v3363 = vsel %vm3271, %v3260, 0
      %v3366 = vsel %vm3271, %v3261, 0
      %3368 = vmatprep.subr.mxu0 0.0
      %3369 = vmatpush1.msra.mxu0 0.0
      %3370 = vmatprep.subr.mxu0 0.0
      %3371 = vmatpush1.msra.mxu0 0.0
      %3372 = vmatprep.subr.mxu0 0.0
      %3373 = vmatpush1.msra.mxu0 0.0
      %3374 = vmatprep.subr.mxu0 0.0
      %3375 = vmatpush1.msra.mxu0 0.0
      %3376 = vmatprep.subr.mxu0 0.0
      %3377 = vmatpush1.msra.mxu0 0.0
      %3378 = vmatprep.subr.mxu0 0.0
      %3379 = vmatpush1.msra.mxu0 0.0
      %3380 = vmatprep.subr.mxu0 0.0
      %3381 = vmatpush1.msra.mxu0 0.0
      %3382 = vmatprep.subr.mxu0 0.0
      %3383 = vmatpush1.msra.mxu0 %v3270
      %3384 = vmatprep.subr.mxu0 0.0
      %3385 = vmatpush1.msra.mxu0 %v3269
      %3386 = vmatprep.subr.mxu0 0.0
      %3387 = vmatpush1.msra.mxu0 %v3268
      %3388 = vmatprep.subr.mxu0 0.0
      %3389 = vmatpush1.msra.mxu0 %v3267
      %3390 = vmatprep.subr.mxu0 0.0
      %3391 = vmatpush1.msra.mxu0 %v3266
      %3392 = vmatprep.subr.mxu0 0.0
      %3393 = vmatpush1.msra.mxu0 %v3265
      %3394 = vmatprep.subr.mxu0 0.0
      %3395 = vmatpush1.msra.mxu0 %v3264
      %3396 = vmatprep.subr.mxu0 0.0
      %3397 = vmatpush1.msra.mxu0 %v3263
      %3398 = vmatprep.subr.mxu0 0.0
      %3399 = vmatpush1.msra.mxu0 %v3262
      %3400 = vmatprep.subr.mxu0 0.0
      %3401 = vmatpush2.msra.mxu0 0.0
      %3402 = vmatprep.subr.mxu0 0.0
      %3403 = vmatpush2.msra.mxu0 0.0
      %3404 = vmatprep.subr.mxu0 0.0
      %3405 = vmatpush2.msra.mxu0 0.0
      %3406 = vmatprep.subr.mxu0 0.0
      %3407 = vmatpush2.msra.mxu0 0.0
      %3408 = vmatprep.subr.mxu0 0.0
      %3409 = vmatpush2.msra.mxu0 0.0
      %3410 = vmatprep.subr.mxu0 0.0
      %3411 = vmatpush2.msra.mxu0 0.0
      %3412 = vmatprep.subr.mxu0 0.0
      %3413 = vmatpush2.msra.mxu0 0.0
      %3414 = vmatprep.subr.mxu0 0.0
      %3415 = vmatpush2.msra.mxu0 0.0
      %3416 = vmatprep.subr.mxu0 0.0
      %3417 = vmatpush2.msra.mxu0 0.0
      %3418 = vmatprep.subr.mxu0 0.0
      %3419 = vmatpush2.msra.mxu0 0.0
      %3420 = vmatprep.subr.mxu0 0.0
      %3421 = vmatpush2.msra.mxu0 0.0
      %3422 = vmatprep.subr.mxu0 0.0
      %3423 = vmatpush2.msra.mxu0 0.0
      %3424 = vmatprep.subr.mxu0 0.0
      %3425 = vmatpush2.msra.mxu0 0.0
      %3426 = vmatprep.subr.mxu0 0.0
      %3427 = vmatpush2.msra.mxu0 0.0
      %3428 = vmatprep.subr.mxu0 0.0
      %3429 = vmatpush2.msra.mxu0 0.0
      %3430 = vmatprep.subr.mxu0 0.0
      %3431 = vmatpush2.msra.mxu0 0.0
      %3432 = vmatprep.mubr.f32.mxu0 0.0
      %3433 = vmatmul.mubr.f32.gmra.mxu0 %v3273
      %v3434 = vpop.f32.mrf.mxu0
      %v3435 = vadd.f32 0.0, %v3434
      %v3436 = vpop.f32.mrf.mxu0
      %3437 = vmatprep.mubr.f32.mxu0 0.0
      %3438 = vmatmul.mubr.f32.gmra.mxu0 %v3276
      %v3439 = vpop.f32.mrf.mxu0
      %v3440 = vadd.f32 0.0, %v3439
      %v3441 = vpop.f32.mrf.mxu0
      %3442 = vmatprep.mubr.f32.mxu0 0.0
      %3443 = vmatmul.mubr.f32.gmra.mxu0 %v3279
      %v3444 = vpop.f32.mrf.mxu0
      %v3445 = vadd.f32 0.0, %v3444
      %v3446 = vpop.f32.mrf.mxu0
      %3447 = vmatprep.mubr.f32.mxu0 0.0
      %3448 = vmatmul.mubr.f32.gmra.mxu0 %v3282
      %v3449 = vpop.f32.mrf.mxu0
      %v3450 = vadd.f32 0.0, %v3449
      %v3451 = vpop.f32.mrf.mxu0
      %3452 = vmatprep.mubr.f32.mxu0 0.0
      %3453 = vmatmul.mubr.f32.gmra.mxu0 %v3285
      %v3454 = vpop.f32.mrf.mxu0
      %v3455 = vadd.f32 0.0, %v3454
      %v3456 = vpop.f32.mrf.mxu0
      %3457 = vmatprep.mubr.f32.mxu0 0.0
      %3458 = vmatmul.mubr.f32.gmra.mxu0 %v3288
      %v3459 = vpop.f32.mrf.mxu0
      %v3460 = vadd.f32 0.0, %v3459
      %v3461 = vpop.f32.mrf.mxu0
      %3462 = vmatprep.mubr.f32.mxu0 0.0
      %3463 = vmatmul.mubr.f32.gmra.mxu0 %v3291
      %v3464 = vpop.f32.mrf.mxu0
      %v3465 = vadd.f32 0.0, %v3464
      %v3466 = vpop.f32.mrf.mxu0
      %3467 = vmatprep.mubr.f32.mxu0 0.0
      %3468 = vmatmul.mubr.f32.gmra.mxu0 %v3294
      %v3469 = vpop.f32.mrf.mxu0
      %v3470 = vadd.f32 0.0, %v3469
      %v3471 = vpop.f32.mrf.mxu0
      %3472 = vmatprep.mubr.f32.mxu0 0.0
      %3473 = vmatmul.mubr.f32.gmra.mxu0 %v3297
      %v3474 = vpop.f32.mrf.mxu0
      %v3475 = vadd.f32 0.0, %v3474
      %v3476 = vpop.f32.mrf.mxu0
      %3477 = vmatprep.mubr.f32.mxu0 0.0
      %3478 = vmatmul.mubr.f32.gmra.mxu0 %v3300
      %v3479 = vpop.f32.mrf.mxu0
      %v3480 = vadd.f32 0.0, %v3479
      %v3481 = vpop.f32.mrf.mxu0
      %3482 = vmatprep.mubr.f32.mxu0 0.0
      %3483 = vmatmul.mubr.f32.gmra.mxu0 %v3303
      %v3484 = vpop.f32.mrf.mxu0
      %v3485 = vadd.f32 0.0, %v3484
      %v3486 = vpop.f32.mrf.mxu0
      %3487 = vmatprep.mubr.f32.mxu0 0.0
      %3488 = vmatmul.mubr.f32.gmra.mxu0 %v3306
      %v3489 = vpop.f32.mrf.mxu0
      %v3490 = vadd.f32 0.0, %v3489
      %v3491 = vpop.f32.mrf.mxu0
      %3492 = vmatprep.mubr.f32.mxu0 0.0
      %3493 = vmatmul.mubr.f32.gmra.mxu0 %v3309
      %v3494 = vpop.f32.mrf.mxu0
      %v3495 = vadd.f32 0.0, %v3494
      %v3496 = vpop.f32.mrf.mxu0
      %3497 = vmatprep.mubr.f32.mxu0 0.0
      %3498 = vmatmul.mubr.f32.gmra.mxu0 %v3312
      %v3499 = vpop.f32.mrf.mxu0
      %v3500 = vadd.f32 0.0, %v3499
      %v3501 = vpop.f32.mrf.mxu0
      %3502 = vmatprep.mubr.f32.mxu0 0.0
      %3503 = vmatmul.mubr.f32.gmra.mxu0 %v3315
      %v3504 = vpop.f32.mrf.mxu0
      %v3505 = vadd.f32 0.0, %v3504
      %v3506 = vpop.f32.mrf.mxu0
      %3507 = vmatprep.mubr.f32.mxu0 0.0
      %3508 = vmatmul.mubr.f32.gmra.mxu0 %v3318
      %v3509 = vpop.f32.mrf.mxu0
      %v3510 = vadd.f32 0.0, %v3509
      %v3511 = vpop.f32.mrf.mxu0
      %3512 = vmatprep.mubr.f32.mxu0 0.0
      %3513 = vmatmul.mubr.f32.gmra.mxu0 %v3321
      %v3514 = vpop.f32.mrf.mxu0
      %v3515 = vadd.f32 0.0, %v3514
      %v3516 = vpop.f32.mrf.mxu0
      %3517 = vmatprep.mubr.f32.mxu0 0.0
      %3518 = vmatmul.mubr.f32.gmra.mxu0 %v3324
      %v3519 = vpop.f32.mrf.mxu0
      %v3520 = vadd.f32 0.0, %v3519
      %v3521 = vpop.f32.mrf.mxu0
      %3522 = vmatprep.mubr.f32.mxu0 0.0
      %3523 = vmatmul.mubr.f32.gmra.mxu0 %v3327
      %v3524 = vpop.f32.mrf.mxu0
      %v3525 = vadd.f32 0.0, %v3524
      %v3526 = vpop.f32.mrf.mxu0
      %3527 = vmatprep.mubr.f32.mxu0 0.0
      %3528 = vmatmul.mubr.f32.gmra.mxu0 %v3330
      %v3529 = vpop.f32.mrf.mxu0
      %v3530 = vadd.f32 0.0, %v3529
      %v3531 = vpop.f32.mrf.mxu0
      %3532 = vmatprep.mubr.f32.mxu0 0.0
      %3533 = vmatmul.mubr.f32.gmra.mxu0 %v3333
      %v3534 = vpop.f32.mrf.mxu0
      %v3535 = vadd.f32 0.0, %v3534
      %v3536 = vpop.f32.mrf.mxu0
      %3537 = vmatprep.mubr.f32.mxu0 0.0
      %3538 = vmatmul.mubr.f32.gmra.mxu0 %v3336
      %v3539 = vpop.f32.mrf.mxu0
      %v3540 = vadd.f32 0.0, %v3539
      %v3541 = vpop.f32.mrf.mxu0
      %3542 = vmatprep.mubr.f32.mxu0 0.0
      %3543 = vmatmul.mubr.f32.gmra.mxu0 %v3339
      %v3544 = vpop.f32.mrf.mxu0
      %v3545 = vadd.f32 0.0, %v3544
      %v3546 = vpop.f32.mrf.mxu0
      %3547 = vmatprep.mubr.f32.mxu0 0.0
      %3548 = vmatmul.mubr.f32.gmra.mxu0 %v3342
      %v3549 = vpop.f32.mrf.mxu0
      %v3550 = vadd.f32 0.0, %v3549
      %v3551 = vpop.f32.mrf.mxu0
      %3552 = vmatprep.mubr.f32.mxu0 0.0
      %3553 = vmatmul.mubr.f32.gmra.mxu0 %v3345
      %v3554 = vpop.f32.mrf.mxu0
      %v3555 = vadd.f32 0.0, %v3554
      %v3556 = vpop.f32.mrf.mxu0
      %3557 = vmatprep.mubr.f32.mxu0 0.0
      %3558 = vmatmul.mubr.f32.gmra.mxu0 %v3348
      %v3559 = vpop.f32.mrf.mxu0
      %v3560 = vadd.f32 0.0, %v3559
      %v3561 = vpop.f32.mrf.mxu0
      %3562 = vmatprep.mubr.f32.mxu0 0.0
      %3563 = vmatmul.mubr.f32.gmra.mxu0 %v3351
      %v3564 = vpop.f32.mrf.mxu0
      %v3565 = vadd.f32 0.0, %v3564
      %v3566 = vpop.f32.mrf.mxu0
      %3567 = vmatprep.mubr.f32.mxu0 0.0
      %3568 = vmatmul.mubr.f32.gmra.mxu0 %v3354
      %v3569 = vpop.f32.mrf.mxu0
      %v3570 = vadd.f32 0.0, %v3569
      %v3571 = vpop.f32.mrf.mxu0
      %3572 = vmatprep.mubr.f32.mxu0 0.0
      %3573 = vmatmul.mubr.f32.gmra.mxu0 %v3357
      %v3574 = vpop.f32.mrf.mxu0
      %v3575 = vadd.f32 0.0, %v3574
      %v3576 = vpop.f32.mrf.mxu0
      %3577 = vmatprep.mubr.f32.mxu0 0.0
      %3578 = vmatmul.mubr.f32.gmra.mxu0 %v3360
      %v3579 = vpop.f32.mrf.mxu0
      %v3580 = vadd.f32 0.0, %v3579
      %v3581 = vpop.f32.mrf.mxu0
      %3582 = vmatprep.mubr.f32.mxu0 0.0
      %3583 = vmatmul.mubr.f32.gmra.mxu0 %v3363
      %v3584 = vpop.f32.mrf.mxu0
      %v3585 = vadd.f32 0.0, %v3584
      %v3586 = vpop.f32.mrf.mxu0
      %3587 = vmatprep.mubr.f32.mxu0 0.0
      %3588 = vmatmul.mubr.f32.gmra.mxu0 %v3366
      %v3589 = vpop.f32.mrf.mxu0
      %v3590 = vadd.f32 0.0, %v3589
      %v3591 = vpop.f32.mrf.mxu0
      %3592 = vdwg.mxu0
      %3593 = vst.msk [vmem:[%s197] sm:$0xff] %vm1289, %v3435
      %3594 = vst.msk [vmem:[%s197 + $0x8] sm:$0xff] %vm1289, %v3440
      %3595 = vst.msk [vmem:[%s197 + $0x10] sm:$0xff] %vm1289, %v3445
      %3596 = vst.msk [vmem:[%s197 + $0x18] sm:$0xff] %vm1289, %v3450
      %3597 = vst.msk [vmem:[%s197 + $0x20] sm:$0xff] %vm1289, %v3455
      %3598 = vst.msk [vmem:[%s197 + $0x28] sm:$0xff] %vm1289, %v3460
      %3599 = vst.msk [vmem:[%s197 + $0x30] sm:$0xff] %vm1289, %v3465
      %3600 = vst.msk [vmem:[%s197 + $0x38] sm:$0xff] %vm1289, %v3470
      %3601 = vst.msk [vmem:[%s197 + $0x40] sm:$0xff] %vm1289, %v3475
      %3602 = vst.msk [vmem:[%s197 + $0x48] sm:$0xff] %vm1289, %v3480
      %3603 = vst.msk [vmem:[%s197 + $0x50] sm:$0xff] %vm1289, %v3485
      %3604 = vst.msk [vmem:[%s197 + $0x58] sm:$0xff] %vm1289, %v3490
      %3605 = vst.msk [vmem:[%s197 + $0x60] sm:$0xff] %vm1289, %v3495
      %3606 = vst.msk [vmem:[%s197 + $0x68] sm:$0xff] %vm1289, %v3500
      %3607 = vst.msk [vmem:[%s197 + $0x70] sm:$0xff] %vm1289, %v3505
      %3608 = vst.msk [vmem:[%s197 + $0x78] sm:$0xff] %vm1289, %v3510
      %3609 = vst.msk [vmem:[%s197 + $0x80] sm:$0xff] %vm1289, %v3515
      %3610 = vst.msk [vmem:[%s197 + $0x88] sm:$0xff] %vm1289, %v3520
      %3611 = vst.msk [vmem:[%s197 + $0x90] sm:$0xff] %vm1289, %v3525
      %3612 = vst.msk [vmem:[%s197 + $0x98] sm:$0xff] %vm1289, %v3530
      %3613 = vst.msk [vmem:[%s197 + $0xa0] sm:$0xff] %vm1289, %v3535
      %3614 = vst.msk [vmem:[%s197 + $0xa8] sm:$0xff] %vm1289, %v3540
      %3615 = vst.msk [vmem:[%s197 + $0xb0] sm:$0xff] %vm1289, %v3545
      %3616 = vst.msk [vmem:[%s197 + $0xb8] sm:$0xff] %vm1289, %v3550
      %3617 = vst.msk [vmem:[%s197 + $0xc0] sm:$0xff] %vm1289, %v3555
      %3618 = vst.msk [vmem:[%s197 + $0xc8] sm:$0xff] %vm1289, %v3560
      %3619 = vst.msk [vmem:[%s197 + $0xd0] sm:$0xff] %vm1289, %v3565
      %3620 = vst.msk [vmem:[%s197 + $0xd8] sm:$0xff] %vm1289, %v3570
      %3621 = vst.msk [vmem:[%s197 + $0xe0] sm:$0xff] %vm1289, %v3575
      %3622 = vst.msk [vmem:[%s197 + $0xe8] sm:$0xff] %vm1289, %v3580
      %3623 = vst.msk [vmem:[%s197 + $0xf0] sm:$0xff] %vm1289, %v3585
      %3624 = vst.msk [vmem:[%s197 + $0xf8] sm:$0xff] %vm1289, %v3590
      %p3625 = scmp.lt.s32.totalorder %s15, 1
      %s3626 = scalar_select %p3625, %s15, 1
      %s3627 = smul.addr %s3626, 32
      %s3628 = smul.addr %s3627, 8
      %s3629 = scalar_lea.vmem %s4, %s3628
      // Predicated region
      $region37: #{tpu_custom_call.1} parent=35 // pred_check
        %p3630 = pneg %p122
      $region38: #{tpu_custom_call.1} parent=35 // pred_check_branch
        %3632 = sbr.rel (%p3630) target = $region40
      $region39: #{tpu_custom_call.1} parent=35 // pred_region
        _
      $region40: #{tpu_custom_call.1} parent=35 // pred_fallthru
        _
    $region36: #{tpu_custom_call.1} parent=5 // pred_fallthru
      _
    %p3633 = scmp.le.s32.totalorder 2, %s10
    // Predicated region
    $region41: #{tpu_custom_call.1} parent=5 // pred_check
      %p3634 = pneg %p3633
    $region42: #{tpu_custom_call.1} parent=5 // pred_check_branch
      %3636 = sbr.rel (%p3634) target = $region44
    $region43: #{tpu_custom_call.1} parent=5 // pred_region
      %s3637 = ssub.s32 %s10, 2
      // Predicated region
      $region45: #{tpu_custom_call.1} parent=43 // pred_check
        %p3638 = pneg %p128
      $region46: #{tpu_custom_call.1} parent=43 // pred_check_branch
        %3640 = sbr.rel (%p3638) target = $region48
      $region47: #{tpu_custom_call.1} parent=43 // pred_region
        %p3641 = scmp.lt.s32.totalorder %s16, 1
        %s3642 = scalar_select %p3641, %s16, 1
        %s3643 = smul.addr %s3642, 32
        %s3644 = smul.addr %s3643, 8
        %s3645 = scalar_lea.vmem %s4, %s3644
      $region48: #{tpu_custom_call.1} parent=43 // pred_fallthru
        _
    $region44: #{tpu_custom_call.1} parent=5 // pred_fallthru
      _
  $region6: #{tpu_custom_call.1} parent=0 // loop_footer
    %s14 = sadd.s32 1, %s10
  $region7: #{tpu_custom_call.1} parent=0 // loop_footer_branch
    %9 = sbr.rel target = $region3
  $region8: #{tpu_custom_call.1} parent=0 // loop_exit
    _

</llo_original>
